<compile_context>
chip_gen: v7x
topology: tpu7x:2x2x1
jax: 0.10.0
libtpu: 0.0.40
codegen_flags: <defaults>
</compile_context>

<pallas_src>
import functools

import jax
import jax.numpy as jnp
from jax.experimental import pallas as pl
from jax.experimental.pallas import tpu as pltpu

_MXU_DTYPE = jnp.float32   # switch to jnp.bfloat16 on v6e/v7x
_BN_EPS = 1e-5


# ----------------------------------------------------------------------------
# tiling helpers
# ----------------------------------------------------------------------------
def _round_up(n, m):
    return ((n + m - 1) // m) * m


def _pick_lane_tile(n_pad, max_tile=2048):
    """Largest 128-multiple tile <= max_tile dividing n_pad (n_pad is 128-mult)."""
    t = min(n_pad, max_tile)
    while t > 128 and n_pad % t != 0:
        t -= 128
    return t


def _pick_chan_tile(c, max_tile=32):
    """Full C when small, else the largest multiple-of-8 divisor (8,128 rule)."""
    if c <= max_tile:
        return c
    t = (max_tile // 8) * 8
    while t >= 8:
        if c % t == 0:
            return t
        t -= 8
    return c


# ----------------------------------------------------------------------------
# kernels
# ----------------------------------------------------------------------------
def _pw_conv_kernel(x_ref, w_ref, o_ref, stat_ref):
    # x: (1, Cin, TN)  w: (Cout, Cin) -> o: (1, Cout, TN) raw 1x1 conv output,
    # plus per-block BN partial sums stat: (1, 1, Cout, 2) = [sum, sum_sq].
    # (Spatial-pad lanes of x are zero, so they contribute zero to the sums.)
    x = x_ref[0].astype(_MXU_DTYPE)
    w = w_ref[...].astype(_MXU_DTYPE)
    r = jnp.dot(w, x, preferred_element_type=jnp.float32)
    o_ref[0] = r.astype(o_ref.dtype)
    s = jnp.sum(r, axis=-1, keepdims=True)
    ss = jnp.sum(r * r, axis=-1, keepdims=True)
    stat_ref[0, 0] = jnp.concatenate([s, ss], axis=-1)


def _pw_conv_ghost_kernel(y1_ref, d1_ref, vmask_ref, scale_ref, shift_ref,
                          wa_ref, wb_ref, o_ref, stat_ref):
    # Stage-B 1x1 conv on the ghost concat without materializing it:
    #   r = Wa @ y1 + Wb @ SiLU(d1 * scale + shift)
    # vmask zeroes spatial-pad lanes of y2 so r's BN partial sums stay exact
    # (y1's pad lanes are already zero from the DW kernel).
    y1 = y1_ref[0].astype(jnp.float32)
    y2 = d1_ref[0].astype(jnp.float32) * scale_ref[...] + shift_ref[...]
    y2 = y2 * jax.nn.sigmoid(y2)                           # SiLU
    y2 = y2 * vmask_ref[...]
    r = jnp.dot(wa_ref[...].astype(_MXU_DTYPE), y1.astype(_MXU_DTYPE),
                preferred_element_type=jnp.float32)
    r = r + jnp.dot(wb_ref[...].astype(_MXU_DTYPE), y2.astype(_MXU_DTYPE),
                    preferred_element_type=jnp.float32)
    o_ref[0] = r.astype(o_ref.dtype)
    s = jnp.sum(r, axis=-1, keepdims=True)
    ss = jnp.sum(r * r, axis=-1, keepdims=True)
    stat_ref[0, 0] = jnp.concatenate([s, ss], axis=-1)


def _dw5x5_kernel(r_ref, scale_ref, shift_ref, k_ref, hh_ref, ww_ref,
                  y_ref, d_ref, stat_ref, *, H, W, act_silu):
    # r: (1, TC, NP) raw previous 1x1-conv output, lane-dense over the padded
    # flattened spatial axis.  The previous conv's BatchNorm is folded to
    # scale/shift and fused here (plus optional SiLU).  The depthwise 5x5 is
    # 25 taps of roll (XLU) + edge mask (VPU) + madd (VPU) on the flat axis.
    # Outputs: y = act(BN(r)), d = DWConv5x5(y) (pre-BN), d's BN partial sums.
    r = r_ref[0].astype(jnp.float32)                       # (tc, np)
    y = r * scale_ref[...] + shift_ref[...]
    if act_silu:
        y = y * jax.nn.sigmoid(y)

    hh = hh_ref[...]                                       # (1, np) row index
    ww = ww_ref[...]                                       # (1, np) col index
    valid = hh < H                                         # spatial-pad mask
    y = jnp.where(valid, y, 0.0)                           # pad lanes -> 0
    y_ref[0] = y.astype(y_ref.dtype)

    npad = y.shape[-1]
    acc = jnp.zeros_like(y)
    for dh in range(5):                                    # unrolled 5x5 taps
        oh = dh - 2
        row_ok = (hh >= -oh) & (hh < H - oh)
        for dw in range(5):
            ow = dw - 2
            off = oh * W + ow
            m = row_ok & (ww >= -ow) & (ww < W - ow)
            shifted = y if off == 0 else pltpu.roll(y, (-off) % npad, axis=1)
            tap = dh * 5 + dw
            k = k_ref[:, tap:tap + 1].astype(jnp.float32)  # (tc, 1)
            acc = acc + k * jnp.where(m, shifted, 0.0)
    acc = jnp.where(valid, acc, 0.0)                       # pad lanes -> 0
    d_ref[0] = acc.astype(d_ref.dtype)

    s = jnp.sum(acc, axis=-1, keepdims=True)
    ss = jnp.sum(acc * acc, axis=-1, keepdims=True)
    stat_ref[0, 0] = jnp.concatenate([s, ss], axis=-1)


def _residual_concat_kernel(z1_ref, d2_ref, scale_ref, shift_ref, x_ref, o_ref):
    # out = concat(z1, BN(d2)) + x, written as two half-slabs (no concat temp).
    ch = z1_ref.shape[1]
    z1 = z1_ref[0].astype(jnp.float32)
    z2 = d2_ref[0].astype(jnp.float32) * scale_ref[...] + shift_ref[...]
    xb = x_ref[0].astype(jnp.float32)
    o_ref[0, :ch] = (z1 + xb[:ch]).astype(o_ref.dtype)
    o_ref[0, ch:] = (z2 + xb[ch:]).astype(o_ref.dtype)


# ----------------------------------------------------------------------------
# pallas_call wrappers
# ----------------------------------------------------------------------------
def _pointwise_conv(x, w, tn):
    b, cin, npad = x.shape
    cout = w.shape[0]
    nb = npad // tn
    return pl.pallas_call(
        _pw_conv_kernel,
        out_shape=(jax.ShapeDtypeStruct((b, cout, npad), x.dtype),
                   jax.ShapeDtypeStruct((b, nb, cout, 2), jnp.float32)),
        grid_spec=pltpu.PrefetchScalarGridSpec(
            num_scalar_prefetch=0,
            grid=(b, nb),
            in_specs=[
                pl.BlockSpec((1, cin, tn), lambda i, j: (i, 0, j)),
                pl.BlockSpec((cout, cin), lambda i, j: (0, 0)),
            ],
            out_specs=[
                pl.BlockSpec((1, cout, tn), lambda i, j: (i, 0, j)),
                pl.BlockSpec((1, 1, cout, 2), lambda i, j: (i, j, 0, 0)),
            ]),
        compiler_params=pltpu.CompilerParams(
            dimension_semantics=("parallel", "parallel")),
    )(x, w)


def _pointwise_conv_ghost(y1, d1, vmask, scale, shift, wa, wb, tn):
    b, ch, npad = y1.shape
    cout = wa.shape[0]
    nb = npad // tn
    return pl.pallas_call(
        _pw_conv_ghost_kernel,
        out_shape=(jax.ShapeDtypeStruct((b, cout, npad), y1.dtype),
                   jax.ShapeDtypeStruct((b, nb, cout, 2), jnp.float32)),
        grid_spec=pltpu.PrefetchScalarGridSpec(
            num_scalar_prefetch=0,
            grid=(b, nb),
            in_specs=[
                pl.BlockSpec((1, ch, tn), lambda i, j: (i, 0, j)),
                pl.BlockSpec((1, ch, tn), lambda i, j: (i, 0, j)),
                pl.BlockSpec((1, tn), lambda i, j: (0, j)),
                pl.BlockSpec((ch, 1), lambda i, j: (0, 0)),
                pl.BlockSpec((ch, 1), lambda i, j: (0, 0)),
                pl.BlockSpec((cout, ch), lambda i, j: (0, 0)),
                pl.BlockSpec((cout, ch), lambda i, j: (0, 0)),
            ],
            out_specs=[
                pl.BlockSpec((1, cout, tn), lambda i, j: (i, 0, j)),
                pl.BlockSpec((1, 1, cout, 2), lambda i, j: (i, j, 0, 0)),
            ]),
        compiler_params=pltpu.CompilerParams(
            dimension_semantics=("parallel", "parallel")),
    )(y1, d1, vmask, scale.reshape(ch, 1), shift.reshape(ch, 1), wa, wb)


def _dw_conv5x5(r, scale, shift, kdw, hh, ww, *, H, W, act_silu):
    """r: (B, C, Npad) raw previous-conv output.  Returns (y, d, stats) with
    y = act(BN(r)), d = DWConv5x5(y) (pre-BN), stats = per-block [sum,sumsq] of d."""
    b, c, npad = r.shape
    tc = _pick_chan_tile(c)
    nbc = c // tc
    k_taps = kdw.reshape(c, 25)
    kern = functools.partial(_dw5x5_kernel, H=H, W=W, act_silu=act_silu)
    return pl.pallas_call(
        kern,
        out_shape=(jax.ShapeDtypeStruct((b, c, npad), r.dtype),
                   jax.ShapeDtypeStruct((b, c, npad), r.dtype),
                   jax.ShapeDtypeStruct((b, nbc, tc, 2), jnp.float32)),
        grid_spec=pltpu.PrefetchScalarGridSpec(
            num_scalar_prefetch=0,
            grid=(b, nbc),
            in_specs=[
                pl.BlockSpec((1, tc, npad), lambda i, j: (i, j, 0)),
                pl.BlockSpec((tc, 1), lambda i, j: (j, 0)),
                pl.BlockSpec((tc, 1), lambda i, j: (j, 0)),
                pl.BlockSpec((tc, 25), lambda i, j: (j, 0)),
                pl.BlockSpec((1, npad), lambda i, j: (0, 0)),
                pl.BlockSpec((1, npad), lambda i, j: (0, 0)),
            ],
            out_specs=[
                pl.BlockSpec((1, tc, npad), lambda i, j: (i, j, 0)),
                pl.BlockSpec((1, tc, npad), lambda i, j: (i, j, 0)),
                pl.BlockSpec((1, 1, tc, 2), lambda i, j: (i, j, 0, 0)),
            ]),
        compiler_params=pltpu.CompilerParams(
            dimension_semantics=("parallel", "parallel")),
    )(r, scale.reshape(c, 1), shift.reshape(c, 1), k_taps, hh, ww)


def _residual_concat(z1, d2, scale, shift, x, tn):
    b, ch, npad = z1.shape
    c2 = 2 * ch
    return pl.pallas_call(
        _residual_concat_kernel,
        out_shape=jax.ShapeDtypeStruct((b, c2, npad), x.dtype),
        grid_spec=pltpu.PrefetchScalarGridSpec(
            num_scalar_prefetch=0,
            grid=(b, npad // tn),
            in_specs=[
                pl.BlockSpec((1, ch, tn), lambda i, j: (i, 0, j)),
                pl.BlockSpec((1, ch, tn), lambda i, j: (i, 0, j)),
                pl.BlockSpec((ch, 1), lambda i, j: (0, 0)),
                pl.BlockSpec((ch, 1), lambda i, j: (0, 0)),
                pl.BlockSpec((1, c2, tn), lambda i, j: (i, 0, j)),
            ],
            out_specs=pl.BlockSpec((1, c2, tn), lambda i, j: (i, 0, j)),
        ),
        compiler_params=pltpu.CompilerParams(
            dimension_semantics=("parallel", "parallel")),
    )(z1, d2, scale.reshape(ch, 1), shift.reshape(ch, 1), x)


# ----------------------------------------------------------------------------
# BatchNorm fold from kernel-emitted partial sums + forward pass
# ----------------------------------------------------------------------------
def _bn_from_stats(stats_sum, count, gamma, beta, eps=_BN_EPS):
    """stats_sum: (C, 2) = [sum, sum_sq] over all valid pixels and batch.
    One-pass variance in f32 (required by the partial-sum fusion); fine for
    typical activation magnitudes.  TODO(synk): centered two-pass fold if
    activations with |mean| >> std ever show up."""
    mean = stats_sum[:, 0] / count
    var = jnp.maximum(stats_sum[:, 1] / count - mean * mean, 0.0)
    scale = gamma * jax.lax.rsqrt(var + eps)
    shift = beta - mean * scale
    return scale, shift


def ghost_bottleneck(x, params):
    """GhostBottleneck forward, stride s=1 path (conv chain + identity shortcut)."""
    # TODO(synk): s=2 path (stride-2 DWConv in the conv chain plus the DWConv +
    # 1x1-Conv shortcut) is not implemented; only the default s=1 path is.
    b, c1, h, w = x.shape
    hw = h * w
    npad = _round_up(hw, 128)            # lane-dense spatial axis
    count = b * hw                       # true BN element count (no pad)

    x_flat = x.reshape(b, c1, hw)
    if npad != hw:
        x_flat = jnp.pad(x_flat, ((0, 0), (0, 0), (0, npad - hw)))
    tn = _pick_lane_tile(npad)

    # Flattened row/col indices + validity mask (constants under jit); they let
    # the kernels mask conv edges / spatial pad without any in-kernel int div.
    col = jnp.arange(npad, dtype=jnp.int32)
    hh = (col // w).reshape(1, npad)
    ww = (col % w).reshape(1, npad)
    vmask = (col < hw).astype(jnp.float32).reshape(1, npad)

    # ---- GhostConv(c1, c2//2), act=SiLU -------------------------------------
    r1, st_r1 = _pointwise_conv(x_flat, params["w1"], tn)
    s1a, t1a = _bn_from_stats(st_r1.sum(axis=(0, 1)), count,
                              params["g1a"], params["b1a"])
    y1, d1, st_d1 = _dw_conv5x5(r1, s1a, t1a, params["kdw1"], hh, ww,
                                H=h, W=w, act_silu=True)    # y1=SiLU(BN(r1)), d1=DW(y1)
    ch_a = y1.shape[1]
    s1b, t1b = _bn_from_stats(st_d1.sum(axis=0).reshape(ch_a, 2), count,
                              params["g1b"], params["b1b"])

    # ---- GhostConv(c2//2, c2), act=False ------------------------------------
    w2 = params["w2"]
    r2, st_r2 = _pointwise_conv_ghost(y1, d1, vmask, s1b, t1b,
                                      w2[:, :ch_a], w2[:, ch_a:], tn)
    s2a, t2a = _bn_from_stats(st_r2.sum(axis=(0, 1)), count,
                              params["g2a"], params["b2a"])
    z1, d2, st_d2 = _dw_conv5x5(r2, s2a, t2a, params["kdw2"], hh, ww,
                                H=h, W=w, act_silu=False)   # z1=BN(r2), d2=DW(z1)
    ch_b = z1.shape[1]
    s2b, t2b = _bn_from_stats(st_d2.sum(axis=0).reshape(ch_b, 2), count,
                              params["g2b"], params["b2b"])

    # ---- ghost concat + identity shortcut -----------------------------------
    out = _residual_concat(z1, d2, s2b, t2b, x_flat, tn)
    return out[:, :, :hw].reshape(b, 2 * ch_b, h, w)


# ----------------------------------------------------------------------------
# pure-JAX reference (for the correctness check)
# ----------------------------------------------------------------------------
def _bn_ref(x, gamma, beta, eps=_BN_EPS):
    mean = jnp.mean(x, axis=(0, 2, 3), keepdims=True)
    var = jnp.mean(jnp.square(x - mean), axis=(0, 2, 3), keepdims=True)
    return ((x - mean) * jax.lax.rsqrt(var + eps) * gamma.reshape(1, -1, 1, 1)
            + beta.reshape(1, -1, 1, 1))


def _conv1x1_ref(x, w):
    return jnp.einsum("oc,bchw->bohw", w, x, precision=jax.lax.Precision.HIGHEST)


def _dwconv5x5_ref(x, k):
    return jax.lax.conv_general_dilated(
        x, k[:, None, :, :], window_strides=(1, 1), padding=((2, 2), (2, 2)),
        dimension_numbers=("NCHW", "OIHW", "NCHW"),
        feature_group_count=x.shape[1], precision=jax.lax.Precision.HIGHEST)


def ghost_bottleneck_ref(x, p):
    silu = jax.nn.silu
    y1 = silu(_bn_ref(_conv1x1_ref(x, p["w1"]), p["g1a"], p["b1a"]))
    y2 = silu(_bn_ref(_dwconv5x5_ref(y1, p["kdw1"]), p["g1b"], p["b1b"]))
    ya = jnp.concatenate([y1, y2], axis=1)
    z1 = _bn_ref(_conv1x1_ref(ya, p["w2"]), p["g2a"], p["b2a"])
    z2 = _bn_ref(_dwconv5x5_ref(z1, p["kdw2"]), p["g2b"], p["b2b"])
    return jnp.concatenate([z1, z2], axis=1) + x


# ----------------------------------------------------------------------------
if __name__ == "__main__":
    # GhostBottleneck(c1=16, c2=16, k=3, s=1): c_=8, stage-A hidden=4, stage-B hidden=8.
    B, C1, H, W = 2, 16, 16, 16
    C2 = 16
    ch_a = (C2 // 2) // 2   # 4
    ch_b = C2 // 2          # 8

    key = jax.random.PRNGKey(0)
    ks = jax.random.split(key, 13)
    x = jax.random.normal(ks[0], (B, C1, H, W), jnp.float32)

    params = {
        # GhostConv(c1, c_): 1x1 conv (no bias) + BN + SiLU; DW 5x5 (no bias) + BN + SiLU
        "w1":   jax.random.normal(ks[1], (ch_a, C1), jnp.float32) / jnp.sqrt(C1),
        "g1a":  1.0 + 0.1 * jax.random.normal(ks[2], (ch_a,), jnp.float32),
        "b1a":  0.1 * jax.random.normal(ks[3], (ch_a,), jnp.float32),
        "kdw1": jax.random.normal(ks[4], (ch_a, 5, 5), jnp.float32) * 0.2,
        "g1b":  1.0 + 0.1 * jax.random.normal(ks[5], (ch_a,), jnp.float32),
        "b1b":  0.1 * jax.random.normal(ks[6], (ch_a,), jnp.float32),
        # GhostConv(c_, c2, act=False)
        "w2":   jax.random.normal(ks[7], (ch_b, 2 * ch_a), jnp.float32) / jnp.sqrt(2 * ch_a),
        "g2a":  1.0 + 0.1 * jax.random.normal(ks[8], (ch_b,), jnp.float32),
        "b2a":  0.1 * jax.random.normal(ks[9], (ch_b,), jnp.float32),
        "kdw2": jax.random.normal(ks[10], (ch_b, 5, 5), jnp.float32) * 0.2,
        "g2b":  1.0 + 0.1 * jax.random.normal(ks[11], (ch_b,), jnp.float32),
        "b2b":  0.1 * jax.random.normal(ks[12], (ch_b,), jnp.float32),
    }

    fwd = jax.jit(ghost_bottleneck)
    out = jax.block_until_ready(fwd(x, params))
    assert out.shape == (B, C2, H, W)

    ref = ghost_bottleneck_ref(x, params)
    err = float(jnp.max(jnp.abs(out - ref)))
    assert jnp.allclose(out, ref, atol=1e-2, rtol=1e-2), \
        f"mismatch vs reference (max abs err {err})"

    print("KERNEL_OK")
</pallas_src>

<mosaic_0001>
module attributes {stable_mosaic.version = 11 : i64} {
  func.func @_pw_conv_kernel(%arg0: i32, %arg1: i32, %arg2: memref<1x16x256xf32, #tpu.memory_space<vmem>>, %arg3: memref<4x16xf32, #tpu.memory_space<vmem>>, %arg4: memref<1x4x256xf32, #tpu.memory_space<vmem>>, %arg5: memref<1x1x4x2xf32, #tpu.memory_space<vmem>>) attributes {dimension_semantics = [#tpu.dimension_semantics<parallel>, #tpu.dimension_semantics<parallel>], iteration_bounds = array<i64: 2, 1>, scalar_prefetch = 0 : i64, scratch_operands = 0 : i64, tpu.core_type = #tpu.core_type<tc>, window_params = [{transform_indices = @transform_0, window_bounds = array<i64: 1, 16, 256>}, {pipeline_mode = #tpu.pipeline_mode<synchronous>, transform_indices = @transform_1, window_bounds = array<i64: 4, 16>}, {transform_indices = @transform_2, window_bounds = array<i64: 1, 4, 256>}, {transform_indices = @transform_3, window_bounds = array<i64: 1, 1, 4, 2>}]} {
    %c0 = arith.constant 0 : index
    %c0_0 = arith.constant 0 : index
    %c0_1 = arith.constant 0 : index
    %0 = vector.load %arg2[%c0, %c0_0, %c0_1] : memref<1x16x256xf32, #tpu.memory_space<vmem>>, vector<1x16x256xf32>
    %1 = vector.shape_cast %0 : vector<1x16x256xf32> to vector<16x256xf32>
    %c0_2 = arith.constant 0 : index
    %c0_3 = arith.constant 0 : index
    %2 = vector.load %arg3[%c0_2, %c0_3] : memref<4x16xf32, #tpu.memory_space<vmem>>, vector<4x16xf32>
    %cst = arith.constant dense<0.000000e+00> : vector<4x256xf32>
    %3 = tpu.matmul %2, %1, %cst {dimension_numbers = #tpu.dot_dimension_numbers<[1], [0], [0], [1], [0, 0, 1, 1], [], []>} : vector<4x16xf32>, vector<16x256xf32>, vector<4x256xf32> -> vector<4x256xf32>
    %c0_4 = arith.constant 0 : index
    %c0_5 = arith.constant 0 : index
    %c0_6 = arith.constant 0 : index
    %4 = vector.load %arg4[%c0_4, %c0_5, %c0_6] : memref<1x4x256xf32, #tpu.memory_space<vmem>>, vector<1x4x256xf32>
    %5 = vector.shape_cast %4 : vector<1x4x256xf32> to vector<4x256xf32>
    %6 = vector.shape_cast %3 : vector<4x256xf32> to vector<1x4x256xf32>
    tpu.vector_store %arg4[%c0_4, %c0_5, %c0_6], %6 {strides = array<i32>} : memref<1x4x256xf32, #tpu.memory_space<vmem>>, vector<1x4x256xf32>,
    %cst_7 = arith.constant dense<0.000000e+00> : vector<4xf32>
    %7 = vector.multi_reduction <add>, %3, %cst_7 [1] : vector<4x256xf32> to vector<4xf32>
    %8 = vector.shape_cast %7 : vector<4xf32> to vector<4x1xf32>
    %9 = arith.mulf %3, %3 : vector<4x256xf32>
    %cst_8 = arith.constant dense<0.000000e+00> : vector<4xf32>
    %10 = vector.multi_reduction <add>, %9, %cst_8 [1] : vector<4x256xf32> to vector<4xf32>
    %11 = vector.shape_cast %10 : vector<4xf32> to vector<4x1xf32>
    %12 = tpu.concatenate %8, %11 in 1 : vector<4x1xf32>, vector<4x1xf32> -> vector<4x2xf32>
    %c0_9 = arith.constant 0 : index
    %c0_10 = arith.constant 0 : index
    %c0_11 = arith.constant 0 : index
    %c0_12 = arith.constant 0 : index
    %13 = vector.load %arg5[%c0_9, %c0_10, %c0_11, %c0_12] : memref<1x1x4x2xf32, #tpu.memory_space<vmem>>, vector<1x1x4x2xf32>
    %14 = vector.shape_cast %13 : vector<1x1x4x2xf32> to vector<4x2xf32>
    %15 = vector.shape_cast %12 : vector<4x2xf32> to vector<1x1x4x2xf32>
    tpu.vector_store %arg5[%c0_9, %c0_10, %c0_11, %c0_12], %15 {strides = array<i32>} : memref<1x1x4x2xf32, #tpu.memory_space<vmem>>, vector<1x1x4x2xf32>,
    return
  }
  func.func @transform_0(%arg0: i32, %arg1: i32) -> (i32, i32, i32) {
    %c0_i32 = arith.constant 0 : i32
    %c0_i32_0 = arith.constant 0 : i32
    return %arg0, %c0_i32, %arg1 : i32, i32, i32
  }
  func.func @transform_1(%arg0: i32, %arg1: i32) -> (i32, i32) {
    %c0_i32 = arith.constant 0 : i32
    %c0_i32_0 = arith.constant 0 : i32
    %c0_i32_1 = arith.constant 0 : i32
    return %c0_i32, %c0_i32_0 : i32, i32
  }
  func.func @transform_2(%arg0: i32, %arg1: i32) -> (i32, i32, i32) {
    %c0_i32 = arith.constant 0 : i32
    %c0_i32_0 = arith.constant 0 : i32
    return %arg0, %c0_i32, %arg1 : i32, i32, i32
  }
  func.func @transform_3(%arg0: i32, %arg1: i32) -> (i32, i32, i32, i32) {
    %c0_i32 = arith.constant 0 : i32
    %c0_i32_0 = arith.constant 0 : i32
    %c0_i32_1 = arith.constant 0 : i32
    return %arg0, %arg1, %c0_i32, %c0_i32_0 : i32, i32, i32, i32
  }
}

module attributes {stable_mosaic.version = 11 : i64} {
  func.func @_dw5x5_kernel(%arg0: i32, %arg1: i32, %arg2: memref<1x4x256xf32, #tpu.memory_space<vmem>>, %arg3: memref<4x1xf32, #tpu.memory_space<vmem>>, %arg4: memref<4x1xf32, #tpu.memory_space<vmem>>, %arg5: memref<4x25xf32, #tpu.memory_space<vmem>>, %arg6: memref<1x256xi32, #tpu.memory_space<vmem>>, %arg7: memref<1x256xi32, #tpu.memory_space<vmem>>, %arg8: memref<1x4x256xf32, #tpu.memory_space<vmem>>, %arg9: memref<1x4x256xf32, #tpu.memory_space<vmem>>, %arg10: memref<1x1x4x2xf32, #tpu.memory_space<vmem>>) attributes {dimension_semantics = [#tpu.dimension_semantics<parallel>, #tpu.dimension_semantics<parallel>], iteration_bounds = array<i64: 2, 1>, scalar_prefetch = 0 : i64, scratch_operands = 0 : i64, tpu.core_type = #tpu.core_type<tc>, window_params = [{transform_indices = @transform_0, window_bounds = array<i64: 1, 4, 256>}, {transform_indices = @transform_1, window_bounds = array<i64: 4, 1>}, {transform_indices = @transform_2, window_bounds = array<i64: 4, 1>}, {transform_indices = @transform_3, window_bounds = array<i64: 4, 25>}, {pipeline_mode = #tpu.pipeline_mode<synchronous>, transform_indices = @transform_4, window_bounds = array<i64: 1, 256>}, {pipeline_mode = #tpu.pipeline_mode<synchronous>, transform_indices = @transform_5, window_bounds = array<i64: 1, 256>}, {transform_indices = @transform_6, window_bounds = array<i64: 1, 4, 256>}, {transform_indices = @transform_7, window_bounds = array<i64: 1, 4, 256>}, {transform_indices = @transform_8, window_bounds = array<i64: 1, 1, 4, 2>}]} {
    %c0 = arith.constant 0 : index
    %c0_0 = arith.constant 0 : index
    %c0_1 = arith.constant 0 : index
    %0 = vector.load %arg2[%c0, %c0_0, %c0_1] : memref<1x4x256xf32, #tpu.memory_space<vmem>>, vector<1x4x256xf32>
    %1 = vector.shape_cast %0 : vector<1x4x256xf32> to vector<4x256xf32>
    %c0_2 = arith.constant 0 : index
    %c0_3 = arith.constant 0 : index
    %2 = vector.load %arg3[%c0_2, %c0_3] : memref<4x1xf32, #tpu.memory_space<vmem>>, vector<4x1xf32>
    %3 = vector.broadcast %2 : vector<4x1xf32> to vector<4x256xf32>
    %4 = arith.mulf %1, %3 : vector<4x256xf32>
    %c0_4 = arith.constant 0 : index
    %c0_5 = arith.constant 0 : index
    %5 = vector.load %arg4[%c0_4, %c0_5] : memref<4x1xf32, #tpu.memory_space<vmem>>, vector<4x1xf32>
    %6 = vector.broadcast %5 : vector<4x1xf32> to vector<4x256xf32>
    %7 = arith.addf %4, %6 : vector<4x256xf32>
    %8 = arith.negf %7 : vector<4x256xf32>
    %9 = math.exp %8 : vector<4x256xf32>
    %cst = arith.constant 1.000000e+00 : f32
    %10 = vector.broadcast %cst : f32 to vector<4x256xf32>
    %11 = arith.addf %10, %9 : vector<4x256xf32>
    %12 = arith.divf %10, %11 : vector<4x256xf32>
    %13 = arith.mulf %7, %12 : vector<4x256xf32>
    %c0_6 = arith.constant 0 : index
    %c0_7 = arith.constant 0 : index
    %14 = vector.load %arg6[%c0_6, %c0_7] : memref<1x256xi32, #tpu.memory_space<vmem>>, vector<1x256xi32>
    %c0_8 = arith.constant 0 : index
    %c0_9 = arith.constant 0 : index
    %15 = vector.load %arg7[%c0_8, %c0_9] : memref<1x256xi32, #tpu.memory_space<vmem>>, vector<1x256xi32>
    %c16_i32 = arith.constant 16 : i32
    %16 = vector.broadcast %c16_i32 : i32 to vector<1x256xi32>
    %17 = arith.cmpi slt, %14, %16 : vector<1x256xi32>
    %cst_10 = arith.constant 0.000000e+00 : f32
    %18 = vector.shape_cast %17 : vector<1x256xi1> to vector<1x256xi1>
    %19 = vector.broadcast %18 : vector<1x256xi1> to vector<4x256xi1>
    %20 = vector.broadcast %cst_10 : f32 to vector<4x256xf32>
    %21 = arith.select %19, %13, %20 : vector<4x256xi1>, vector<4x256xf32>
    %c0_11 = arith.constant 0 : index
    %c0_12 = arith.constant 0 : index
    %c0_13 = arith.constant 0 : index
    %22 = vector.load %arg8[%c0_11, %c0_12, %c0_13] : memref<1x4x256xf32, #tpu.memory_space<vmem>>, vector<1x4x256xf32>
    %23 = vector.shape_cast %22 : vector<1x4x256xf32> to vector<4x256xf32>
    %24 = vector.shape_cast %21 : vector<4x256xf32> to vector<1x4x256xf32>
    tpu.vector_store %arg8[%c0_11, %c0_12, %c0_13], %24 {strides = array<i32>} : memref<1x4x256xf32, #tpu.memory_space<vmem>>, vector<1x4x256xf32>,
    %cst_14 = arith.constant 0.000000e+00 : f32
    %25 = vector.broadcast %cst_14 : f32 to vector<4x256xf32>
    %c2_i32 = arith.constant 2 : i32
    %26 = vector.broadcast %c2_i32 : i32 to vector<1x256xi32>
    %27 = arith.cmpi sge, %14, %26 : vector<1x256xi32>
    %c18_i32 = arith.constant 18 : i32
    %28 = vector.broadcast %c18_i32 : i32 to vector<1x256xi32>
    %29 = arith.cmpi slt, %14, %28 : vector<1x256xi32>
    %30 = arith.andi %27, %29 : vector<1x256xi1>
    %c2_i32_15 = arith.constant 2 : i32
    %31 = vector.broadcast %c2_i32_15 : i32 to vector<1x256xi32>
    %32 = arith.cmpi sge, %15, %31 : vector<1x256xi32>
    %33 = arith.andi %30, %32 : vector<1x256xi1>
    %c18_i32_16 = arith.constant 18 : i32
    %34 = vector.broadcast %c18_i32_16 : i32 to vector<1x256xi32>
    %35 = arith.cmpi slt, %15, %34 : vector<1x256xi32>
    %36 = arith.andi %33, %35 : vector<1x256xi1>
    %c34_i32 = arith.constant 34 : i32
    %37 = tpu.dynamic_rotate %21 by %c34_i32 dim 1 : vector<4x256xf32>, i32 -> vector<4x256xf32>
    %c0_17 = arith.constant 0 : index
    %c0_18 = arith.constant 0 : index
    %38 = vector.load %arg5[%c0_17, %c0_18] : memref<4x25xf32, #tpu.memory_space<vmem>>, vector<4x1xf32>
    %cst_19 = arith.constant 0.000000e+00 : f32
    %39 = vector.shape_cast %36 : vector<1x256xi1> to vector<1x256xi1>
    %40 = vector.broadcast %39 : vector<1x256xi1> to vector<4x256xi1>
    %41 = vector.broadcast %cst_19 : f32 to vector<4x256xf32>
    %42 = arith.select %40, %37, %41 : vector<4x256xi1>, vector<4x256xf32>
    %43 = vector.broadcast %38 : vector<4x1xf32> to vector<4x256xf32>
    %44 = arith.mulf %43, %42 : vector<4x256xf32>
    %45 = arith.addf %25, %44 : vector<4x256xf32>
    %c1_i32 = arith.constant 1 : i32
    %46 = vector.broadcast %c1_i32 : i32 to vector<1x256xi32>
    %47 = arith.cmpi sge, %15, %46 : vector<1x256xi32>
    %48 = arith.andi %30, %47 : vector<1x256xi1>
    %c17_i32 = arith.constant 17 : i32
    %49 = vector.broadcast %c17_i32 : i32 to vector<1x256xi32>
    %50 = arith.cmpi slt, %15, %49 : vector<1x256xi32>
    %51 = arith.andi %48, %50 : vector<1x256xi1>
    %c33_i32 = arith.constant 33 : i32
    %52 = tpu.dynamic_rotate %21 by %c33_i32 dim 1 : vector<4x256xf32>, i32 -> vector<4x256xf32>
    %c0_20 = arith.constant 0 : index
    %c1 = arith.constant 1 : index
    %53 = vector.load %arg5[%c0_20, %c1] : memref<4x25xf32, #tpu.memory_space<vmem>>, vector<4x1xf32>
    %cst_21 = arith.constant 0.000000e+00 : f32
    %54 = vector.shape_cast %51 : vector<1x256xi1> to vector<1x256xi1>
    %55 = vector.broadcast %54 : vector<1x256xi1> to vector<4x256xi1>
    %56 = vector.broadcast %cst_21 : f32 to vector<4x256xf32>
    %57 = arith.select %55, %52, %56 : vector<4x256xi1>, vector<4x256xf32>
    %58 = vector.broadcast %53 : vector<4x1xf32> to vector<4x256xf32>
    %59 = arith.mulf %58, %57 : vector<4x256xf32>
    %60 = arith.addf %45, %59 : vector<4x256xf32>
    %c0_i32 = arith.constant 0 : i32
    %61 = vector.broadcast %c0_i32 : i32 to vector<1x256xi32>
    %62 = arith.cmpi sge, %15, %61 : vector<1x256xi32>
    %63 = arith.andi %30, %62 : vector<1x256xi1>
    %c16_i32_22 = arith.constant 16 : i32
    %64 = vector.broadcast %c16_i32_22 : i32 to vector<1x256xi32>
    %65 = arith.cmpi slt, %15, %64 : vector<1x256xi32>
    %66 = arith.andi %63, %65 : vector<1x256xi1>
    %c32_i32 = arith.constant 32 : i32
    %67 = tpu.dynamic_rotate %21 by %c32_i32 dim 1 : vector<4x256xf32>, i32 -> vector<4x256xf32>
    %c0_23 = arith.constant 0 : index
    %c2 = arith.constant 2 : index
    %68 = vector.load %arg5[%c0_23, %c2] : memref<4x25xf32, #tpu.memory_space<vmem>>, vector<4x1xf32>
    %cst_24 = arith.constant 0.000000e+00 : f32
    %69 = vector.shape_cast %66 : vector<1x256xi1> to vector<1x256xi1>
    %70 = vector.broadcast %69 : vector<1x256xi1> to vector<4x256xi1>
    %71 = vector.broadcast %cst_24 : f32 to vector<4x256xf32>
    %72 = arith.select %70, %67, %71 : vector<4x256xi1>, vector<4x256xf32>
    %73 = vector.broadcast %68 : vector<4x1xf32> to vector<4x256xf32>
    %74 = arith.mulf %73, %72 : vector<4x256xf32>
    %75 = arith.addf %60, %74 : vector<4x256xf32>
    %c-1_i32 = arith.constant -1 : i32
    %76 = vector.broadcast %c-1_i32 : i32 to vector<1x256xi32>
    %77 = arith.cmpi sge, %15, %76 : vector<1x256xi32>
    %78 = arith.andi %30, %77 : vector<1x256xi1>
    %c15_i32 = arith.constant 15 : i32
    %79 = vector.broadcast %c15_i32 : i32 to vector<1x256xi32>
    %80 = arith.cmpi slt, %15, %79 : vector<1x256xi32>
    %81 = arith.andi %78, %80 : vector<1x256xi1>
    %c31_i32 = arith.constant 31 : i32
    %82 = tpu.dynamic_rotate %21 by %c31_i32 dim 1 : vector<4x256xf32>, i32 -> vector<4x256xf32>
    %c0_25 = arith.constant 0 : index
    %c3 = arith.constant 3 : index
    %83 = vector.load %arg5[%c0_25, %c3] : memref<4x25xf32, #tpu.memory_space<vmem>>, vector<4x1xf32>
    %cst_26 = arith.constant 0.000000e+00 : f32
    %84 = vector.shape_cast %81 : vector<1x256xi1> to vector<1x256xi1>
    %85 = vector.broadcast %84 : vector<1x256xi1> to vector<4x256xi1>
    %86 = vector.broadcast %cst_26 : f32 to vector<4x256xf32>
    %87 = arith.select %85, %82, %86 : vector<4x256xi1>, vector<4x256xf32>
    %88 = vector.broadcast %83 : vector<4x1xf32> to vector<4x256xf32>
    %89 = arith.mulf %88, %87 : vector<4x256xf32>
    %90 = arith.addf %75, %89 : vector<4x256xf32>
    %c-2_i32 = arith.constant -2 : i32
    %91 = vector.broadcast %c-2_i32 : i32 to vector<1x256xi32>
    %92 = arith.cmpi sge, %15, %91 : vector<1x256xi32>
    %93 = arith.andi %30, %92 : vector<1x256xi1>
    %c14_i32 = arith.constant 14 : i32
    %94 = vector.broadcast %c14_i32 : i32 to vector<1x256xi32>
    %95 = arith.cmpi slt, %15, %94 : vector<1x256xi32>
    %96 = arith.andi %93, %95 : vector<1x256xi1>
    %c30_i32 = arith.constant 30 : i32
    %97 = tpu.dynamic_rotate %21 by %c30_i32 dim 1 : vector<4x256xf32>, i32 -> vector<4x256xf32>
    %c0_27 = arith.constant 0 : index
    %c4 = arith.constant 4 : index
    %98 = vector.load %arg5[%c0_27, %c4] : memref<4x25xf32, #tpu.memory_space<vmem>>, vector<4x1xf32>
    %cst_28 = arith.constant 0.000000e+00 : f32
    %99 = vector.shape_cast %96 : vector<1x256xi1> to vector<1x256xi1>
    %100 = vector.broadcast %99 : vector<1x256xi1> to vector<4x256xi1>
    %101 = vector.broadcast %cst_28 : f32 to vector<4x256xf32>
    %102 = arith.select %100, %97, %101 : vector<4x256xi1>, vector<4x256xf32>
    %103 = vector.broadcast %98 : vector<4x1xf32> to vector<4x256xf32>
    %104 = arith.mulf %103, %102 : vector<4x256xf32>
    %105 = arith.addf %90, %104 : vector<4x256xf32>
    %c1_i32_29 = arith.constant 1 : i32
    %106 = vector.broadcast %c1_i32_29 : i32 to vector<1x256xi32>
    %107 = arith.cmpi sge, %14, %106 : vector<1x256xi32>
    %c17_i32_30 = arith.constant 17 : i32
    %108 = vector.broadcast %c17_i32_30 : i32 to vector<1x256xi32>
    %109 = arith.cmpi slt, %14, %108 : vector<1x256xi32>
    %110 = arith.andi %107, %109 : vector<1x256xi1>
    %c2_i32_31 = arith.constant 2 : i32
    %111 = vector.broadcast %c2_i32_31 : i32 to vector<1x256xi32>
    %112 = arith.cmpi sge, %15, %111 : vector<1x256xi32>
    %113 = arith.andi %110, %112 : vector<1x256xi1>
    %c18_i32_32 = arith.constant 18 : i32
    %114 = vector.broadcast %c18_i32_32 : i32 to vector<1x256xi32>
    %115 = arith.cmpi slt, %15, %114 : vector<1x256xi32>
    %116 = arith.andi %113, %115 : vector<1x256xi1>
    %c18_i32_33 = arith.constant 18 : i32
    %117 = tpu.dynamic_rotate %21 by %c18_i32_33 dim 1 : vector<4x256xf32>, i32 -> vector<4x256xf32>
    %c0_34 = arith.constant 0 : index
    %c5 = arith.constant 5 : index
    %118 = vector.load %arg5[%c0_34, %c5] : memref<4x25xf32, #tpu.memory_space<vmem>>, vector<4x1xf32>
    %cst_35 = arith.constant 0.000000e+00 : f32
    %119 = vector.shape_cast %116 : vector<1x256xi1> to vector<1x256xi1>
    %120 = vector.broadcast %119 : vector<1x256xi1> to vector<4x256xi1>
    %121 = vector.broadcast %cst_35 : f32 to vector<4x256xf32>
    %122 = arith.select %120, %117, %121 : vector<4x256xi1>, vector<4x256xf32>
    %123 = vector.broadcast %118 : vector<4x1xf32> to vector<4x256xf32>
    %124 = arith.mulf %123, %122 : vector<4x256xf32>
    %125 = arith.addf %105, %124 : vector<4x256xf32>
    %c1_i32_36 = arith.constant 1 : i32
    %126 = vector.broadcast %c1_i32_36 : i32 to vector<1x256xi32>
    %127 = arith.cmpi sge, %15, %126 : vector<1x256xi32>
    %128 = arith.andi %110, %127 : vector<1x256xi1>
    %c17_i32_37 = arith.constant 17 : i32
    %129 = vector.broadcast %c17_i32_37 : i32 to vector<1x256xi32>
    %130 = arith.cmpi slt, %15, %129 : vector<1x256xi32>
    %131 = arith.andi %128, %130 : vector<1x256xi1>
    %c17_i32_38 = arith.constant 17 : i32
    %132 = tpu.dynamic_rotate %21 by %c17_i32_38 dim 1 : vector<4x256xf32>, i32 -> vector<4x256xf32>
    %c0_39 = arith.constant 0 : index
    %c6 = arith.constant 6 : index
    %133 = vector.load %arg5[%c0_39, %c6] : memref<4x25xf32, #tpu.memory_space<vmem>>, vector<4x1xf32>
    %cst_40 = arith.constant 0.000000e+00 : f32
    %134 = vector.shape_cast %131 : vector<1x256xi1> to vector<1x256xi1>
    %135 = vector.broadcast %134 : vector<1x256xi1> to vector<4x256xi1>
    %136 = vector.broadcast %cst_40 : f32 to vector<4x256xf32>
    %137 = arith.select %135, %132, %136 : vector<4x256xi1>, vector<4x256xf32>
    %138 = vector.broadcast %133 : vector<4x1xf32> to vector<4x256xf32>
    %139 = arith.mulf %138, %137 : vector<4x256xf32>
    %140 = arith.addf %125, %139 : vector<4x256xf32>
    %c0_i32_41 = arith.constant 0 : i32
    %141 = vector.broadcast %c0_i32_41 : i32 to vector<1x256xi32>
    %142 = arith.cmpi sge, %15, %141 : vector<1x256xi32>
    %143 = arith.andi %110, %142 : vector<1x256xi1>
    %c16_i32_42 = arith.constant 16 : i32
    %144 = vector.broadcast %c16_i32_42 : i32 to vector<1x256xi32>
    %145 = arith.cmpi slt, %15, %144 : vector<1x256xi32>
    %146 = arith.andi %143, %145 : vector<1x256xi1>
    %c16_i32_43 = arith.constant 16 : i32
    %147 = tpu.dynamic_rotate %21 by %c16_i32_43 dim 1 : vector<4x256xf32>, i32 -> vector<4x256xf32>
    %c0_44 = arith.constant 0 : index
    %c7 = arith.constant 7 : index
    %148 = vector.load %arg5[%c0_44, %c7] : memref<4x25xf32, #tpu.memory_space<vmem>>, vector<4x1xf32>
    %cst_45 = arith.constant 0.000000e+00 : f32
    %149 = vector.shape_cast %146 : vector<1x256xi1> to vector<1x256xi1>
    %150 = vector.broadcast %149 : vector<1x256xi1> to vector<4x256xi1>
    %151 = vector.broadcast %cst_45 : f32 to vector<4x256xf32>
    %152 = arith.select %150, %147, %151 : vector<4x256xi1>, vector<4x256xf32>
    %153 = vector.broadcast %148 : vector<4x1xf32> to vector<4x256xf32>
    %154 = arith.mulf %153, %152 : vector<4x256xf32>
    %155 = arith.addf %140, %154 : vector<4x256xf32>
    %c-1_i32_46 = arith.constant -1 : i32
    %156 = vector.broadcast %c-1_i32_46 : i32 to vector<1x256xi32>
    %157 = arith.cmpi sge, %15, %156 : vector<1x256xi32>
    %158 = arith.andi %110, %157 : vector<1x256xi1>
    %c15_i32_47 = arith.constant 15 : i32
    %159 = vector.broadcast %c15_i32_47 : i32 to vector<1x256xi32>
    %160 = arith.cmpi slt, %15, %159 : vector<1x256xi32>
    %161 = arith.andi %158, %160 : vector<1x256xi1>
    %c15_i32_48 = arith.constant 15 : i32
    %162 = tpu.dynamic_rotate %21 by %c15_i32_48 dim 1 : vector<4x256xf32>, i32 -> vector<4x256xf32>
    %c0_49 = arith.constant 0 : index
    %c8 = arith.constant 8 : index
    %163 = vector.load %arg5[%c0_49, %c8] : memref<4x25xf32, #tpu.memory_space<vmem>>, vector<4x1xf32>
    %cst_50 = arith.constant 0.000000e+00 : f32
    %164 = vector.shape_cast %161 : vector<1x256xi1> to vector<1x256xi1>
    %165 = vector.broadcast %164 : vector<1x256xi1> to vector<4x256xi1>
    %166 = vector.broadcast %cst_50 : f32 to vector<4x256xf32>
    %167 = arith.select %165, %162, %166 : vector<4x256xi1>, vector<4x256xf32>
    %168 = vector.broadcast %163 : vector<4x1xf32> to vector<4x256xf32>
    %169 = arith.mulf %168, %167 : vector<4x256xf32>
    %170 = arith.addf %155, %169 : vector<4x256xf32>
    %c-2_i32_51 = arith.constant -2 : i32
    %171 = vector.broadcast %c-2_i32_51 : i32 to vector<1x256xi32>
    %172 = arith.cmpi sge, %15, %171 : vector<1x256xi32>
    %173 = arith.andi %110, %172 : vector<1x256xi1>
    %c14_i32_52 = arith.constant 14 : i32
    %174 = vector.broadcast %c14_i32_52 : i32 to vector<1x256xi32>
    %175 = arith.cmpi slt, %15, %174 : vector<1x256xi32>
    %176 = arith.andi %173, %175 : vector<1x256xi1>
    %c14_i32_53 = arith.constant 14 : i32
    %177 = tpu.dynamic_rotate %21 by %c14_i32_53 dim 1 : vector<4x256xf32>, i32 -> vector<4x256xf32>
    %c0_54 = arith.constant 0 : index
    %c9 = arith.constant 9 : index
    %178 = vector.load %arg5[%c0_54, %c9] : memref<4x25xf32, #tpu.memory_space<vmem>>, vector<4x1xf32>
    %cst_55 = arith.constant 0.000000e+00 : f32
    %179 = vector.shape_cast %176 : vector<1x256xi1> to vector<1x256xi1>
    %180 = vector.broadcast %179 : vector<1x256xi1> to vector<4x256xi1>
    %181 = vector.broadcast %cst_55 : f32 to vector<4x256xf32>
    %182 = arith.select %180, %177, %181 : vector<4x256xi1>, vector<4x256xf32>
    %183 = vector.broadcast %178 : vector<4x1xf32> to vector<4x256xf32>
    %184 = arith.mulf %183, %182 : vector<4x256xf32>
    %185 = arith.addf %170, %184 : vector<4x256xf32>
    %c0_i32_56 = arith.constant 0 : i32
    %186 = vector.broadcast %c0_i32_56 : i32 to vector<1x256xi32>
    %187 = arith.cmpi sge, %14, %186 : vector<1x256xi32>
    %c16_i32_57 = arith.constant 16 : i32
    %188 = vector.broadcast %c16_i32_57 : i32 to vector<1x256xi32>
    %189 = arith.cmpi slt, %14, %188 : vector<1x256xi32>
    %190 = arith.andi %187, %189 : vector<1x256xi1>
    %c2_i32_58 = arith.constant 2 : i32
    %191 = vector.broadcast %c2_i32_58 : i32 to vector<1x256xi32>
    %192 = arith.cmpi sge, %15, %191 : vector<1x256xi32>
    %193 = arith.andi %190, %192 : vector<1x256xi1>
    %c18_i32_59 = arith.constant 18 : i32
    %194 = vector.broadcast %c18_i32_59 : i32 to vector<1x256xi32>
    %195 = arith.cmpi slt, %15, %194 : vector<1x256xi32>
    %196 = arith.andi %193, %195 : vector<1x256xi1>
    %c2_i32_60 = arith.constant 2 : i32
    %197 = tpu.dynamic_rotate %21 by %c2_i32_60 dim 1 : vector<4x256xf32>, i32 -> vector<4x256xf32>
    %c0_61 = arith.constant 0 : index
    %c10 = arith.constant 10 : index
    %198 = vector.load %arg5[%c0_61, %c10] : memref<4x25xf32, #tpu.memory_space<vmem>>, vector<4x1xf32>
    %cst_62 = arith.constant 0.000000e+00 : f32
    %199 = vector.shape_cast %196 : vector<1x256xi1> to vector<1x256xi1>
    %200 = vector.broadcast %199 : vector<1x256xi1> to vector<4x256xi1>
    %201 = vector.broadcast %cst_62 : f32 to vector<4x256xf32>
    %202 = arith.select %200, %197, %201 : vector<4x256xi1>, vector<4x256xf32>
    %203 = vector.broadcast %198 : vector<4x1xf32> to vector<4x256xf32>
    %204 = arith.mulf %203, %202 : vector<4x256xf32>
    %205 = arith.addf %185, %204 : vector<4x256xf32>
    %c1_i32_63 = arith.constant 1 : i32
    %206 = vector.broadcast %c1_i32_63 : i32 to vector<1x256xi32>
    %207 = arith.cmpi sge, %15, %206 : vector<1x256xi32>
    %208 = arith.andi %190, %207 : vector<1x256xi1>
    %c17_i32_64 = arith.constant 17 : i32
    %209 = vector.broadcast %c17_i32_64 : i32 to vector<1x256xi32>
    %210 = arith.cmpi slt, %15, %209 : vector<1x256xi32>
    %211 = arith.andi %208, %210 : vector<1x256xi1>
    %c1_i32_65 = arith.constant 1 : i32
    %212 = tpu.dynamic_rotate %21 by %c1_i32_65 dim 1 : vector<4x256xf32>, i32 -> vector<4x256xf32>
    %c0_66 = arith.constant 0 : index
    %c11 = arith.constant 11 : index
    %213 = vector.load %arg5[%c0_66, %c11] : memref<4x25xf32, #tpu.memory_space<vmem>>, vector<4x1xf32>
    %cst_67 = arith.constant 0.000000e+00 : f32
    %214 = vector.shape_cast %211 : vector<1x256xi1> to vector<1x256xi1>
    %215 = vector.broadcast %214 : vector<1x256xi1> to vector<4x256xi1>
    %216 = vector.broadcast %cst_67 : f32 to vector<4x256xf32>
    %217 = arith.select %215, %212, %216 : vector<4x256xi1>, vector<4x256xf32>
    %218 = vector.broadcast %213 : vector<4x1xf32> to vector<4x256xf32>
    %219 = arith.mulf %218, %217 : vector<4x256xf32>
    %220 = arith.addf %205, %219 : vector<4x256xf32>
    %c0_i32_68 = arith.constant 0 : i32
    %221 = vector.broadcast %c0_i32_68 : i32 to vector<1x256xi32>
    %222 = arith.cmpi sge, %15, %221 : vector<1x256xi32>
    %223 = arith.andi %190, %222 : vector<1x256xi1>
    %c16_i32_69 = arith.constant 16 : i32
    %224 = vector.broadcast %c16_i32_69 : i32 to vector<1x256xi32>
    %225 = arith.cmpi slt, %15, %224 : vector<1x256xi32>
    %226 = arith.andi %223, %225 : vector<1x256xi1>
    %c0_70 = arith.constant 0 : index
    %c12 = arith.constant 12 : index
    %227 = vector.load %arg5[%c0_70, %c12] : memref<4x25xf32, #tpu.memory_space<vmem>>, vector<4x1xf32>
    %cst_71 = arith.constant 0.000000e+00 : f32
    %228 = vector.shape_cast %226 : vector<1x256xi1> to vector<1x256xi1>
    %229 = vector.broadcast %228 : vector<1x256xi1> to vector<4x256xi1>
    %230 = vector.broadcast %cst_71 : f32 to vector<4x256xf32>
    %231 = arith.select %229, %21, %230 : vector<4x256xi1>, vector<4x256xf32>
    %232 = vector.broadcast %227 : vector<4x1xf32> to vector<4x256xf32>
    %233 = arith.mulf %232, %231 : vector<4x256xf32>
    %234 = arith.addf %220, %233 : vector<4x256xf32>
    %c-1_i32_72 = arith.constant -1 : i32
    %235 = vector.broadcast %c-1_i32_72 : i32 to vector<1x256xi32>
    %236 = arith.cmpi sge, %15, %235 : vector<1x256xi32>
    %237 = arith.andi %190, %236 : vector<1x256xi1>
    %c15_i32_73 = arith.constant 15 : i32
    %238 = vector.broadcast %c15_i32_73 : i32 to vector<1x256xi32>
    %239 = arith.cmpi slt, %15, %238 : vector<1x256xi32>
    %240 = arith.andi %237, %239 : vector<1x256xi1>
    %c255_i32 = arith.constant 255 : i32
    %241 = tpu.dynamic_rotate %21 by %c255_i32 dim 1 : vector<4x256xf32>, i32 -> vector<4x256xf32>
    %c0_74 = arith.constant 0 : index
    %c13 = arith.constant 13 : index
    %242 = vector.load %arg5[%c0_74, %c13] : memref<4x25xf32, #tpu.memory_space<vmem>>, vector<4x1xf32>
    %cst_75 = arith.constant 0.000000e+00 : f32
    %243 = vector.shape_cast %240 : vector<1x256xi1> to vector<1x256xi1>
    %244 = vector.broadcast %243 : vector<1x256xi1> to vector<4x256xi1>
    %245 = vector.broadcast %cst_75 : f32 to vector<4x256xf32>
    %246 = arith.select %244, %241, %245 : vector<4x256xi1>, vector<4x256xf32>
    %247 = vector.broadcast %242 : vector<4x1xf32> to vector<4x256xf32>
    %248 = arith.mulf %247, %246 : vector<4x256xf32>
    %249 = arith.addf %234, %248 : vector<4x256xf32>
    %c-2_i32_76 = arith.constant -2 : i32
    %250 = vector.broadcast %c-2_i32_76 : i32 to vector<1x256xi32>
    %251 = arith.cmpi sge, %15, %250 : vector<1x256xi32>
    %252 = arith.andi %190, %251 : vector<1x256xi1>
    %c14_i32_77 = arith.constant 14 : i32
    %253 = vector.broadcast %c14_i32_77 : i32 to vector<1x256xi32>
    %254 = arith.cmpi slt, %15, %253 : vector<1x256xi32>
    %255 = arith.andi %252, %254 : vector<1x256xi1>
    %c254_i32 = arith.constant 254 : i32
    %256 = tpu.dynamic_rotate %21 by %c254_i32 dim 1 : vector<4x256xf32>, i32 -> vector<4x256xf32>
    %c0_78 = arith.constant 0 : index
    %c14 = arith.constant 14 : index
    %257 = vector.load %arg5[%c0_78, %c14] : memref<4x25xf32, #tpu.memory_space<vmem>>, vector<4x1xf32>
    %cst_79 = arith.constant 0.000000e+00 : f32
    %258 = vector.shape_cast %255 : vector<1x256xi1> to vector<1x256xi1>
    %259 = vector.broadcast %258 : vector<1x256xi1> to vector<4x256xi1>
    %260 = vector.broadcast %cst_79 : f32 to vector<4x256xf32>
    %261 = arith.select %259, %256, %260 : vector<4x256xi1>, vector<4x256xf32>
    %262 = vector.broadcast %257 : vector<4x1xf32> to vector<4x256xf32>
    %263 = arith.mulf %262, %261 : vector<4x256xf32>
    %264 = arith.addf %249, %263 : vector<4x256xf32>
    %c-1_i32_80 = arith.constant -1 : i32
    %265 = vector.broadcast %c-1_i32_80 : i32 to vector<1x256xi32>
    %266 = arith.cmpi sge, %14, %265 : vector<1x256xi32>
    %c15_i32_81 = arith.constant 15 : i32
    %267 = vector.broadcast %c15_i32_81 : i32 to vector<1x256xi32>
    %268 = arith.cmpi slt, %14, %267 : vector<1x256xi32>
    %269 = arith.andi %266, %268 : vector<1x256xi1>
    %c2_i32_82 = arith.constant 2 : i32
    %270 = vector.broadcast %c2_i32_82 : i32 to vector<1x256xi32>
    %271 = arith.cmpi sge, %15, %270 : vector<1x256xi32>
    %272 = arith.andi %269, %271 : vector<1x256xi1>
    %c18_i32_83 = arith.constant 18 : i32
    %273 = vector.broadcast %c18_i32_83 : i32 to vector<1x256xi32>
    %274 = arith.cmpi slt, %15, %273 : vector<1x256xi32>
    %275 = arith.andi %272, %274 : vector<1x256xi1>
    %c242_i32 = arith.constant 242 : i32
    %276 = tpu.dynamic_rotate %21 by %c242_i32 dim 1 : vector<4x256xf32>, i32 -> vector<4x256xf32>
    %c0_84 = arith.constant 0 : index
    %c15 = arith.constant 15 : index
    %277 = vector.load %arg5[%c0_84, %c15] : memref<4x25xf32, #tpu.memory_space<vmem>>, vector<4x1xf32>
    %cst_85 = arith.constant 0.000000e+00 : f32
    %278 = vector.shape_cast %275 : vector<1x256xi1> to vector<1x256xi1>
    %279 = vector.broadcast %278 : vector<1x256xi1> to vector<4x256xi1>
    %280 = vector.broadcast %cst_85 : f32 to vector<4x256xf32>
    %281 = arith.select %279, %276, %280 : vector<4x256xi1>, vector<4x256xf32>
    %282 = vector.broadcast %277 : vector<4x1xf32> to vector<4x256xf32>
    %283 = arith.mulf %282, %281 : vector<4x256xf32>
    %284 = arith.addf %264, %283 : vector<4x256xf32>
    %c1_i32_86 = arith.constant 1 : i32
    %285 = vector.broadcast %c1_i32_86 : i32 to vector<1x256xi32>
    %286 = arith.cmpi sge, %15, %285 : vector<1x256xi32>
    %287 = arith.andi %269, %286 : vector<1x256xi1>
    %c17_i32_87 = arith.constant 17 : i32
    %288 = vector.broadcast %c17_i32_87 : i32 to vector<1x256xi32>
    %289 = arith.cmpi slt, %15, %288 : vector<1x256xi32>
    %290 = arith.andi %287, %289 : vector<1x256xi1>
    %c241_i32 = arith.constant 241 : i32
    %291 = tpu.dynamic_rotate %21 by %c241_i32 dim 1 : vector<4x256xf32>, i32 -> vector<4x256xf32>
    %c0_88 = arith.constant 0 : index
    %c16 = arith.constant 16 : index
    %292 = vector.load %arg5[%c0_88, %c16] : memref<4x25xf32, #tpu.memory_space<vmem>>, vector<4x1xf32>
    %cst_89 = arith.constant 0.000000e+00 : f32
    %293 = vector.shape_cast %290 : vector<1x256xi1> to vector<1x256xi1>
    %294 = vector.broadcast %293 : vector<1x256xi1> to vector<4x256xi1>
    %295 = vector.broadcast %cst_89 : f32 to vector<4x256xf32>
    %296 = arith.select %294, %291, %295 : vector<4x256xi1>, vector<4x256xf32>
    %297 = vector.broadcast %292 : vector<4x1xf32> to vector<4x256xf32>
    %298 = arith.mulf %297, %296 : vector<4x256xf32>
    %299 = arith.addf %284, %298 : vector<4x256xf32>
    %c0_i32_90 = arith.constant 0 : i32
    %300 = vector.broadcast %c0_i32_90 : i32 to vector<1x256xi32>
    %301 = arith.cmpi sge, %15, %300 : vector<1x256xi32>
    %302 = arith.andi %269, %301 : vector<1x256xi1>
    %c16_i32_91 = arith.constant 16 : i32
    %303 = vector.broadcast %c16_i32_91 : i32 to vector<1x256xi32>
    %304 = arith.cmpi slt, %15, %303 : vector<1x256xi32>
    %305 = arith.andi %302, %304 : vector<1x256xi1>
    %c240_i32 = arith.constant 240 : i32
    %306 = tpu.dynamic_rotate %21 by %c240_i32 dim 1 : vector<4x256xf32>, i32 -> vector<4x256xf32>
    %c0_92 = arith.constant 0 : index
    %c17 = arith.constant 17 : index
    %307 = vector.load %arg5[%c0_92, %c17] : memref<4x25xf32, #tpu.memory_space<vmem>>, vector<4x1xf32>
    %cst_93 = arith.constant 0.000000e+00 : f32
    %308 = vector.shape_cast %305 : vector<1x256xi1> to vector<1x256xi1>
    %309 = vector.broadcast %308 : vector<1x256xi1> to vector<4x256xi1>
    %310 = vector.broadcast %cst_93 : f32 to vector<4x256xf32>
    %311 = arith.select %309, %306, %310 : vector<4x256xi1>, vector<4x256xf32>
    %312 = vector.broadcast %307 : vector<4x1xf32> to vector<4x256xf32>
    %313 = arith.mulf %312, %311 : vector<4x256xf32>
    %314 = arith.addf %299, %313 : vector<4x256xf32>
    %c-1_i32_94 = arith.constant -1 : i32
    %315 = vector.broadcast %c-1_i32_94 : i32 to vector<1x256xi32>
    %316 = arith.cmpi sge, %15, %315 : vector<1x256xi32>
    %317 = arith.andi %269, %316 : vector<1x256xi1>
    %c15_i32_95 = arith.constant 15 : i32
    %318 = vector.broadcast %c15_i32_95 : i32 to vector<1x256xi32>
    %319 = arith.cmpi slt, %15, %318 : vector<1x256xi32>
    %320 = arith.andi %317, %319 : vector<1x256xi1>
    %c239_i32 = arith.constant 239 : i32
    %321 = tpu.dynamic_rotate %21 by %c239_i32 dim 1 : vector<4x256xf32>, i32 -> vector<4x256xf32>
    %c0_96 = arith.constant 0 : index
    %c18 = arith.constant 18 : index
    %322 = vector.load %arg5[%c0_96, %c18] : memref<4x25xf32, #tpu.memory_space<vmem>>, vector<4x1xf32>
    %cst_97 = arith.constant 0.000000e+00 : f32
    %323 = vector.shape_cast %320 : vector<1x256xi1> to vector<1x256xi1>
    %324 = vector.broadcast %323 : vector<1x256xi1> to vector<4x256xi1>
    %325 = vector.broadcast %cst_97 : f32 to vector<4x256xf32>
    %326 = arith.select %324, %321, %325 : vector<4x256xi1>, vector<4x256xf32>
    %327 = vector.broadcast %322 : vector<4x1xf32> to vector<4x256xf32>
    %328 = arith.mulf %327, %326 : vector<4x256xf32>
    %329 = arith.addf %314, %328 : vector<4x256xf32>
    %c-2_i32_98 = arith.constant -2 : i32
    %330 = vector.broadcast %c-2_i32_98 : i32 to vector<1x256xi32>
    %331 = arith.cmpi sge, %15, %330 : vector<1x256xi32>
    %332 = arith.andi %269, %331 : vector<1x256xi1>
    %c14_i32_99 = arith.constant 14 : i32
    %333 = vector.broadcast %c14_i32_99 : i32 to vector<1x256xi32>
    %334 = arith.cmpi slt, %15, %333 : vector<1x256xi32>
    %335 = arith.andi %332, %334 : vector<1x256xi1>
    %c238_i32 = arith.constant 238 : i32
    %336 = tpu.dynamic_rotate %21 by %c238_i32 dim 1 : vector<4x256xf32>, i32 -> vector<4x256xf32>
    %c0_100 = arith.constant 0 : index
    %c19 = arith.constant 19 : index
    %337 = vector.load %arg5[%c0_100, %c19] : memref<4x25xf32, #tpu.memory_space<vmem>>, vector<4x1xf32>
    %cst_101 = arith.constant 0.000000e+00 : f32
    %338 = vector.shape_cast %335 : vector<1x256xi1> to vector<1x256xi1>
    %339 = vector.broadcast %338 : vector<1x256xi1> to vector<4x256xi1>
    %340 = vector.broadcast %cst_101 : f32 to vector<4x256xf32>
    %341 = arith.select %339, %336, %340 : vector<4x256xi1>, vector<4x256xf32>
    %342 = vector.broadcast %337 : vector<4x1xf32> to vector<4x256xf32>
    %343 = arith.mulf %342, %341 : vector<4x256xf32>
    %344 = arith.addf %329, %343 : vector<4x256xf32>
    %c-2_i32_102 = arith.constant -2 : i32
    %345 = vector.broadcast %c-2_i32_102 : i32 to vector<1x256xi32>
    %346 = arith.cmpi sge, %14, %345 : vector<1x256xi32>
    %c14_i32_103 = arith.constant 14 : i32
    %347 = vector.broadcast %c14_i32_103 : i32 to vector<1x256xi32>
    %348 = arith.cmpi slt, %14, %347 : vector<1x256xi32>
    %349 = arith.andi %346, %348 : vector<1x256xi1>
    %c2_i32_104 = arith.constant 2 : i32
    %350 = vector.broadcast %c2_i32_104 : i32 to vector<1x256xi32>
    %351 = arith.cmpi sge, %15, %350 : vector<1x256xi32>
    %352 = arith.andi %349, %351 : vector<1x256xi1>
    %c18_i32_105 = arith.constant 18 : i32
    %353 = vector.broadcast %c18_i32_105 : i32 to vector<1x256xi32>
    %354 = arith.cmpi slt, %15, %353 : vector<1x256xi32>
    %355 = arith.andi %352, %354 : vector<1x256xi1>
    %c226_i32 = arith.constant 226 : i32
    %356 = tpu.dynamic_rotate %21 by %c226_i32 dim 1 : vector<4x256xf32>, i32 -> vector<4x256xf32>
    %c0_106 = arith.constant 0 : index
    %c20 = arith.constant 20 : index
    %357 = vector.load %arg5[%c0_106, %c20] : memref<4x25xf32, #tpu.memory_space<vmem>>, vector<4x1xf32>
    %cst_107 = arith.constant 0.000000e+00 : f32
    %358 = vector.shape_cast %355 : vector<1x256xi1> to vector<1x256xi1>
    %359 = vector.broadcast %358 : vector<1x256xi1> to vector<4x256xi1>
    %360 = vector.broadcast %cst_107 : f32 to vector<4x256xf32>
    %361 = arith.select %359, %356, %360 : vector<4x256xi1>, vector<4x256xf32>
    %362 = vector.broadcast %357 : vector<4x1xf32> to vector<4x256xf32>
    %363 = arith.mulf %362, %361 : vector<4x256xf32>
    %364 = arith.addf %344, %363 : vector<4x256xf32>
    %c1_i32_108 = arith.constant 1 : i32
    %365 = vector.broadcast %c1_i32_108 : i32 to vector<1x256xi32>
    %366 = arith.cmpi sge, %15, %365 : vector<1x256xi32>
    %367 = arith.andi %349, %366 : vector<1x256xi1>
    %c17_i32_109 = arith.constant 17 : i32
    %368 = vector.broadcast %c17_i32_109 : i32 to vector<1x256xi32>
    %369 = arith.cmpi slt, %15, %368 : vector<1x256xi32>
    %370 = arith.andi %367, %369 : vector<1x256xi1>
    %c225_i32 = arith.constant 225 : i32
    %371 = tpu.dynamic_rotate %21 by %c225_i32 dim 1 : vector<4x256xf32>, i32 -> vector<4x256xf32>
    %c0_110 = arith.constant 0 : index
    %c21 = arith.constant 21 : index
    %372 = vector.load %arg5[%c0_110, %c21] : memref<4x25xf32, #tpu.memory_space<vmem>>, vector<4x1xf32>
    %cst_111 = arith.constant 0.000000e+00 : f32
    %373 = vector.shape_cast %370 : vector<1x256xi1> to vector<1x256xi1>
    %374 = vector.broadcast %373 : vector<1x256xi1> to vector<4x256xi1>
    %375 = vector.broadcast %cst_111 : f32 to vector<4x256xf32>
    %376 = arith.select %374, %371, %375 : vector<4x256xi1>, vector<4x256xf32>
    %377 = vector.broadcast %372 : vector<4x1xf32> to vector<4x256xf32>
    %378 = arith.mulf %377, %376 : vector<4x256xf32>
    %379 = arith.addf %364, %378 : vector<4x256xf32>
    %c0_i32_112 = arith.constant 0 : i32
    %380 = vector.broadcast %c0_i32_112 : i32 to vector<1x256xi32>
    %381 = arith.cmpi sge, %15, %380 : vector<1x256xi32>
    %382 = arith.andi %349, %381 : vector<1x256xi1>
    %c16_i32_113 = arith.constant 16 : i32
    %383 = vector.broadcast %c16_i32_113 : i32 to vector<1x256xi32>
    %384 = arith.cmpi slt, %15, %383 : vector<1x256xi32>
    %385 = arith.andi %382, %384 : vector<1x256xi1>
    %c224_i32 = arith.constant 224 : i32
    %386 = tpu.dynamic_rotate %21 by %c224_i32 dim 1 : vector<4x256xf32>, i32 -> vector<4x256xf32>
    %c0_114 = arith.constant 0 : index
    %c22 = arith.constant 22 : index
    %387 = vector.load %arg5[%c0_114, %c22] : memref<4x25xf32, #tpu.memory_space<vmem>>, vector<4x1xf32>
    %cst_115 = arith.constant 0.000000e+00 : f32
    %388 = vector.shape_cast %385 : vector<1x256xi1> to vector<1x256xi1>
    %389 = vector.broadcast %388 : vector<1x256xi1> to vector<4x256xi1>
    %390 = vector.broadcast %cst_115 : f32 to vector<4x256xf32>
    %391 = arith.select %389, %386, %390 : vector<4x256xi1>, vector<4x256xf32>
    %392 = vector.broadcast %387 : vector<4x1xf32> to vector<4x256xf32>
    %393 = arith.mulf %392, %391 : vector<4x256xf32>
    %394 = arith.addf %379, %393 : vector<4x256xf32>
    %c-1_i32_116 = arith.constant -1 : i32
    %395 = vector.broadcast %c-1_i32_116 : i32 to vector<1x256xi32>
    %396 = arith.cmpi sge, %15, %395 : vector<1x256xi32>
    %397 = arith.andi %349, %396 : vector<1x256xi1>
    %c15_i32_117 = arith.constant 15 : i32
    %398 = vector.broadcast %c15_i32_117 : i32 to vector<1x256xi32>
    %399 = arith.cmpi slt, %15, %398 : vector<1x256xi32>
    %400 = arith.andi %397, %399 : vector<1x256xi1>
    %c223_i32 = arith.constant 223 : i32
    %401 = tpu.dynamic_rotate %21 by %c223_i32 dim 1 : vector<4x256xf32>, i32 -> vector<4x256xf32>
    %c0_118 = arith.constant 0 : index
    %c23 = arith.constant 23 : index
    %402 = vector.load %arg5[%c0_118, %c23] : memref<4x25xf32, #tpu.memory_space<vmem>>, vector<4x1xf32>
    %cst_119 = arith.constant 0.000000e+00 : f32
    %403 = vector.shape_cast %400 : vector<1x256xi1> to vector<1x256xi1>
    %404 = vector.broadcast %403 : vector<1x256xi1> to vector<4x256xi1>
    %405 = vector.broadcast %cst_119 : f32 to vector<4x256xf32>
    %406 = arith.select %404, %401, %405 : vector<4x256xi1>, vector<4x256xf32>
    %407 = vector.broadcast %402 : vector<4x1xf32> to vector<4x256xf32>
    %408 = arith.mulf %407, %406 : vector<4x256xf32>
    %409 = arith.addf %394, %408 : vector<4x256xf32>
    %c-2_i32_120 = arith.constant -2 : i32
    %410 = vector.broadcast %c-2_i32_120 : i32 to vector<1x256xi32>
    %411 = arith.cmpi sge, %15, %410 : vector<1x256xi32>
    %412 = arith.andi %349, %411 : vector<1x256xi1>
    %c14_i32_121 = arith.constant 14 : i32
    %413 = vector.broadcast %c14_i32_121 : i32 to vector<1x256xi32>
    %414 = arith.cmpi slt, %15, %413 : vector<1x256xi32>
    %415 = arith.andi %412, %414 : vector<1x256xi1>
    %c222_i32 = arith.constant 222 : i32
    %416 = tpu.dynamic_rotate %21 by %c222_i32 dim 1 : vector<4x256xf32>, i32 -> vector<4x256xf32>
    %c0_122 = arith.constant 0 : index
    %c24 = arith.constant 24 : index
    %417 = vector.load %arg5[%c0_122, %c24] : memref<4x25xf32, #tpu.memory_space<vmem>>, vector<4x1xf32>
    %cst_123 = arith.constant 0.000000e+00 : f32
    %418 = vector.shape_cast %415 : vector<1x256xi1> to vector<1x256xi1>
    %419 = vector.broadcast %418 : vector<1x256xi1> to vector<4x256xi1>
    %420 = vector.broadcast %cst_123 : f32 to vector<4x256xf32>
    %421 = arith.select %419, %416, %420 : vector<4x256xi1>, vector<4x256xf32>
    %422 = vector.broadcast %417 : vector<4x1xf32> to vector<4x256xf32>
    %423 = arith.mulf %422, %421 : vector<4x256xf32>
    %424 = arith.addf %409, %423 : vector<4x256xf32>
    %cst_124 = arith.constant 0.000000e+00 : f32
    %425 = vector.shape_cast %17 : vector<1x256xi1> to vector<1x256xi1>
    %426 = vector.broadcast %425 : vector<1x256xi1> to vector<4x256xi1>
    %427 = vector.broadcast %cst_124 : f32 to vector<4x256xf32>
    %428 = arith.select %426, %424, %427 : vector<4x256xi1>, vector<4x256xf32>
    %c0_125 = arith.constant 0 : index
    %c0_126 = arith.constant 0 : index
    %c0_127 = arith.constant 0 : index
    %429 = vector.load %arg9[%c0_125, %c0_126, %c0_127] : memref<1x4x256xf32, #tpu.memory_space<vmem>>, vector<1x4x256xf32>
    %430 = vector.shape_cast %429 : vector<1x4x256xf32> to vector<4x256xf32>
    %431 = vector.shape_cast %428 : vector<4x256xf32> to vector<1x4x256xf32>
    tpu.vector_store %arg9[%c0_125, %c0_126, %c0_127], %431 {strides = array<i32>} : memref<1x4x256xf32, #tpu.memory_space<vmem>>, vector<1x4x256xf32>,
    %cst_128 = arith.constant dense<0.000000e+00> : vector<4xf32>
    %432 = vector.multi_reduction <add>, %428, %cst_128 [1] : vector<4x256xf32> to vector<4xf32>
    %433 = vector.shape_cast %432 : vector<4xf32> to vector<4x1xf32>
    %434 = arith.mulf %428, %428 : vector<4x256xf32>
    %cst_129 = arith.constant dense<0.000000e+00> : vector<4xf32>
    %435 = vector.multi_reduction <add>, %434, %cst_129 [1] : vector<4x256xf32> to vector<4xf32>
    %436 = vector.shape_cast %435 : vector<4xf32> to vector<4x1xf32>
    %437 = tpu.concatenate %433, %436 in 1 : vector<4x1xf32>, vector<4x1xf32> -> vector<4x2xf32>
    %c0_130 = arith.constant 0 : index
    %c0_131 = arith.constant 0 : index
    %c0_132 = arith.constant 0 : index
    %c0_133 = arith.constant 0 : index
    %438 = vector.load %arg10[%c0_130, %c0_131, %c0_132, %c0_133] : memref<1x1x4x2xf32, #tpu.memory_space<vmem>>, vector<1x1x4x2xf32>
    %439 = vector.shape_cast %438 : vector<1x1x4x2xf32> to vector<4x2xf32>
    %440 = vector.shape_cast %437 : vector<4x2xf32> to vector<1x1x4x2xf32>
    tpu.vector_store %arg10[%c0_130, %c0_131, %c0_132, %c0_133], %440 {strides = array<i32>} : memref<1x1x4x2xf32, #tpu.memory_space<vmem>>, vector<1x1x4x2xf32>,
    return
  }
  func.func @transform_0(%arg0: i32, %arg1: i32) -> (i32, i32, i32) {
    %c0_i32 = arith.constant 0 : i32
    %c0_i32_0 = arith.constant 0 : i32
    return %arg0, %arg1, %c0_i32 : i32, i32, i32
  }
  func.func @transform_1(%arg0: i32, %arg1: i32) -> (i32, i32) {
    %c0_i32 = arith.constant 0 : i32
    %c0_i32_0 = arith.constant 0 : i32
    return %arg1, %c0_i32 : i32, i32
  }
  func.func @transform_2(%arg0: i32, %arg1: i32) -> (i32, i32) {
    %c0_i32 = arith.constant 0 : i32
    %c0_i32_0 = arith.constant 0 : i32
    return %arg1, %c0_i32 : i32, i32
  }
  func.func @transform_3(%arg0: i32, %arg1: i32) -> (i32, i32) {
    %c0_i32 = arith.constant 0 : i32
    %c0_i32_0 = arith.constant 0 : i32
    return %arg1, %c0_i32 : i32, i32
  }
  func.func @transform_4(%arg0: i32, %arg1: i32) -> (i32, i32) {
    %c0_i32 = arith.constant 0 : i32
    %c0_i32_0 = arith.constant 0 : i32
    %c0_i32_1 = arith.constant 0 : i32
    return %c0_i32, %c0_i32_0 : i32, i32
  }
  func.func @transform_5(%arg0: i32, %arg1: i32) -> (i32, i32) {
    %c0_i32 = arith.constant 0 : i32
    %c0_i32_0 = arith.constant 0 : i32
    %c0_i32_1 = arith.constant 0 : i32
    return %c0_i32, %c0_i32_0 : i32, i32
  }
  func.func @transform_6(%arg0: i32, %arg1: i32) -> (i32, i32, i32) {
    %c0_i32 = arith.constant 0 : i32
    %c0_i32_0 = arith.constant 0 : i32
    return %arg0, %arg1, %c0_i32 : i32, i32, i32
  }
  func.func @transform_7(%arg0: i32, %arg1: i32) -> (i32, i32, i32) {
    %c0_i32 = arith.constant 0 : i32
    %c0_i32_0 = arith.constant 0 : i32
    return %arg0, %arg1, %c0_i32 : i32, i32, i32
  }
  func.func @transform_8(%arg0: i32, %arg1: i32) -> (i32, i32, i32, i32) {
    %c0_i32 = arith.constant 0 : i32
    %c0_i32_0 = arith.constant 0 : i32
    %c0_i32_1 = arith.constant 0 : i32
    return %arg0, %arg1, %c0_i32, %c0_i32_0 : i32, i32, i32, i32
  }
}

module attributes {stable_mosaic.version = 11 : i64} {
  func.func @_pw_conv_ghost_kernel(%arg0: i32, %arg1: i32, %arg2: memref<1x4x256xf32, #tpu.memory_space<vmem>>, %arg3: memref<1x4x256xf32, #tpu.memory_space<vmem>>, %arg4: memref<1x256xf32, #tpu.memory_space<vmem>>, %arg5: memref<4x1xf32, #tpu.memory_space<vmem>>, %arg6: memref<4x1xf32, #tpu.memory_space<vmem>>, %arg7: memref<8x4xf32, #tpu.memory_space<vmem>>, %arg8: memref<8x4xf32, #tpu.memory_space<vmem>>, %arg9: memref<1x8x256xf32, #tpu.memory_space<vmem>>, %arg10: memref<1x1x8x2xf32, #tpu.memory_space<vmem>>) attributes {dimension_semantics = [#tpu.dimension_semantics<parallel>, #tpu.dimension_semantics<parallel>], iteration_bounds = array<i64: 2, 1>, scalar_prefetch = 0 : i64, scratch_operands = 0 : i64, tpu.core_type = #tpu.core_type<tc>, window_params = [{transform_indices = @transform_0, window_bounds = array<i64: 1, 4, 256>}, {transform_indices = @transform_1, window_bounds = array<i64: 1, 4, 256>}, {transform_indices = @transform_2, window_bounds = array<i64: 1, 256>}, {pipeline_mode = #tpu.pipeline_mode<synchronous>, transform_indices = @transform_3, window_bounds = array<i64: 4, 1>}, {pipeline_mode = #tpu.pipeline_mode<synchronous>, transform_indices = @transform_4, window_bounds = array<i64: 4, 1>}, {pipeline_mode = #tpu.pipeline_mode<synchronous>, transform_indices = @transform_5, window_bounds = array<i64: 8, 4>}, {pipeline_mode = #tpu.pipeline_mode<synchronous>, transform_indices = @transform_6, window_bounds = array<i64: 8, 4>}, {transform_indices = @transform_7, window_bounds = array<i64: 1, 8, 256>}, {transform_indices = @transform_8, window_bounds = array<i64: 1, 1, 8, 2>}]} {
    %c0 = arith.constant 0 : index
    %c0_0 = arith.constant 0 : index
    %c0_1 = arith.constant 0 : index
    %0 = vector.load %arg2[%c0, %c0_0, %c0_1] : memref<1x4x256xf32, #tpu.memory_space<vmem>>, vector<1x4x256xf32>
    %1 = vector.shape_cast %0 : vector<1x4x256xf32> to vector<4x256xf32>
    %c0_2 = arith.constant 0 : index
    %c0_3 = arith.constant 0 : index
    %c0_4 = arith.constant 0 : index
    %2 = vector.load %arg3[%c0_2, %c0_3, %c0_4] : memref<1x4x256xf32, #tpu.memory_space<vmem>>, vector<1x4x256xf32>
    %3 = vector.shape_cast %2 : vector<1x4x256xf32> to vector<4x256xf32>
    %c0_5 = arith.constant 0 : index
    %c0_6 = arith.constant 0 : index
    %4 = vector.load %arg5[%c0_5, %c0_6] : memref<4x1xf32, #tpu.memory_space<vmem>>, vector<4x1xf32>
    %5 = vector.broadcast %4 : vector<4x1xf32> to vector<4x256xf32>
    %6 = arith.mulf %3, %5 : vector<4x256xf32>
    %c0_7 = arith.constant 0 : index
    %c0_8 = arith.constant 0 : index
    %7 = vector.load %arg6[%c0_7, %c0_8] : memref<4x1xf32, #tpu.memory_space<vmem>>, vector<4x1xf32>
    %8 = vector.broadcast %7 : vector<4x1xf32> to vector<4x256xf32>
    %9 = arith.addf %6, %8 : vector<4x256xf32>
    %10 = arith.negf %9 : vector<4x256xf32>
    %11 = math.exp %10 : vector<4x256xf32>
    %cst = arith.constant 1.000000e+00 : f32
    %12 = vector.broadcast %cst : f32 to vector<4x256xf32>
    %13 = arith.addf %12, %11 : vector<4x256xf32>
    %14 = arith.divf %12, %13 : vector<4x256xf32>
    %15 = arith.mulf %9, %14 : vector<4x256xf32>
    %c0_9 = arith.constant 0 : index
    %c0_10 = arith.constant 0 : index
    %16 = vector.load %arg4[%c0_9, %c0_10] : memref<1x256xf32, #tpu.memory_space<vmem>>, vector<1x256xf32>
    %17 = vector.broadcast %16 : vector<1x256xf32> to vector<4x256xf32>
    %18 = arith.mulf %15, %17 : vector<4x256xf32>
    %c0_11 = arith.constant 0 : index
    %c0_12 = arith.constant 0 : index
    %19 = vector.load %arg7[%c0_11, %c0_12] : memref<8x4xf32, #tpu.memory_space<vmem>>, vector<8x4xf32>
    %cst_13 = arith.constant dense<0.000000e+00> : vector<8x256xf32>
    %20 = tpu.matmul %19, %1, %cst_13 {dimension_numbers = #tpu.dot_dimension_numbers<[1], [0], [0], [1], [0, 0, 1, 1], [], []>} : vector<8x4xf32>, vector<4x256xf32>, vector<8x256xf32> -> vector<8x256xf32>
    %c0_14 = arith.constant 0 : index
    %c0_15 = arith.constant 0 : index
    %21 = vector.load %arg8[%c0_14, %c0_15] : memref<8x4xf32, #tpu.memory_space<vmem>>, vector<8x4xf32>
    %cst_16 = arith.constant dense<0.000000e+00> : vector<8x256xf32>
    %22 = tpu.matmul %21, %18, %cst_16 {dimension_numbers = #tpu.dot_dimension_numbers<[1], [0], [0], [1], [0, 0, 1, 1], [], []>} : vector<8x4xf32>, vector<4x256xf32>, vector<8x256xf32> -> vector<8x256xf32>
    %23 = arith.addf %20, %22 : vector<8x256xf32>
    %c0_17 = arith.constant 0 : index
    %c0_18 = arith.constant 0 : index
    %c0_19 = arith.constant 0 : index
    %24 = vector.load %arg9[%c0_17, %c0_18, %c0_19] : memref<1x8x256xf32, #tpu.memory_space<vmem>>, vector<1x8x256xf32>
    %25 = vector.shape_cast %24 : vector<1x8x256xf32> to vector<8x256xf32>
    %26 = vector.shape_cast %23 : vector<8x256xf32> to vector<1x8x256xf32>
    tpu.vector_store %arg9[%c0_17, %c0_18, %c0_19], %26 {strides = array<i32>} : memref<1x8x256xf32, #tpu.memory_space<vmem>>, vector<1x8x256xf32>,
    %cst_20 = arith.constant dense<0.000000e+00> : vector<8xf32>
    %27 = vector.multi_reduction <add>, %23, %cst_20 [1] : vector<8x256xf32> to vector<8xf32>
    %28 = vector.shape_cast %27 : vector<8xf32> to vector<8x1xf32>
    %29 = arith.mulf %23, %23 : vector<8x256xf32>
    %cst_21 = arith.constant dense<0.000000e+00> : vector<8xf32>
    %30 = vector.multi_reduction <add>, %29, %cst_21 [1] : vector<8x256xf32> to vector<8xf32>
    %31 = vector.shape_cast %30 : vector<8xf32> to vector<8x1xf32>
    %32 = tpu.concatenate %28, %31 in 1 : vector<8x1xf32>, vector<8x1xf32> -> vector<8x2xf32>
    %c0_22 = arith.constant 0 : index
    %c0_23 = arith.constant 0 : index
    %c0_24 = arith.constant 0 : index
    %c0_25 = arith.constant 0 : index
    %33 = vector.load %arg10[%c0_22, %c0_23, %c0_24, %c0_25] : memref<1x1x8x2xf32, #tpu.memory_space<vmem>>, vector<1x1x8x2xf32>
    %34 = vector.shape_cast %33 : vector<1x1x8x2xf32> to vector<8x2xf32>
    %35 = vector.shape_cast %32 : vector<8x2xf32> to vector<1x1x8x2xf32>
    tpu.vector_store %arg10[%c0_22, %c0_23, %c0_24, %c0_25], %35 {strides = array<i32>} : memref<1x1x8x2xf32, #tpu.memory_space<vmem>>, vector<1x1x8x2xf32>,
    return
  }
  func.func @transform_0(%arg0: i32, %arg1: i32) -> (i32, i32, i32) {
    %c0_i32 = arith.constant 0 : i32
    %c0_i32_0 = arith.constant 0 : i32
    return %arg0, %c0_i32, %arg1 : i32, i32, i32
  }
  func.func @transform_1(%arg0: i32, %arg1: i32) -> (i32, i32, i32) {
    %c0_i32 = arith.constant 0 : i32
    %c0_i32_0 = arith.constant 0 : i32
    return %arg0, %c0_i32, %arg1 : i32, i32, i32
  }
  func.func @transform_2(%arg0: i32, %arg1: i32) -> (i32, i32) {
    %c0_i32 = arith.constant 0 : i32
    %c0_i32_0 = arith.constant 0 : i32
    return %c0_i32, %arg1 : i32, i32
  }
  func.func @transform_3(%arg0: i32, %arg1: i32) -> (i32, i32) {
    %c0_i32 = arith.constant 0 : i32
    %c0_i32_0 = arith.constant 0 : i32
    %c0_i32_1 = arith.constant 0 : i32
    return %c0_i32, %c0_i32_0 : i32, i32
  }
  func.func @transform_4(%arg0: i32, %arg1: i32) -> (i32, i32) {
    %c0_i32 = arith.constant 0 : i32
    %c0_i32_0 = arith.constant 0 : i32
    %c0_i32_1 = arith.constant 0 : i32
    return %c0_i32, %c0_i32_0 : i32, i32
  }
  func.func @transform_5(%arg0: i32, %arg1: i32) -> (i32, i32) {
    %c0_i32 = arith.constant 0 : i32
    %c0_i32_0 = arith.constant 0 : i32
    %c0_i32_1 = arith.constant 0 : i32
    return %c0_i32, %c0_i32_0 : i32, i32
  }
  func.func @transform_6(%arg0: i32, %arg1: i32) -> (i32, i32) {
    %c0_i32 = arith.constant 0 : i32
    %c0_i32_0 = arith.constant 0 : i32
    %c0_i32_1 = arith.constant 0 : i32
    return %c0_i32, %c0_i32_0 : i32, i32
  }
  func.func @transform_7(%arg0: i32, %arg1: i32) -> (i32, i32, i32) {
    %c0_i32 = arith.constant 0 : i32
    %c0_i32_0 = arith.constant 0 : i32
    return %arg0, %c0_i32, %arg1 : i32, i32, i32
  }
  func.func @transform_8(%arg0: i32, %arg1: i32) -> (i32, i32, i32, i32) {
    %c0_i32 = arith.constant 0 : i32
    %c0_i32_0 = arith.constant 0 : i32
    %c0_i32_1 = arith.constant 0 : i32
    return %arg0, %arg1, %c0_i32, %c0_i32_0 : i32, i32, i32, i32
  }
}

module attributes {stable_mosaic.version = 11 : i64} {
  func.func @_dw5x5_kernel(%arg0: i32, %arg1: i32, %arg2: memref<1x8x256xf32, #tpu.memory_space<vmem>>, %arg3: memref<8x1xf32, #tpu.memory_space<vmem>>, %arg4: memref<8x1xf32, #tpu.memory_space<vmem>>, %arg5: memref<8x25xf32, #tpu.memory_space<vmem>>, %arg6: memref<1x256xi32, #tpu.memory_space<vmem>>, %arg7: memref<1x256xi32, #tpu.memory_space<vmem>>, %arg8: memref<1x8x256xf32, #tpu.memory_space<vmem>>, %arg9: memref<1x8x256xf32, #tpu.memory_space<vmem>>, %arg10: memref<1x1x8x2xf32, #tpu.memory_space<vmem>>) attributes {dimension_semantics = [#tpu.dimension_semantics<parallel>, #tpu.dimension_semantics<parallel>], iteration_bounds = array<i64: 2, 1>, scalar_prefetch = 0 : i64, scratch_operands = 0 : i64, tpu.core_type = #tpu.core_type<tc>, window_params = [{transform_indices = @transform_0, window_bounds = array<i64: 1, 8, 256>}, {transform_indices = @transform_1, window_bounds = array<i64: 8, 1>}, {transform_indices = @transform_2, window_bounds = array<i64: 8, 1>}, {transform_indices = @transform_3, window_bounds = array<i64: 8, 25>}, {pipeline_mode = #tpu.pipeline_mode<synchronous>, transform_indices = @transform_4, window_bounds = array<i64: 1, 256>}, {pipeline_mode = #tpu.pipeline_mode<synchronous>, transform_indices = @transform_5, window_bounds = array<i64: 1, 256>}, {transform_indices = @transform_6, window_bounds = array<i64: 1, 8, 256>}, {transform_indices = @transform_7, window_bounds = array<i64: 1, 8, 256>}, {transform_indices = @transform_8, window_bounds = array<i64: 1, 1, 8, 2>}]} {
    %c0 = arith.constant 0 : index
    %c0_0 = arith.constant 0 : index
    %c0_1 = arith.constant 0 : index
    %0 = vector.load %arg2[%c0, %c0_0, %c0_1] : memref<1x8x256xf32, #tpu.memory_space<vmem>>, vector<1x8x256xf32>
    %1 = vector.shape_cast %0 : vector<1x8x256xf32> to vector<8x256xf32>
    %c0_2 = arith.constant 0 : index
    %c0_3 = arith.constant 0 : index
    %2 = vector.load %arg3[%c0_2, %c0_3] : memref<8x1xf32, #tpu.memory_space<vmem>>, vector<8x1xf32>
    %3 = vector.broadcast %2 : vector<8x1xf32> to vector<8x256xf32>
    %4 = arith.mulf %1, %3 : vector<8x256xf32>
    %c0_4 = arith.constant 0 : index
    %c0_5 = arith.constant 0 : index
    %5 = vector.load %arg4[%c0_4, %c0_5] : memref<8x1xf32, #tpu.memory_space<vmem>>, vector<8x1xf32>
    %6 = vector.broadcast %5 : vector<8x1xf32> to vector<8x256xf32>
    %7 = arith.addf %4, %6 : vector<8x256xf32>
    %c0_6 = arith.constant 0 : index
    %c0_7 = arith.constant 0 : index
    %8 = vector.load %arg6[%c0_6, %c0_7] : memref<1x256xi32, #tpu.memory_space<vmem>>, vector<1x256xi32>
    %c0_8 = arith.constant 0 : index
    %c0_9 = arith.constant 0 : index
    %9 = vector.load %arg7[%c0_8, %c0_9] : memref<1x256xi32, #tpu.memory_space<vmem>>, vector<1x256xi32>
    %c16_i32 = arith.constant 16 : i32
    %10 = vector.broadcast %c16_i32 : i32 to vector<1x256xi32>
    %11 = arith.cmpi slt, %8, %10 : vector<1x256xi32>
    %cst = arith.constant 0.000000e+00 : f32
    %12 = vector.shape_cast %11 : vector<1x256xi1> to vector<1x256xi1>
    %13 = vector.broadcast %12 : vector<1x256xi1> to vector<8x256xi1>
    %14 = vector.broadcast %cst : f32 to vector<8x256xf32>
    %15 = arith.select %13, %7, %14 : vector<8x256xi1>, vector<8x256xf32>
    %c0_10 = arith.constant 0 : index
    %c0_11 = arith.constant 0 : index
    %c0_12 = arith.constant 0 : index
    %16 = vector.load %arg8[%c0_10, %c0_11, %c0_12] : memref<1x8x256xf32, #tpu.memory_space<vmem>>, vector<1x8x256xf32>
    %17 = vector.shape_cast %16 : vector<1x8x256xf32> to vector<8x256xf32>
    %18 = vector.shape_cast %15 : vector<8x256xf32> to vector<1x8x256xf32>
    tpu.vector_store %arg8[%c0_10, %c0_11, %c0_12], %18 {strides = array<i32>} : memref<1x8x256xf32, #tpu.memory_space<vmem>>, vector<1x8x256xf32>,
    %cst_13 = arith.constant 0.000000e+00 : f32
    %19 = vector.broadcast %cst_13 : f32 to vector<8x256xf32>
    %c2_i32 = arith.constant 2 : i32
    %20 = vector.broadcast %c2_i32 : i32 to vector<1x256xi32>
    %21 = arith.cmpi sge, %8, %20 : vector<1x256xi32>
    %c18_i32 = arith.constant 18 : i32
    %22 = vector.broadcast %c18_i32 : i32 to vector<1x256xi32>
    %23 = arith.cmpi slt, %8, %22 : vector<1x256xi32>
    %24 = arith.andi %21, %23 : vector<1x256xi1>
    %c2_i32_14 = arith.constant 2 : i32
    %25 = vector.broadcast %c2_i32_14 : i32 to vector<1x256xi32>
    %26 = arith.cmpi sge, %9, %25 : vector<1x256xi32>
    %27 = arith.andi %24, %26 : vector<1x256xi1>
    %c18_i32_15 = arith.constant 18 : i32
    %28 = vector.broadcast %c18_i32_15 : i32 to vector<1x256xi32>
    %29 = arith.cmpi slt, %9, %28 : vector<1x256xi32>
    %30 = arith.andi %27, %29 : vector<1x256xi1>
    %c34_i32 = arith.constant 34 : i32
    %31 = tpu.dynamic_rotate %15 by %c34_i32 dim 1 : vector<8x256xf32>, i32 -> vector<8x256xf32>
    %c0_16 = arith.constant 0 : index
    %c0_17 = arith.constant 0 : index
    %32 = vector.load %arg5[%c0_16, %c0_17] : memref<8x25xf32, #tpu.memory_space<vmem>>, vector<8x1xf32>
    %cst_18 = arith.constant 0.000000e+00 : f32
    %33 = vector.shape_cast %30 : vector<1x256xi1> to vector<1x256xi1>
    %34 = vector.broadcast %33 : vector<1x256xi1> to vector<8x256xi1>
    %35 = vector.broadcast %cst_18 : f32 to vector<8x256xf32>
    %36 = arith.select %34, %31, %35 : vector<8x256xi1>, vector<8x256xf32>
    %37 = vector.broadcast %32 : vector<8x1xf32> to vector<8x256xf32>
    %38 = arith.mulf %37, %36 : vector<8x256xf32>
    %39 = arith.addf %19, %38 : vector<8x256xf32>
    %c1_i32 = arith.constant 1 : i32
    %40 = vector.broadcast %c1_i32 : i32 to vector<1x256xi32>
    %41 = arith.cmpi sge, %9, %40 : vector<1x256xi32>
    %42 = arith.andi %24, %41 : vector<1x256xi1>
    %c17_i32 = arith.constant 17 : i32
    %43 = vector.broadcast %c17_i32 : i32 to vector<1x256xi32>
    %44 = arith.cmpi slt, %9, %43 : vector<1x256xi32>
    %45 = arith.andi %42, %44 : vector<1x256xi1>
    %c33_i32 = arith.constant 33 : i32
    %46 = tpu.dynamic_rotate %15 by %c33_i32 dim 1 : vector<8x256xf32>, i32 -> vector<8x256xf32>
    %c0_19 = arith.constant 0 : index
    %c1 = arith.constant 1 : index
    %47 = vector.load %arg5[%c0_19, %c1] : memref<8x25xf32, #tpu.memory_space<vmem>>, vector<8x1xf32>
    %cst_20 = arith.constant 0.000000e+00 : f32
    %48 = vector.shape_cast %45 : vector<1x256xi1> to vector<1x256xi1>
    %49 = vector.broadcast %48 : vector<1x256xi1> to vector<8x256xi1>
    %50 = vector.broadcast %cst_20 : f32 to vector<8x256xf32>
    %51 = arith.select %49, %46, %50 : vector<8x256xi1>, vector<8x256xf32>
    %52 = vector.broadcast %47 : vector<8x1xf32> to vector<8x256xf32>
    %53 = arith.mulf %52, %51 : vector<8x256xf32>
    %54 = arith.addf %39, %53 : vector<8x256xf32>
    %c0_i32 = arith.constant 0 : i32
    %55 = vector.broadcast %c0_i32 : i32 to vector<1x256xi32>
    %56 = arith.cmpi sge, %9, %55 : vector<1x256xi32>
    %57 = arith.andi %24, %56 : vector<1x256xi1>
    %c16_i32_21 = arith.constant 16 : i32
    %58 = vector.broadcast %c16_i32_21 : i32 to vector<1x256xi32>
    %59 = arith.cmpi slt, %9, %58 : vector<1x256xi32>
    %60 = arith.andi %57, %59 : vector<1x256xi1>
    %c32_i32 = arith.constant 32 : i32
    %61 = tpu.dynamic_rotate %15 by %c32_i32 dim 1 : vector<8x256xf32>, i32 -> vector<8x256xf32>
    %c0_22 = arith.constant 0 : index
    %c2 = arith.constant 2 : index
    %62 = vector.load %arg5[%c0_22, %c2] : memref<8x25xf32, #tpu.memory_space<vmem>>, vector<8x1xf32>
    %cst_23 = arith.constant 0.000000e+00 : f32
    %63 = vector.shape_cast %60 : vector<1x256xi1> to vector<1x256xi1>
    %64 = vector.broadcast %63 : vector<1x256xi1> to vector<8x256xi1>
    %65 = vector.broadcast %cst_23 : f32 to vector<8x256xf32>
    %66 = arith.select %64, %61, %65 : vector<8x256xi1>, vector<8x256xf32>
    %67 = vector.broadcast %62 : vector<8x1xf32> to vector<8x256xf32>
    %68 = arith.mulf %67, %66 : vector<8x256xf32>
    %69 = arith.addf %54, %68 : vector<8x256xf32>
    %c-1_i32 = arith.constant -1 : i32
    %70 = vector.broadcast %c-1_i32 : i32 to vector<1x256xi32>
    %71 = arith.cmpi sge, %9, %70 : vector<1x256xi32>
    %72 = arith.andi %24, %71 : vector<1x256xi1>
    %c15_i32 = arith.constant 15 : i32
    %73 = vector.broadcast %c15_i32 : i32 to vector<1x256xi32>
    %74 = arith.cmpi slt, %9, %73 : vector<1x256xi32>
    %75 = arith.andi %72, %74 : vector<1x256xi1>
    %c31_i32 = arith.constant 31 : i32
    %76 = tpu.dynamic_rotate %15 by %c31_i32 dim 1 : vector<8x256xf32>, i32 -> vector<8x256xf32>
    %c0_24 = arith.constant 0 : index
    %c3 = arith.constant 3 : index
    %77 = vector.load %arg5[%c0_24, %c3] : memref<8x25xf32, #tpu.memory_space<vmem>>, vector<8x1xf32>
    %cst_25 = arith.constant 0.000000e+00 : f32
    %78 = vector.shape_cast %75 : vector<1x256xi1> to vector<1x256xi1>
    %79 = vector.broadcast %78 : vector<1x256xi1> to vector<8x256xi1>
    %80 = vector.broadcast %cst_25 : f32 to vector<8x256xf32>
    %81 = arith.select %79, %76, %80 : vector<8x256xi1>, vector<8x256xf32>
    %82 = vector.broadcast %77 : vector<8x1xf32> to vector<8x256xf32>
    %83 = arith.mulf %82, %81 : vector<8x256xf32>
    %84 = arith.addf %69, %83 : vector<8x256xf32>
    %c-2_i32 = arith.constant -2 : i32
    %85 = vector.broadcast %c-2_i32 : i32 to vector<1x256xi32>
    %86 = arith.cmpi sge, %9, %85 : vector<1x256xi32>
    %87 = arith.andi %24, %86 : vector<1x256xi1>
    %c14_i32 = arith.constant 14 : i32
    %88 = vector.broadcast %c14_i32 : i32 to vector<1x256xi32>
    %89 = arith.cmpi slt, %9, %88 : vector<1x256xi32>
    %90 = arith.andi %87, %89 : vector<1x256xi1>
    %c30_i32 = arith.constant 30 : i32
    %91 = tpu.dynamic_rotate %15 by %c30_i32 dim 1 : vector<8x256xf32>, i32 -> vector<8x256xf32>
    %c0_26 = arith.constant 0 : index
    %c4 = arith.constant 4 : index
    %92 = vector.load %arg5[%c0_26, %c4] : memref<8x25xf32, #tpu.memory_space<vmem>>, vector<8x1xf32>
    %cst_27 = arith.constant 0.000000e+00 : f32
    %93 = vector.shape_cast %90 : vector<1x256xi1> to vector<1x256xi1>
    %94 = vector.broadcast %93 : vector<1x256xi1> to vector<8x256xi1>
    %95 = vector.broadcast %cst_27 : f32 to vector<8x256xf32>
    %96 = arith.select %94, %91, %95 : vector<8x256xi1>, vector<8x256xf32>
    %97 = vector.broadcast %92 : vector<8x1xf32> to vector<8x256xf32>
    %98 = arith.mulf %97, %96 : vector<8x256xf32>
    %99 = arith.addf %84, %98 : vector<8x256xf32>
    %c1_i32_28 = arith.constant 1 : i32
    %100 = vector.broadcast %c1_i32_28 : i32 to vector<1x256xi32>
    %101 = arith.cmpi sge, %8, %100 : vector<1x256xi32>
    %c17_i32_29 = arith.constant 17 : i32
    %102 = vector.broadcast %c17_i32_29 : i32 to vector<1x256xi32>
    %103 = arith.cmpi slt, %8, %102 : vector<1x256xi32>
    %104 = arith.andi %101, %103 : vector<1x256xi1>
    %c2_i32_30 = arith.constant 2 : i32
    %105 = vector.broadcast %c2_i32_30 : i32 to vector<1x256xi32>
    %106 = arith.cmpi sge, %9, %105 : vector<1x256xi32>
    %107 = arith.andi %104, %106 : vector<1x256xi1>
    %c18_i32_31 = arith.constant 18 : i32
    %108 = vector.broadcast %c18_i32_31 : i32 to vector<1x256xi32>
    %109 = arith.cmpi slt, %9, %108 : vector<1x256xi32>
    %110 = arith.andi %107, %109 : vector<1x256xi1>
    %c18_i32_32 = arith.constant 18 : i32
    %111 = tpu.dynamic_rotate %15 by %c18_i32_32 dim 1 : vector<8x256xf32>, i32 -> vector<8x256xf32>
    %c0_33 = arith.constant 0 : index
    %c5 = arith.constant 5 : index
    %112 = vector.load %arg5[%c0_33, %c5] : memref<8x25xf32, #tpu.memory_space<vmem>>, vector<8x1xf32>
    %cst_34 = arith.constant 0.000000e+00 : f32
    %113 = vector.shape_cast %110 : vector<1x256xi1> to vector<1x256xi1>
    %114 = vector.broadcast %113 : vector<1x256xi1> to vector<8x256xi1>
    %115 = vector.broadcast %cst_34 : f32 to vector<8x256xf32>
    %116 = arith.select %114, %111, %115 : vector<8x256xi1>, vector<8x256xf32>
    %117 = vector.broadcast %112 : vector<8x1xf32> to vector<8x256xf32>
    %118 = arith.mulf %117, %116 : vector<8x256xf32>
    %119 = arith.addf %99, %118 : vector<8x256xf32>
    %c1_i32_35 = arith.constant 1 : i32
    %120 = vector.broadcast %c1_i32_35 : i32 to vector<1x256xi32>
    %121 = arith.cmpi sge, %9, %120 : vector<1x256xi32>
    %122 = arith.andi %104, %121 : vector<1x256xi1>
    %c17_i32_36 = arith.constant 17 : i32
    %123 = vector.broadcast %c17_i32_36 : i32 to vector<1x256xi32>
    %124 = arith.cmpi slt, %9, %123 : vector<1x256xi32>
    %125 = arith.andi %122, %124 : vector<1x256xi1>
    %c17_i32_37 = arith.constant 17 : i32
    %126 = tpu.dynamic_rotate %15 by %c17_i32_37 dim 1 : vector<8x256xf32>, i32 -> vector<8x256xf32>
    %c0_38 = arith.constant 0 : index
    %c6 = arith.constant 6 : index
    %127 = vector.load %arg5[%c0_38, %c6] : memref<8x25xf32, #tpu.memory_space<vmem>>, vector<8x1xf32>
    %cst_39 = arith.constant 0.000000e+00 : f32
    %128 = vector.shape_cast %125 : vector<1x256xi1> to vector<1x256xi1>
    %129 = vector.broadcast %128 : vector<1x256xi1> to vector<8x256xi1>
    %130 = vector.broadcast %cst_39 : f32 to vector<8x256xf32>
    %131 = arith.select %129, %126, %130 : vector<8x256xi1>, vector<8x256xf32>
    %132 = vector.broadcast %127 : vector<8x1xf32> to vector<8x256xf32>
    %133 = arith.mulf %132, %131 : vector<8x256xf32>
    %134 = arith.addf %119, %133 : vector<8x256xf32>
    %c0_i32_40 = arith.constant 0 : i32
    %135 = vector.broadcast %c0_i32_40 : i32 to vector<1x256xi32>
    %136 = arith.cmpi sge, %9, %135 : vector<1x256xi32>
    %137 = arith.andi %104, %136 : vector<1x256xi1>
    %c16_i32_41 = arith.constant 16 : i32
    %138 = vector.broadcast %c16_i32_41 : i32 to vector<1x256xi32>
    %139 = arith.cmpi slt, %9, %138 : vector<1x256xi32>
    %140 = arith.andi %137, %139 : vector<1x256xi1>
    %c16_i32_42 = arith.constant 16 : i32
    %141 = tpu.dynamic_rotate %15 by %c16_i32_42 dim 1 : vector<8x256xf32>, i32 -> vector<8x256xf32>
    %c0_43 = arith.constant 0 : index
    %c7 = arith.constant 7 : index
    %142 = vector.load %arg5[%c0_43, %c7] : memref<8x25xf32, #tpu.memory_space<vmem>>, vector<8x1xf32>
    %cst_44 = arith.constant 0.000000e+00 : f32
    %143 = vector.shape_cast %140 : vector<1x256xi1> to vector<1x256xi1>
    %144 = vector.broadcast %143 : vector<1x256xi1> to vector<8x256xi1>
    %145 = vector.broadcast %cst_44 : f32 to vector<8x256xf32>
    %146 = arith.select %144, %141, %145 : vector<8x256xi1>, vector<8x256xf32>
    %147 = vector.broadcast %142 : vector<8x1xf32> to vector<8x256xf32>
    %148 = arith.mulf %147, %146 : vector<8x256xf32>
    %149 = arith.addf %134, %148 : vector<8x256xf32>
    %c-1_i32_45 = arith.constant -1 : i32
    %150 = vector.broadcast %c-1_i32_45 : i32 to vector<1x256xi32>
    %151 = arith.cmpi sge, %9, %150 : vector<1x256xi32>
    %152 = arith.andi %104, %151 : vector<1x256xi1>
    %c15_i32_46 = arith.constant 15 : i32
    %153 = vector.broadcast %c15_i32_46 : i32 to vector<1x256xi32>
    %154 = arith.cmpi slt, %9, %153 : vector<1x256xi32>
    %155 = arith.andi %152, %154 : vector<1x256xi1>
    %c15_i32_47 = arith.constant 15 : i32
    %156 = tpu.dynamic_rotate %15 by %c15_i32_47 dim 1 : vector<8x256xf32>, i32 -> vector<8x256xf32>
    %c0_48 = arith.constant 0 : index
    %c8 = arith.constant 8 : index
    %157 = vector.load %arg5[%c0_48, %c8] : memref<8x25xf32, #tpu.memory_space<vmem>>, vector<8x1xf32>
    %cst_49 = arith.constant 0.000000e+00 : f32
    %158 = vector.shape_cast %155 : vector<1x256xi1> to vector<1x256xi1>
    %159 = vector.broadcast %158 : vector<1x256xi1> to vector<8x256xi1>
    %160 = vector.broadcast %cst_49 : f32 to vector<8x256xf32>
    %161 = arith.select %159, %156, %160 : vector<8x256xi1>, vector<8x256xf32>
    %162 = vector.broadcast %157 : vector<8x1xf32> to vector<8x256xf32>
    %163 = arith.mulf %162, %161 : vector<8x256xf32>
    %164 = arith.addf %149, %163 : vector<8x256xf32>
    %c-2_i32_50 = arith.constant -2 : i32
    %165 = vector.broadcast %c-2_i32_50 : i32 to vector<1x256xi32>
    %166 = arith.cmpi sge, %9, %165 : vector<1x256xi32>
    %167 = arith.andi %104, %166 : vector<1x256xi1>
    %c14_i32_51 = arith.constant 14 : i32
    %168 = vector.broadcast %c14_i32_51 : i32 to vector<1x256xi32>
    %169 = arith.cmpi slt, %9, %168 : vector<1x256xi32>
    %170 = arith.andi %167, %169 : vector<1x256xi1>
    %c14_i32_52 = arith.constant 14 : i32
    %171 = tpu.dynamic_rotate %15 by %c14_i32_52 dim 1 : vector<8x256xf32>, i32 -> vector<8x256xf32>
    %c0_53 = arith.constant 0 : index
    %c9 = arith.constant 9 : index
    %172 = vector.load %arg5[%c0_53, %c9] : memref<8x25xf32, #tpu.memory_space<vmem>>, vector<8x1xf32>
    %cst_54 = arith.constant 0.000000e+00 : f32
    %173 = vector.shape_cast %170 : vector<1x256xi1> to vector<1x256xi1>
    %174 = vector.broadcast %173 : vector<1x256xi1> to vector<8x256xi1>
    %175 = vector.broadcast %cst_54 : f32 to vector<8x256xf32>
    %176 = arith.select %174, %171, %175 : vector<8x256xi1>, vector<8x256xf32>
    %177 = vector.broadcast %172 : vector<8x1xf32> to vector<8x256xf32>
    %178 = arith.mulf %177, %176 : vector<8x256xf32>
    %179 = arith.addf %164, %178 : vector<8x256xf32>
    %c0_i32_55 = arith.constant 0 : i32
    %180 = vector.broadcast %c0_i32_55 : i32 to vector<1x256xi32>
    %181 = arith.cmpi sge, %8, %180 : vector<1x256xi32>
    %c16_i32_56 = arith.constant 16 : i32
    %182 = vector.broadcast %c16_i32_56 : i32 to vector<1x256xi32>
    %183 = arith.cmpi slt, %8, %182 : vector<1x256xi32>
    %184 = arith.andi %181, %183 : vector<1x256xi1>
    %c2_i32_57 = arith.constant 2 : i32
    %185 = vector.broadcast %c2_i32_57 : i32 to vector<1x256xi32>
    %186 = arith.cmpi sge, %9, %185 : vector<1x256xi32>
    %187 = arith.andi %184, %186 : vector<1x256xi1>
    %c18_i32_58 = arith.constant 18 : i32
    %188 = vector.broadcast %c18_i32_58 : i32 to vector<1x256xi32>
    %189 = arith.cmpi slt, %9, %188 : vector<1x256xi32>
    %190 = arith.andi %187, %189 : vector<1x256xi1>
    %c2_i32_59 = arith.constant 2 : i32
    %191 = tpu.dynamic_rotate %15 by %c2_i32_59 dim 1 : vector<8x256xf32>, i32 -> vector<8x256xf32>
    %c0_60 = arith.constant 0 : index
    %c10 = arith.constant 10 : index
    %192 = vector.load %arg5[%c0_60, %c10] : memref<8x25xf32, #tpu.memory_space<vmem>>, vector<8x1xf32>
    %cst_61 = arith.constant 0.000000e+00 : f32
    %193 = vector.shape_cast %190 : vector<1x256xi1> to vector<1x256xi1>
    %194 = vector.broadcast %193 : vector<1x256xi1> to vector<8x256xi1>
    %195 = vector.broadcast %cst_61 : f32 to vector<8x256xf32>
    %196 = arith.select %194, %191, %195 : vector<8x256xi1>, vector<8x256xf32>
    %197 = vector.broadcast %192 : vector<8x1xf32> to vector<8x256xf32>
    %198 = arith.mulf %197, %196 : vector<8x256xf32>
    %199 = arith.addf %179, %198 : vector<8x256xf32>
    %c1_i32_62 = arith.constant 1 : i32
    %200 = vector.broadcast %c1_i32_62 : i32 to vector<1x256xi32>
    %201 = arith.cmpi sge, %9, %200 : vector<1x256xi32>
    %202 = arith.andi %184, %201 : vector<1x256xi1>
    %c17_i32_63 = arith.constant 17 : i32
    %203 = vector.broadcast %c17_i32_63 : i32 to vector<1x256xi32>
    %204 = arith.cmpi slt, %9, %203 : vector<1x256xi32>
    %205 = arith.andi %202, %204 : vector<1x256xi1>
    %c1_i32_64 = arith.constant 1 : i32
    %206 = tpu.dynamic_rotate %15 by %c1_i32_64 dim 1 : vector<8x256xf32>, i32 -> vector<8x256xf32>
    %c0_65 = arith.constant 0 : index
    %c11 = arith.constant 11 : index
    %207 = vector.load %arg5[%c0_65, %c11] : memref<8x25xf32, #tpu.memory_space<vmem>>, vector<8x1xf32>
    %cst_66 = arith.constant 0.000000e+00 : f32
    %208 = vector.shape_cast %205 : vector<1x256xi1> to vector<1x256xi1>
    %209 = vector.broadcast %208 : vector<1x256xi1> to vector<8x256xi1>
    %210 = vector.broadcast %cst_66 : f32 to vector<8x256xf32>
    %211 = arith.select %209, %206, %210 : vector<8x256xi1>, vector<8x256xf32>
    %212 = vector.broadcast %207 : vector<8x1xf32> to vector<8x256xf32>
    %213 = arith.mulf %212, %211 : vector<8x256xf32>
    %214 = arith.addf %199, %213 : vector<8x256xf32>
    %c0_i32_67 = arith.constant 0 : i32
    %215 = vector.broadcast %c0_i32_67 : i32 to vector<1x256xi32>
    %216 = arith.cmpi sge, %9, %215 : vector<1x256xi32>
    %217 = arith.andi %184, %216 : vector<1x256xi1>
    %c16_i32_68 = arith.constant 16 : i32
    %218 = vector.broadcast %c16_i32_68 : i32 to vector<1x256xi32>
    %219 = arith.cmpi slt, %9, %218 : vector<1x256xi32>
    %220 = arith.andi %217, %219 : vector<1x256xi1>
    %c0_69 = arith.constant 0 : index
    %c12 = arith.constant 12 : index
    %221 = vector.load %arg5[%c0_69, %c12] : memref<8x25xf32, #tpu.memory_space<vmem>>, vector<8x1xf32>
    %cst_70 = arith.constant 0.000000e+00 : f32
    %222 = vector.shape_cast %220 : vector<1x256xi1> to vector<1x256xi1>
    %223 = vector.broadcast %222 : vector<1x256xi1> to vector<8x256xi1>
    %224 = vector.broadcast %cst_70 : f32 to vector<8x256xf32>
    %225 = arith.select %223, %15, %224 : vector<8x256xi1>, vector<8x256xf32>
    %226 = vector.broadcast %221 : vector<8x1xf32> to vector<8x256xf32>
    %227 = arith.mulf %226, %225 : vector<8x256xf32>
    %228 = arith.addf %214, %227 : vector<8x256xf32>
    %c-1_i32_71 = arith.constant -1 : i32
    %229 = vector.broadcast %c-1_i32_71 : i32 to vector<1x256xi32>
    %230 = arith.cmpi sge, %9, %229 : vector<1x256xi32>
    %231 = arith.andi %184, %230 : vector<1x256xi1>
    %c15_i32_72 = arith.constant 15 : i32
    %232 = vector.broadcast %c15_i32_72 : i32 to vector<1x256xi32>
    %233 = arith.cmpi slt, %9, %232 : vector<1x256xi32>
    %234 = arith.andi %231, %233 : vector<1x256xi1>
    %c255_i32 = arith.constant 255 : i32
    %235 = tpu.dynamic_rotate %15 by %c255_i32 dim 1 : vector<8x256xf32>, i32 -> vector<8x256xf32>
    %c0_73 = arith.constant 0 : index
    %c13 = arith.constant 13 : index
    %236 = vector.load %arg5[%c0_73, %c13] : memref<8x25xf32, #tpu.memory_space<vmem>>, vector<8x1xf32>
    %cst_74 = arith.constant 0.000000e+00 : f32
    %237 = vector.shape_cast %234 : vector<1x256xi1> to vector<1x256xi1>
    %238 = vector.broadcast %237 : vector<1x256xi1> to vector<8x256xi1>
    %239 = vector.broadcast %cst_74 : f32 to vector<8x256xf32>
    %240 = arith.select %238, %235, %239 : vector<8x256xi1>, vector<8x256xf32>
    %241 = vector.broadcast %236 : vector<8x1xf32> to vector<8x256xf32>
    %242 = arith.mulf %241, %240 : vector<8x256xf32>
    %243 = arith.addf %228, %242 : vector<8x256xf32>
    %c-2_i32_75 = arith.constant -2 : i32
    %244 = vector.broadcast %c-2_i32_75 : i32 to vector<1x256xi32>
    %245 = arith.cmpi sge, %9, %244 : vector<1x256xi32>
    %246 = arith.andi %184, %245 : vector<1x256xi1>
    %c14_i32_76 = arith.constant 14 : i32
    %247 = vector.broadcast %c14_i32_76 : i32 to vector<1x256xi32>
    %248 = arith.cmpi slt, %9, %247 : vector<1x256xi32>
    %249 = arith.andi %246, %248 : vector<1x256xi1>
    %c254_i32 = arith.constant 254 : i32
    %250 = tpu.dynamic_rotate %15 by %c254_i32 dim 1 : vector<8x256xf32>, i32 -> vector<8x256xf32>
    %c0_77 = arith.constant 0 : index
    %c14 = arith.constant 14 : index
    %251 = vector.load %arg5[%c0_77, %c14] : memref<8x25xf32, #tpu.memory_space<vmem>>, vector<8x1xf32>
    %cst_78 = arith.constant 0.000000e+00 : f32
    %252 = vector.shape_cast %249 : vector<1x256xi1> to vector<1x256xi1>
    %253 = vector.broadcast %252 : vector<1x256xi1> to vector<8x256xi1>
    %254 = vector.broadcast %cst_78 : f32 to vector<8x256xf32>
    %255 = arith.select %253, %250, %254 : vector<8x256xi1>, vector<8x256xf32>
    %256 = vector.broadcast %251 : vector<8x1xf32> to vector<8x256xf32>
    %257 = arith.mulf %256, %255 : vector<8x256xf32>
    %258 = arith.addf %243, %257 : vector<8x256xf32>
    %c-1_i32_79 = arith.constant -1 : i32
    %259 = vector.broadcast %c-1_i32_79 : i32 to vector<1x256xi32>
    %260 = arith.cmpi sge, %8, %259 : vector<1x256xi32>
    %c15_i32_80 = arith.constant 15 : i32
    %261 = vector.broadcast %c15_i32_80 : i32 to vector<1x256xi32>
    %262 = arith.cmpi slt, %8, %261 : vector<1x256xi32>
    %263 = arith.andi %260, %262 : vector<1x256xi1>
    %c2_i32_81 = arith.constant 2 : i32
    %264 = vector.broadcast %c2_i32_81 : i32 to vector<1x256xi32>
    %265 = arith.cmpi sge, %9, %264 : vector<1x256xi32>
    %266 = arith.andi %263, %265 : vector<1x256xi1>
    %c18_i32_82 = arith.constant 18 : i32
    %267 = vector.broadcast %c18_i32_82 : i32 to vector<1x256xi32>
    %268 = arith.cmpi slt, %9, %267 : vector<1x256xi32>
    %269 = arith.andi %266, %268 : vector<1x256xi1>
    %c242_i32 = arith.constant 242 : i32
    %270 = tpu.dynamic_rotate %15 by %c242_i32 dim 1 : vector<8x256xf32>, i32 -> vector<8x256xf32>
    %c0_83 = arith.constant 0 : index
    %c15 = arith.constant 15 : index
    %271 = vector.load %arg5[%c0_83, %c15] : memref<8x25xf32, #tpu.memory_space<vmem>>, vector<8x1xf32>
    %cst_84 = arith.constant 0.000000e+00 : f32
    %272 = vector.shape_cast %269 : vector<1x256xi1> to vector<1x256xi1>
    %273 = vector.broadcast %272 : vector<1x256xi1> to vector<8x256xi1>
    %274 = vector.broadcast %cst_84 : f32 to vector<8x256xf32>
    %275 = arith.select %273, %270, %274 : vector<8x256xi1>, vector<8x256xf32>
    %276 = vector.broadcast %271 : vector<8x1xf32> to vector<8x256xf32>
    %277 = arith.mulf %276, %275 : vector<8x256xf32>
    %278 = arith.addf %258, %277 : vector<8x256xf32>
    %c1_i32_85 = arith.constant 1 : i32
    %279 = vector.broadcast %c1_i32_85 : i32 to vector<1x256xi32>
    %280 = arith.cmpi sge, %9, %279 : vector<1x256xi32>
    %281 = arith.andi %263, %280 : vector<1x256xi1>
    %c17_i32_86 = arith.constant 17 : i32
    %282 = vector.broadcast %c17_i32_86 : i32 to vector<1x256xi32>
    %283 = arith.cmpi slt, %9, %282 : vector<1x256xi32>
    %284 = arith.andi %281, %283 : vector<1x256xi1>
    %c241_i32 = arith.constant 241 : i32
    %285 = tpu.dynamic_rotate %15 by %c241_i32 dim 1 : vector<8x256xf32>, i32 -> vector<8x256xf32>
    %c0_87 = arith.constant 0 : index
    %c16 = arith.constant 16 : index
    %286 = vector.load %arg5[%c0_87, %c16] : memref<8x25xf32, #tpu.memory_space<vmem>>, vector<8x1xf32>
    %cst_88 = arith.constant 0.000000e+00 : f32
    %287 = vector.shape_cast %284 : vector<1x256xi1> to vector<1x256xi1>
    %288 = vector.broadcast %287 : vector<1x256xi1> to vector<8x256xi1>
    %289 = vector.broadcast %cst_88 : f32 to vector<8x256xf32>
    %290 = arith.select %288, %285, %289 : vector<8x256xi1>, vector<8x256xf32>
    %291 = vector.broadcast %286 : vector<8x1xf32> to vector<8x256xf32>
    %292 = arith.mulf %291, %290 : vector<8x256xf32>
    %293 = arith.addf %278, %292 : vector<8x256xf32>
    %c0_i32_89 = arith.constant 0 : i32
    %294 = vector.broadcast %c0_i32_89 : i32 to vector<1x256xi32>
    %295 = arith.cmpi sge, %9, %294 : vector<1x256xi32>
    %296 = arith.andi %263, %295 : vector<1x256xi1>
    %c16_i32_90 = arith.constant 16 : i32
    %297 = vector.broadcast %c16_i32_90 : i32 to vector<1x256xi32>
    %298 = arith.cmpi slt, %9, %297 : vector<1x256xi32>
    %299 = arith.andi %296, %298 : vector<1x256xi1>
    %c240_i32 = arith.constant 240 : i32
    %300 = tpu.dynamic_rotate %15 by %c240_i32 dim 1 : vector<8x256xf32>, i32 -> vector<8x256xf32>
    %c0_91 = arith.constant 0 : index
    %c17 = arith.constant 17 : index
    %301 = vector.load %arg5[%c0_91, %c17] : memref<8x25xf32, #tpu.memory_space<vmem>>, vector<8x1xf32>
    %cst_92 = arith.constant 0.000000e+00 : f32
    %302 = vector.shape_cast %299 : vector<1x256xi1> to vector<1x256xi1>
    %303 = vector.broadcast %302 : vector<1x256xi1> to vector<8x256xi1>
    %304 = vector.broadcast %cst_92 : f32 to vector<8x256xf32>
    %305 = arith.select %303, %300, %304 : vector<8x256xi1>, vector<8x256xf32>
    %306 = vector.broadcast %301 : vector<8x1xf32> to vector<8x256xf32>
    %307 = arith.mulf %306, %305 : vector<8x256xf32>
    %308 = arith.addf %293, %307 : vector<8x256xf32>
    %c-1_i32_93 = arith.constant -1 : i32
    %309 = vector.broadcast %c-1_i32_93 : i32 to vector<1x256xi32>
    %310 = arith.cmpi sge, %9, %309 : vector<1x256xi32>
    %311 = arith.andi %263, %310 : vector<1x256xi1>
    %c15_i32_94 = arith.constant 15 : i32
    %312 = vector.broadcast %c15_i32_94 : i32 to vector<1x256xi32>
    %313 = arith.cmpi slt, %9, %312 : vector<1x256xi32>
    %314 = arith.andi %311, %313 : vector<1x256xi1>
    %c239_i32 = arith.constant 239 : i32
    %315 = tpu.dynamic_rotate %15 by %c239_i32 dim 1 : vector<8x256xf32>, i32 -> vector<8x256xf32>
    %c0_95 = arith.constant 0 : index
    %c18 = arith.constant 18 : index
    %316 = vector.load %arg5[%c0_95, %c18] : memref<8x25xf32, #tpu.memory_space<vmem>>, vector<8x1xf32>
    %cst_96 = arith.constant 0.000000e+00 : f32
    %317 = vector.shape_cast %314 : vector<1x256xi1> to vector<1x256xi1>
    %318 = vector.broadcast %317 : vector<1x256xi1> to vector<8x256xi1>
    %319 = vector.broadcast %cst_96 : f32 to vector<8x256xf32>
    %320 = arith.select %318, %315, %319 : vector<8x256xi1>, vector<8x256xf32>
    %321 = vector.broadcast %316 : vector<8x1xf32> to vector<8x256xf32>
    %322 = arith.mulf %321, %320 : vector<8x256xf32>
    %323 = arith.addf %308, %322 : vector<8x256xf32>
    %c-2_i32_97 = arith.constant -2 : i32
    %324 = vector.broadcast %c-2_i32_97 : i32 to vector<1x256xi32>
    %325 = arith.cmpi sge, %9, %324 : vector<1x256xi32>
    %326 = arith.andi %263, %325 : vector<1x256xi1>
    %c14_i32_98 = arith.constant 14 : i32
    %327 = vector.broadcast %c14_i32_98 : i32 to vector<1x256xi32>
    %328 = arith.cmpi slt, %9, %327 : vector<1x256xi32>
    %329 = arith.andi %326, %328 : vector<1x256xi1>
    %c238_i32 = arith.constant 238 : i32
    %330 = tpu.dynamic_rotate %15 by %c238_i32 dim 1 : vector<8x256xf32>, i32 -> vector<8x256xf32>
    %c0_99 = arith.constant 0 : index
    %c19 = arith.constant 19 : index
    %331 = vector.load %arg5[%c0_99, %c19] : memref<8x25xf32, #tpu.memory_space<vmem>>, vector<8x1xf32>
    %cst_100 = arith.constant 0.000000e+00 : f32
    %332 = vector.shape_cast %329 : vector<1x256xi1> to vector<1x256xi1>
    %333 = vector.broadcast %332 : vector<1x256xi1> to vector<8x256xi1>
    %334 = vector.broadcast %cst_100 : f32 to vector<8x256xf32>
    %335 = arith.select %333, %330, %334 : vector<8x256xi1>, vector<8x256xf32>
    %336 = vector.broadcast %331 : vector<8x1xf32> to vector<8x256xf32>
    %337 = arith.mulf %336, %335 : vector<8x256xf32>
    %338 = arith.addf %323, %337 : vector<8x256xf32>
    %c-2_i32_101 = arith.constant -2 : i32
    %339 = vector.broadcast %c-2_i32_101 : i32 to vector<1x256xi32>
    %340 = arith.cmpi sge, %8, %339 : vector<1x256xi32>
    %c14_i32_102 = arith.constant 14 : i32
    %341 = vector.broadcast %c14_i32_102 : i32 to vector<1x256xi32>
    %342 = arith.cmpi slt, %8, %341 : vector<1x256xi32>
    %343 = arith.andi %340, %342 : vector<1x256xi1>
    %c2_i32_103 = arith.constant 2 : i32
    %344 = vector.broadcast %c2_i32_103 : i32 to vector<1x256xi32>
    %345 = arith.cmpi sge, %9, %344 : vector<1x256xi32>
    %346 = arith.andi %343, %345 : vector<1x256xi1>
    %c18_i32_104 = arith.constant 18 : i32
    %347 = vector.broadcast %c18_i32_104 : i32 to vector<1x256xi32>
    %348 = arith.cmpi slt, %9, %347 : vector<1x256xi32>
    %349 = arith.andi %346, %348 : vector<1x256xi1>
    %c226_i32 = arith.constant 226 : i32
    %350 = tpu.dynamic_rotate %15 by %c226_i32 dim 1 : vector<8x256xf32>, i32 -> vector<8x256xf32>
    %c0_105 = arith.constant 0 : index
    %c20 = arith.constant 20 : index
    %351 = vector.load %arg5[%c0_105, %c20] : memref<8x25xf32, #tpu.memory_space<vmem>>, vector<8x1xf32>
    %cst_106 = arith.constant 0.000000e+00 : f32
    %352 = vector.shape_cast %349 : vector<1x256xi1> to vector<1x256xi1>
    %353 = vector.broadcast %352 : vector<1x256xi1> to vector<8x256xi1>
    %354 = vector.broadcast %cst_106 : f32 to vector<8x256xf32>
    %355 = arith.select %353, %350, %354 : vector<8x256xi1>, vector<8x256xf32>
    %356 = vector.broadcast %351 : vector<8x1xf32> to vector<8x256xf32>
    %357 = arith.mulf %356, %355 : vector<8x256xf32>
    %358 = arith.addf %338, %357 : vector<8x256xf32>
    %c1_i32_107 = arith.constant 1 : i32
    %359 = vector.broadcast %c1_i32_107 : i32 to vector<1x256xi32>
    %360 = arith.cmpi sge, %9, %359 : vector<1x256xi32>
    %361 = arith.andi %343, %360 : vector<1x256xi1>
    %c17_i32_108 = arith.constant 17 : i32
    %362 = vector.broadcast %c17_i32_108 : i32 to vector<1x256xi32>
    %363 = arith.cmpi slt, %9, %362 : vector<1x256xi32>
    %364 = arith.andi %361, %363 : vector<1x256xi1>
    %c225_i32 = arith.constant 225 : i32
    %365 = tpu.dynamic_rotate %15 by %c225_i32 dim 1 : vector<8x256xf32>, i32 -> vector<8x256xf32>
    %c0_109 = arith.constant 0 : index
    %c21 = arith.constant 21 : index
    %366 = vector.load %arg5[%c0_109, %c21] : memref<8x25xf32, #tpu.memory_space<vmem>>, vector<8x1xf32>
    %cst_110 = arith.constant 0.000000e+00 : f32
    %367 = vector.shape_cast %364 : vector<1x256xi1> to vector<1x256xi1>
    %368 = vector.broadcast %367 : vector<1x256xi1> to vector<8x256xi1>
    %369 = vector.broadcast %cst_110 : f32 to vector<8x256xf32>
    %370 = arith.select %368, %365, %369 : vector<8x256xi1>, vector<8x256xf32>
    %371 = vector.broadcast %366 : vector<8x1xf32> to vector<8x256xf32>
    %372 = arith.mulf %371, %370 : vector<8x256xf32>
    %373 = arith.addf %358, %372 : vector<8x256xf32>
    %c0_i32_111 = arith.constant 0 : i32
    %374 = vector.broadcast %c0_i32_111 : i32 to vector<1x256xi32>
    %375 = arith.cmpi sge, %9, %374 : vector<1x256xi32>
    %376 = arith.andi %343, %375 : vector<1x256xi1>
    %c16_i32_112 = arith.constant 16 : i32
    %377 = vector.broadcast %c16_i32_112 : i32 to vector<1x256xi32>
    %378 = arith.cmpi slt, %9, %377 : vector<1x256xi32>
    %379 = arith.andi %376, %378 : vector<1x256xi1>
    %c224_i32 = arith.constant 224 : i32
    %380 = tpu.dynamic_rotate %15 by %c224_i32 dim 1 : vector<8x256xf32>, i32 -> vector<8x256xf32>
    %c0_113 = arith.constant 0 : index
    %c22 = arith.constant 22 : index
    %381 = vector.load %arg5[%c0_113, %c22] : memref<8x25xf32, #tpu.memory_space<vmem>>, vector<8x1xf32>
    %cst_114 = arith.constant 0.000000e+00 : f32
    %382 = vector.shape_cast %379 : vector<1x256xi1> to vector<1x256xi1>
    %383 = vector.broadcast %382 : vector<1x256xi1> to vector<8x256xi1>
    %384 = vector.broadcast %cst_114 : f32 to vector<8x256xf32>
    %385 = arith.select %383, %380, %384 : vector<8x256xi1>, vector<8x256xf32>
    %386 = vector.broadcast %381 : vector<8x1xf32> to vector<8x256xf32>
    %387 = arith.mulf %386, %385 : vector<8x256xf32>
    %388 = arith.addf %373, %387 : vector<8x256xf32>
    %c-1_i32_115 = arith.constant -1 : i32
    %389 = vector.broadcast %c-1_i32_115 : i32 to vector<1x256xi32>
    %390 = arith.cmpi sge, %9, %389 : vector<1x256xi32>
    %391 = arith.andi %343, %390 : vector<1x256xi1>
    %c15_i32_116 = arith.constant 15 : i32
    %392 = vector.broadcast %c15_i32_116 : i32 to vector<1x256xi32>
    %393 = arith.cmpi slt, %9, %392 : vector<1x256xi32>
    %394 = arith.andi %391, %393 : vector<1x256xi1>
    %c223_i32 = arith.constant 223 : i32
    %395 = tpu.dynamic_rotate %15 by %c223_i32 dim 1 : vector<8x256xf32>, i32 -> vector<8x256xf32>
    %c0_117 = arith.constant 0 : index
    %c23 = arith.constant 23 : index
    %396 = vector.load %arg5[%c0_117, %c23] : memref<8x25xf32, #tpu.memory_space<vmem>>, vector<8x1xf32>
    %cst_118 = arith.constant 0.000000e+00 : f32
    %397 = vector.shape_cast %394 : vector<1x256xi1> to vector<1x256xi1>
    %398 = vector.broadcast %397 : vector<1x256xi1> to vector<8x256xi1>
    %399 = vector.broadcast %cst_118 : f32 to vector<8x256xf32>
    %400 = arith.select %398, %395, %399 : vector<8x256xi1>, vector<8x256xf32>
    %401 = vector.broadcast %396 : vector<8x1xf32> to vector<8x256xf32>
    %402 = arith.mulf %401, %400 : vector<8x256xf32>
    %403 = arith.addf %388, %402 : vector<8x256xf32>
    %c-2_i32_119 = arith.constant -2 : i32
    %404 = vector.broadcast %c-2_i32_119 : i32 to vector<1x256xi32>
    %405 = arith.cmpi sge, %9, %404 : vector<1x256xi32>
    %406 = arith.andi %343, %405 : vector<1x256xi1>
    %c14_i32_120 = arith.constant 14 : i32
    %407 = vector.broadcast %c14_i32_120 : i32 to vector<1x256xi32>
    %408 = arith.cmpi slt, %9, %407 : vector<1x256xi32>
    %409 = arith.andi %406, %408 : vector<1x256xi1>
    %c222_i32 = arith.constant 222 : i32
    %410 = tpu.dynamic_rotate %15 by %c222_i32 dim 1 : vector<8x256xf32>, i32 -> vector<8x256xf32>
    %c0_121 = arith.constant 0 : index
    %c24 = arith.constant 24 : index
    %411 = vector.load %arg5[%c0_121, %c24] : memref<8x25xf32, #tpu.memory_space<vmem>>, vector<8x1xf32>
    %cst_122 = arith.constant 0.000000e+00 : f32
    %412 = vector.shape_cast %409 : vector<1x256xi1> to vector<1x256xi1>
    %413 = vector.broadcast %412 : vector<1x256xi1> to vector<8x256xi1>
    %414 = vector.broadcast %cst_122 : f32 to vector<8x256xf32>
    %415 = arith.select %413, %410, %414 : vector<8x256xi1>, vector<8x256xf32>
    %416 = vector.broadcast %411 : vector<8x1xf32> to vector<8x256xf32>
    %417 = arith.mulf %416, %415 : vector<8x256xf32>
    %418 = arith.addf %403, %417 : vector<8x256xf32>
    %cst_123 = arith.constant 0.000000e+00 : f32
    %419 = vector.shape_cast %11 : vector<1x256xi1> to vector<1x256xi1>
    %420 = vector.broadcast %419 : vector<1x256xi1> to vector<8x256xi1>
    %421 = vector.broadcast %cst_123 : f32 to vector<8x256xf32>
    %422 = arith.select %420, %418, %421 : vector<8x256xi1>, vector<8x256xf32>
    %c0_124 = arith.constant 0 : index
    %c0_125 = arith.constant 0 : index
    %c0_126 = arith.constant 0 : index
    %423 = vector.load %arg9[%c0_124, %c0_125, %c0_126] : memref<1x8x256xf32, #tpu.memory_space<vmem>>, vector<1x8x256xf32>
    %424 = vector.shape_cast %423 : vector<1x8x256xf32> to vector<8x256xf32>
    %425 = vector.shape_cast %422 : vector<8x256xf32> to vector<1x8x256xf32>
    tpu.vector_store %arg9[%c0_124, %c0_125, %c0_126], %425 {strides = array<i32>} : memref<1x8x256xf32, #tpu.memory_space<vmem>>, vector<1x8x256xf32>,
    %cst_127 = arith.constant dense<0.000000e+00> : vector<8xf32>
    %426 = vector.multi_reduction <add>, %422, %cst_127 [1] : vector<8x256xf32> to vector<8xf32>
    %427 = vector.shape_cast %426 : vector<8xf32> to vector<8x1xf32>
    %428 = arith.mulf %422, %422 : vector<8x256xf32>
    %cst_128 = arith.constant dense<0.000000e+00> : vector<8xf32>
    %429 = vector.multi_reduction <add>, %428, %cst_128 [1] : vector<8x256xf32> to vector<8xf32>
    %430 = vector.shape_cast %429 : vector<8xf32> to vector<8x1xf32>
    %431 = tpu.concatenate %427, %430 in 1 : vector<8x1xf32>, vector<8x1xf32> -> vector<8x2xf32>
    %c0_129 = arith.constant 0 : index
    %c0_130 = arith.constant 0 : index
    %c0_131 = arith.constant 0 : index
    %c0_132 = arith.constant 0 : index
    %432 = vector.load %arg10[%c0_129, %c0_130, %c0_131, %c0_132] : memref<1x1x8x2xf32, #tpu.memory_space<vmem>>, vector<1x1x8x2xf32>
    %433 = vector.shape_cast %432 : vector<1x1x8x2xf32> to vector<8x2xf32>
    %434 = vector.shape_cast %431 : vector<8x2xf32> to vector<1x1x8x2xf32>
    tpu.vector_store %arg10[%c0_129, %c0_130, %c0_131, %c0_132], %434 {strides = array<i32>} : memref<1x1x8x2xf32, #tpu.memory_space<vmem>>, vector<1x1x8x2xf32>,
    return
  }
  func.func @transform_0(%arg0: i32, %arg1: i32) -> (i32, i32, i32) {
    %c0_i32 = arith.constant 0 : i32
    %c0_i32_0 = arith.constant 0 : i32
    return %arg0, %arg1, %c0_i32 : i32, i32, i32
  }
  func.func @transform_1(%arg0: i32, %arg1: i32) -> (i32, i32) {
    %c0_i32 = arith.constant 0 : i32
    %c0_i32_0 = arith.constant 0 : i32
    return %arg1, %c0_i32 : i32, i32
  }
  func.func @transform_2(%arg0: i32, %arg1: i32) -> (i32, i32) {
    %c0_i32 = arith.constant 0 : i32
    %c0_i32_0 = arith.constant 0 : i32
    return %arg1, %c0_i32 : i32, i32
  }
  func.func @transform_3(%arg0: i32, %arg1: i32) -> (i32, i32) {
    %c0_i32 = arith.constant 0 : i32
    %c0_i32_0 = arith.constant 0 : i32
    return %arg1, %c0_i32 : i32, i32
  }
  func.func @transform_4(%arg0: i32, %arg1: i32) -> (i32, i32) {
    %c0_i32 = arith.constant 0 : i32
    %c0_i32_0 = arith.constant 0 : i32
    %c0_i32_1 = arith.constant 0 : i32
    return %c0_i32, %c0_i32_0 : i32, i32
  }
  func.func @transform_5(%arg0: i32, %arg1: i32) -> (i32, i32) {
    %c0_i32 = arith.constant 0 : i32
    %c0_i32_0 = arith.constant 0 : i32
    %c0_i32_1 = arith.constant 0 : i32
    return %c0_i32, %c0_i32_0 : i32, i32
  }
  func.func @transform_6(%arg0: i32, %arg1: i32) -> (i32, i32, i32) {
    %c0_i32 = arith.constant 0 : i32
    %c0_i32_0 = arith.constant 0 : i32
    return %arg0, %arg1, %c0_i32 : i32, i32, i32
  }
  func.func @transform_7(%arg0: i32, %arg1: i32) -> (i32, i32, i32) {
    %c0_i32 = arith.constant 0 : i32
    %c0_i32_0 = arith.constant 0 : i32
    return %arg0, %arg1, %c0_i32 : i32, i32, i32
  }
  func.func @transform_8(%arg0: i32, %arg1: i32) -> (i32, i32, i32, i32) {
    %c0_i32 = arith.constant 0 : i32
    %c0_i32_0 = arith.constant 0 : i32
    %c0_i32_1 = arith.constant 0 : i32
    return %arg0, %arg1, %c0_i32, %c0_i32_0 : i32, i32, i32, i32
  }
}

module attributes {stable_mosaic.version = 11 : i64} {
  func.func @_residual_concat_kernel(%arg0: i32, %arg1: i32, %arg2: memref<1x8x256xf32, #tpu.memory_space<vmem>>, %arg3: memref<1x8x256xf32, #tpu.memory_space<vmem>>, %arg4: memref<8x1xf32, #tpu.memory_space<vmem>>, %arg5: memref<8x1xf32, #tpu.memory_space<vmem>>, %arg6: memref<1x16x256xf32, #tpu.memory_space<vmem>>, %arg7: memref<1x16x256xf32, #tpu.memory_space<vmem>>) attributes {dimension_semantics = [#tpu.dimension_semantics<parallel>, #tpu.dimension_semantics<parallel>], iteration_bounds = array<i64: 2, 1>, scalar_prefetch = 0 : i64, scratch_operands = 0 : i64, tpu.core_type = #tpu.core_type<tc>, window_params = [{transform_indices = @transform_0, window_bounds = array<i64: 1, 8, 256>}, {transform_indices = @transform_1, window_bounds = array<i64: 1, 8, 256>}, {pipeline_mode = #tpu.pipeline_mode<synchronous>, transform_indices = @transform_2, window_bounds = array<i64: 8, 1>}, {pipeline_mode = #tpu.pipeline_mode<synchronous>, transform_indices = @transform_3, window_bounds = array<i64: 8, 1>}, {transform_indices = @transform_4, window_bounds = array<i64: 1, 16, 256>}, {transform_indices = @transform_5, window_bounds = array<i64: 1, 16, 256>}]} {
    %c0 = arith.constant 0 : index
    %c0_0 = arith.constant 0 : index
    %c0_1 = arith.constant 0 : index
    %0 = vector.load %arg2[%c0, %c0_0, %c0_1] : memref<1x8x256xf32, #tpu.memory_space<vmem>>, vector<1x8x256xf32>
    %1 = vector.shape_cast %0 : vector<1x8x256xf32> to vector<8x256xf32>
    %c0_2 = arith.constant 0 : index
    %c0_3 = arith.constant 0 : index
    %c0_4 = arith.constant 0 : index
    %2 = vector.load %arg3[%c0_2, %c0_3, %c0_4] : memref<1x8x256xf32, #tpu.memory_space<vmem>>, vector<1x8x256xf32>
    %3 = vector.shape_cast %2 : vector<1x8x256xf32> to vector<8x256xf32>
    %c0_5 = arith.constant 0 : index
    %c0_6 = arith.constant 0 : index
    %4 = vector.load %arg4[%c0_5, %c0_6] : memref<8x1xf32, #tpu.memory_space<vmem>>, vector<8x1xf32>
    %5 = vector.broadcast %4 : vector<8x1xf32> to vector<8x256xf32>
    %6 = arith.mulf %3, %5 : vector<8x256xf32>
    %c0_7 = arith.constant 0 : index
    %c0_8 = arith.constant 0 : index
    %7 = vector.load %arg5[%c0_7, %c0_8] : memref<8x1xf32, #tpu.memory_space<vmem>>, vector<8x1xf32>
    %8 = vector.broadcast %7 : vector<8x1xf32> to vector<8x256xf32>
    %9 = arith.addf %6, %8 : vector<8x256xf32>
    %c0_9 = arith.constant 0 : index
    %c0_10 = arith.constant 0 : index
    %c0_11 = arith.constant 0 : index
    %10 = vector.load %arg6[%c0_9, %c0_10, %c0_11] : memref<1x16x256xf32, #tpu.memory_space<vmem>>, vector<1x16x256xf32>
    %11 = vector.shape_cast %10 : vector<1x16x256xf32> to vector<16x256xf32>
    %12 = vector.extract_strided_slice %11 {offsets = [0, 0], sizes = [8, 256], strides = [1, 1]} : vector<16x256xf32> to vector<8x256xf32>
    %13 = arith.addf %1, %12 : vector<8x256xf32>
    %c0_12 = arith.constant 0 : index
    %c0_13 = arith.constant 0 : index
    %c0_14 = arith.constant 0 : index
    %14 = vector.load %arg7[%c0_12, %c0_13, %c0_14] : memref<1x16x256xf32, #tpu.memory_space<vmem>>, vector<1x8x256xf32>
    %15 = vector.shape_cast %14 : vector<1x8x256xf32> to vector<8x256xf32>
    %16 = vector.shape_cast %13 : vector<8x256xf32> to vector<1x8x256xf32>
    tpu.vector_store %arg7[%c0_12, %c0_13, %c0_14], %16 {strides = array<i32>} : memref<1x16x256xf32, #tpu.memory_space<vmem>>, vector<1x8x256xf32>,
    %17 = vector.extract_strided_slice %11 {offsets = [8, 0], sizes = [8, 256], strides = [1, 1]} : vector<16x256xf32> to vector<8x256xf32>
    %18 = arith.addf %9, %17 : vector<8x256xf32>
    %c0_15 = arith.constant 0 : index
    %c8 = arith.constant 8 : index
    %c0_16 = arith.constant 0 : index
    %19 = vector.load %arg7[%c0_15, %c8, %c0_16] : memref<1x16x256xf32, #tpu.memory_space<vmem>>, vector<1x8x256xf32>
    %20 = vector.shape_cast %19 : vector<1x8x256xf32> to vector<8x256xf32>
    %21 = vector.shape_cast %18 : vector<8x256xf32> to vector<1x8x256xf32>
    tpu.vector_store %arg7[%c0_15, %c8, %c0_16], %21 {strides = array<i32>} : memref<1x16x256xf32, #tpu.memory_space<vmem>>, vector<1x8x256xf32>,
    return
  }
  func.func @transform_0(%arg0: i32, %arg1: i32) -> (i32, i32, i32) {
    %c0_i32 = arith.constant 0 : i32
    %c0_i32_0 = arith.constant 0 : i32
    return %arg0, %c0_i32, %arg1 : i32, i32, i32
  }
  func.func @transform_1(%arg0: i32, %arg1: i32) -> (i32, i32, i32) {
    %c0_i32 = arith.constant 0 : i32
    %c0_i32_0 = arith.constant 0 : i32
    return %arg0, %c0_i32, %arg1 : i32, i32, i32
  }
  func.func @transform_2(%arg0: i32, %arg1: i32) -> (i32, i32) {
    %c0_i32 = arith.constant 0 : i32
    %c0_i32_0 = arith.constant 0 : i32
    %c0_i32_1 = arith.constant 0 : i32
    return %c0_i32, %c0_i32_0 : i32, i32
  }
  func.func @transform_3(%arg0: i32, %arg1: i32) -> (i32, i32) {
    %c0_i32 = arith.constant 0 : i32
    %c0_i32_0 = arith.constant 0 : i32
    %c0_i32_1 = arith.constant 0 : i32
    return %c0_i32, %c0_i32_0 : i32, i32
  }
  func.func @transform_4(%arg0: i32, %arg1: i32) -> (i32, i32, i32) {
    %c0_i32 = arith.constant 0 : i32
    %c0_i32_0 = arith.constant 0 : i32
    return %arg0, %c0_i32, %arg1 : i32, i32, i32
  }
  func.func @transform_5(%arg0: i32, %arg1: i32) -> (i32, i32, i32) {
    %c0_i32 = arith.constant 0 : i32
    %c0_i32_0 = arith.constant 0 : i32
    return %arg0, %c0_i32, %arg1 : i32, i32, i32
  }
}

</mosaic_0001>

<llo_original>
// kernel: ghost_bottleneck.5
$region0: #{ghost_bottleneck.5}
  #allocation0 [shape = 'u32[]', space=smem, size = 0x4, offset = 0x4, fixed_abs, tag = 'smem constant byte address 0x4 - core index']
  #allocation1 [shape = 'u32[144,128]{1,0:T(1,128)}', space=vmem, size = 0x12000, scoped, tag = 'internal scratch']
  %s0 = inlined_call_operand.vmem [shape: f32[2,16,256], index: 0, kind: input, shape index: {}]
  %s1 = inlined_call_operand.vmem [shape: f32[4,16], index: 1, kind: input, shape index: {}]
  %s2 = inlined_call_operand.vmem [shape: f32[2,4,256], index: 2, kind: output, shape index: {0}]
  %s3 = inlined_call_operand.vmem [shape: f32[2,1,4,2], index: 3, kind: output, shape index: {1}]
  %4 = xla_tuple %s2, %s3
  %s5 = sld [smem:[#allocation0]]
  $region49: #{ghost_bottleneck.5} parent=0
    _
  %s7 = ssub.s32 1, %s5
  %s8 = scalar_select 0, %s7, %s5
  loop: start=0, step=1, limit=4
  $region2: #{ghost_bottleneck.5} parent=0 // loop_pre_header
    _
  $region3: #{ghost_bottleneck.5} parent=0 // loop_header
    %s10 = sphi 0, %s14
    %p11 = scmp.ge.s32.totalorder %s10, 4
    %s17 = sphi 0, %s29
    %s18 = sphi 0, %s25
    %s19 = sphi 0, %s17
    %s20 = sphi 0, %s18
    %s21 = sphi 0, %s19
    %s22 = sphi 0, %s20
    %s34 = sphi 0, %s36
    %s37 = sphi 0, %s34
    %s38 = sphi 0, %s37
    %s54 = sphi 0, %s38
    %s58 = sphi 0, %s58
    %s60 = sphi 0, %s58
    %s61 = sphi 0, %s60
    %s75 = sphi 0, %s61
    %s83 = sphi 0, %s85
    %s86 = sphi 0, %s83
    %s87 = sphi 0, %s86
    %s103 = sphi 0, %s87
    %s111 = sphi 0, %s113
    %s114 = sphi 0, %s111
    %s115 = sphi 0, %s114
    %s131 = sphi 0, %s115
  $region4: #{ghost_bottleneck.5} parent=0 // loop_header_branch
    %13 = sbr.rel (%p11) target = $region8
  $region5: #{ghost_bottleneck.5} parent=0 // loop_body
    %s15 = ssub.s32 %s10, 1
    %s16 = ssub.s32 %s10, 2
    %s23 = sadd.s32 1, %s18
    %p24 = scmp.ge.s32.totalorder %s23, 1
    %s25 = scalar_select %p24, 0, %s23
    %s26 = sadd.s32 1, %s17
    %s27 = scalar_select %p24, %s26, %s17
    %p28 = scmp.ge.s32.totalorder %s27, 2
    %s29 = scalar_select %p28, 0, %s27
    %s30 = ssub.s32 %s17, %s29
    %s31 = ssub.s32 %s18, %s25
    %s32 = sor.u32 %s30, %s31
    %p33 = scmp.eq.s32.totalorder %s32, 0
    %s35 = sadd.s32 %s34, 1
    %s36 = scalar_select %p33, %s34, %s35
    %p39 = pneg %p33
    %p40 = scmp.eq.s32.totalorder %s10, 1
    %p41 = por %p39, %p40
    %p42 = scmp.ne.s32.totalorder %s34, %s37
    %p43 = scmp.eq.s32.totalorder %s10, 0
    %p44 = por %p42, %p43
    %p45 = scmp.ne.s32.totalorder %s34, %s37
    %p46 = scmp.eq.s32.totalorder %s15, 1
    %p47 = por %p45, %p46
    %p48 = scmp.ne.s32.totalorder %s37, %s38
    %p49 = scmp.eq.s32.totalorder %s15, 0
    %p50 = por %p48, %p49
    %p51 = scmp.ne.s32.totalorder %s37, %s38
    %p52 = scmp.eq.s32.totalorder %s16, 1
    %p53 = por %p51, %p52
    %p55 = scmp.ne.s32.totalorder %s38, %s54
    %p56 = scmp.eq.s32.totalorder %s16, 0
    %p57 = por %p55, %p56
    %s59 = sadd.s32 %s58, 1
    %p62 = scmp.eq.s32.totalorder %s10, 1
    %p63 = scmp.ne.s32.totalorder %s58, %s60
    %p64 = scmp.eq.s32.totalorder %s10, 0
    %p65 = por %p63, %p64
    %p66 = scmp.ne.s32.totalorder %s58, %s60
    %p67 = scmp.eq.s32.totalorder %s15, 1
    %p68 = por %p66, %p67
    %p69 = scmp.ne.s32.totalorder %s60, %s61
    %p70 = scmp.eq.s32.totalorder %s15, 0
    %p71 = por %p69, %p70
    %p72 = scmp.ne.s32.totalorder %s60, %s61
    %p73 = scmp.eq.s32.totalorder %s16, 1
    %p74 = por %p72, %p73
    %p76 = scmp.ne.s32.totalorder %s61, %s75
    %p77 = scmp.eq.s32.totalorder %s16, 0
    %p78 = por %p76, %p77
    %s79 = ssub.s32 %s17, %s29
    %s80 = ssub.s32 %s18, %s25
    %s81 = sor.u32 %s79, %s80
    %p82 = scmp.eq.s32.totalorder %s81, 0
    %s84 = sadd.s32 %s83, 1
    %s85 = scalar_select %p82, %s83, %s84
    %p88 = pneg %p82
    %p89 = scmp.eq.s32.totalorder %s10, 1
    %p90 = por %p88, %p89
    %p91 = scmp.ne.s32.totalorder %s83, %s86
    %p92 = scmp.eq.s32.totalorder %s10, 0
    %p93 = por %p91, %p92
    %p94 = scmp.ne.s32.totalorder %s83, %s86
    %p95 = scmp.eq.s32.totalorder %s15, 1
    %p96 = por %p94, %p95
    %p97 = scmp.ne.s32.totalorder %s86, %s87
    %p98 = scmp.eq.s32.totalorder %s15, 0
    %p99 = por %p97, %p98
    %p100 = scmp.ne.s32.totalorder %s86, %s87
    %p101 = scmp.eq.s32.totalorder %s16, 1
    %p102 = por %p100, %p101
    %p104 = scmp.ne.s32.totalorder %s87, %s103
    %p105 = scmp.eq.s32.totalorder %s16, 0
    %p106 = por %p104, %p105
    %s107 = ssub.s32 %s17, %s29
    %s108 = ssub.s32 %s18, %s25
    %s109 = sor.u32 %s107, %s108
    %p110 = scmp.eq.s32.totalorder %s109, 0
    %s112 = sadd.s32 %s111, 1
    %s113 = scalar_select %p110, %s111, %s112
    %p116 = pneg %p110
    %p117 = scmp.eq.s32.totalorder %s10, 1
    %p118 = por %p116, %p117
    %p119 = scmp.ne.s32.totalorder %s111, %s114
    %p120 = scmp.eq.s32.totalorder %s10, 0
    %p121 = por %p119, %p120
    %p122 = scmp.ne.s32.totalorder %s111, %s114
    %p123 = scmp.eq.s32.totalorder %s15, 1
    %p124 = por %p122, %p123
    %p125 = scmp.ne.s32.totalorder %s114, %s115
    %p126 = scmp.eq.s32.totalorder %s15, 0
    %p127 = por %p125, %p126
    %p128 = scmp.ne.s32.totalorder %s114, %s115
    %p129 = scmp.eq.s32.totalorder %s16, 1
    %p130 = por %p128, %p129
    %p132 = scmp.ne.s32.totalorder %s115, %s131
    %p133 = scmp.eq.s32.totalorder %s16, 0
    %p134 = por %p132, %p133
    %p135 = scmp.le.s32.totalorder 1, %s10
    %p136 = scmp.lt.s32.totalorder %s10, 3
    %p137 = pnand %p135, %p136
    %p138 = pneg %p137
    // Predicated region
    $region9: #{ghost_bottleneck.5} parent=5 // pred_check
      _
    $region10: #{ghost_bottleneck.5} parent=5 // pred_check_branch
      %140 = sbr.rel (%p137) target = $region12
    $region11: #{ghost_bottleneck.5} parent=5 // pred_region
      %s141 = ssub.s32 %s10, 1
      // Predicated region
      $region13: #{ghost_bottleneck.5} parent=11 // pred_check
        %p142 = pneg %p71
      $region14: #{ghost_bottleneck.5} parent=11 // pred_check_branch
        %144 = sbr.rel (%p142) target = $region16
      $region15: #{ghost_bottleneck.5} parent=11 // pred_region
        _
      $region16: #{ghost_bottleneck.5} parent=11 // pred_fallthru
        _
    $region12: #{ghost_bottleneck.5} parent=5 // pred_fallthru
      _
    %p145 = scmp.lt.s32.totalorder %s10, 2
    // Predicated region
    $region17: #{ghost_bottleneck.5} parent=5 // pred_check
      %p146 = pneg %p145
    $region18: #{ghost_bottleneck.5} parent=5 // pred_check_branch
      %148 = sbr.rel (%p146) target = $region20
    $region19: #{ghost_bottleneck.5} parent=5 // pred_region
      // Predicated region
      $region21: #{ghost_bottleneck.5} parent=19 // pred_check
        %p149 = pneg %p44
      $region22: #{ghost_bottleneck.5} parent=19 // pred_check_branch
        %151 = sbr.rel (%p149) target = $region24
      $region23: #{ghost_bottleneck.5} parent=19 // pred_region
        %s152 = smul.u32 2, %s18
        %p153 = scmp.lt.s32.totalorder %s17, 1
        %s154 = scalar_select %p153, %s17, 1
        %p155 = scmp.lt.s32.totalorder %s152, 1
        %s156 = scalar_select %p155, %s152, 1
        %s157 = smul.addr %s154, 4
        %s158 = sadd.s32 %s156, %s157
        %s159 = smul.addr %s158, 8
        %s160 = scalar_lea.vmem %s0, %s159
        %s161 = smul.u32 2, %s18
      $region24: #{ghost_bottleneck.5} parent=19 // pred_fallthru
        _
    $region20: #{ghost_bottleneck.5} parent=5 // pred_fallthru
      _
    %p162 = scmp.le.s32.totalorder 1, %s10
    %p163 = scmp.lt.s32.totalorder %s10, 3
    %p164 = pnand %p162, %p163
    %p165 = pneg %p164
    // Predicated region
    $region25: #{ghost_bottleneck.5} parent=5 // pred_check
      _
    $region26: #{ghost_bottleneck.5} parent=5 // pred_check_branch
      %167 = sbr.rel (%p164) target = $region28
    $region27: #{ghost_bottleneck.5} parent=5 // pred_region
      %s168 = ssub.s32 %s10, 1
      %s169 = smul.u32 2, %s20
      %p170 = scmp.lt.s32.totalorder %s19, 1
      %s171 = scalar_select %p170, %s19, 1
      %p172 = scmp.lt.s32.totalorder %s169, 1
      %s173 = scalar_select %p172, %s169, 1
      %s174 = smul.addr %s171, 4
      %s175 = sadd.s32 %s173, %s174
      %s176 = smul.addr %s175, 8
      %s177 = scalar_lea.vmem %s0, %s176
      %p178 = pneg %p50
      %p179 = pneg %p47
      %p180 = pneg %p71
      %p181 = pneg %p68
      %p182 = pneg %p99
      %p183 = pneg %p96
      %s184 = smul.u32 2, %s20
      %p185 = scmp.lt.s32.totalorder %s19, 1
      %s186 = scalar_select %p185, %s19, 1
      %p187 = scmp.lt.s32.totalorder %s184, 1
      %s188 = scalar_select %p187, %s184, 1
      %s189 = smul.addr %s186, 2
      %s190 = sadd.s32 %s188, %s189
      %s191 = smul.addr %s190, 4
      %s192 = scalar_lea.vmem %s2, %s191
      %p193 = pneg %p127
      %p194 = pneg %p124
      %p195 = scmp.lt.s32.totalorder %s19, 1
      %s196 = scalar_select %p195, %s19, 1
      %p197 = scmp.lt.s32.totalorder %s20, 0
      %s198 = scalar_select %p197, %s20, 0
      %s199 = sadd.s32 %s198, %s196
      %s200 = smul.addr %s199, 4
      %s201 = scalar_lea.vmem %s3, %s200
      %s202 = smul.u32 2, %s20
      %p203 = scmp.lt.s32.totalorder %s19, 1
      %s204 = scalar_select %p203, %s19, 1
      %p205 = scmp.lt.s32.totalorder %s202, 1
      %s206 = scalar_select %p205, %s202, 1
      %s207 = smul.addr %s204, 4
      %s208 = sadd.s32 %s206, %s207
      %s209 = smul.addr %s208, 8
      %s210 = scalar_lea.vmem %s0, %s209
      %s211 = smul.u32 2, %s20
      %s212 = smul.u32 2, %s20
      %p213 = scmp.lt.s32.totalorder %s19, 1
      %s214 = scalar_select %p213, %s19, 1
      %p215 = scmp.lt.s32.totalorder %s212, 1
      %s216 = scalar_select %p215, %s212, 1
      %s217 = smul.addr %s214, 2
      %s218 = sadd.s32 %s216, %s217
      %s219 = smul.addr %s218, 4
      %s220 = scalar_lea.vmem %s2, %s219
      %s221 = smul.u32 2, %s20
      %p222 = scmp.lt.s32.totalorder %s19, 1
      %s223 = scalar_select %p222, %s19, 1
      %p224 = scmp.lt.s32.totalorder %s20, 0
      %s225 = scalar_select %p224, %s20, 0
      %s226 = sadd.s32 %s225, %s223
      %s227 = smul.addr %s226, 4
      %s228 = scalar_lea.vmem %s3, %s227
      %v229 = vld [vmem:[%s210] sm:$0xff]
      %v230 = vld [vmem:[%s210 + $0x8] sm:$0xff]
      %v231 = vld [vmem:[%s210 + $0x10] sm:$0xff]
      %v232 = vld [vmem:[%s210 + $0x18] sm:$0xff]
      %v233 = vld [vmem:[%s1] sm:$0xf]
      %vm234 = vcmask 130048
      %v236 = vsel %vm234, %v233, 0
      %238 = vmatprep.subr.mxu0 %v230
      %239 = vmatpush1.msra.mxu0 %v229
      %240 = vmatprep.subr.mxu0 %v232
      %241 = vmatpush1.msra.mxu0 %v231
      %242 = vmatprep.subr.mxu0 0.0
      %243 = vmatpush1.msra.mxu0 0.0
      %244 = vmatprep.subr.mxu0 0.0
      %245 = vmatpush1.msra.mxu0 0.0
      %246 = vmatprep.subr.mxu0 0.0
      %247 = vmatpush1.msra.mxu0 0.0
      %248 = vmatprep.subr.mxu0 0.0
      %249 = vmatpush1.msra.mxu0 0.0
      %250 = vmatprep.subr.mxu0 0.0
      %251 = vmatpush1.msra.mxu0 0.0
      %252 = vmatprep.subr.mxu0 0.0
      %253 = vmatpush1.msra.mxu0 0.0
      %254 = vmatprep.subr.mxu0 0.0
      %255 = vmatpush1.msra.mxu0 0.0
      %256 = vmatprep.subr.mxu0 0.0
      %257 = vmatpush1.msra.mxu0 0.0
      %258 = vmatprep.subr.mxu0 0.0
      %259 = vmatpush1.msra.mxu0 0.0
      %260 = vmatprep.subr.mxu0 0.0
      %261 = vmatpush1.msra.mxu0 0.0
      %262 = vmatprep.subr.mxu0 0.0
      %263 = vmatpush1.msra.mxu0 0.0
      %264 = vmatprep.subr.mxu0 0.0
      %265 = vmatpush1.msra.mxu0 0.0
      %266 = vmatprep.subr.mxu0 0.0
      %267 = vmatpush1.msra.mxu0 0.0
      %268 = vmatprep.subr.mxu0 0.0
      %269 = vmatpush1.msra.mxu0 0.0
      %270 = vmatprep.subr.mxu0 0.0
      %271 = vmatpush1.msra.mxu0 0.0
      %272 = vmatprep.subr.mxu0 0.0
      %273 = vmatpush1.msra.mxu0 0.0
      %274 = vmatprep.subr.mxu0 0.0
      %275 = vmatpush1.msra.mxu0 0.0
      %276 = vmatprep.subr.mxu0 0.0
      %277 = vmatpush1.msra.mxu0 0.0
      %278 = vmatprep.subr.mxu0 0.0
      %279 = vmatpush1.msra.mxu0 0.0
      %280 = vmatprep.subr.mxu0 0.0
      %281 = vmatpush1.msra.mxu0 0.0
      %282 = vmatprep.subr.mxu0 0.0
      %283 = vmatpush1.msra.mxu0 0.0
      %284 = vmatprep.subr.mxu0 0.0
      %285 = vmatpush1.msra.mxu0 0.0
      %286 = vmatprep.subr.mxu0 0.0
      %287 = vmatpush1.msra.mxu0 0.0
      %288 = vmatprep.subr.mxu0 0.0
      %289 = vmatpush1.msra.mxu0 0.0
      %290 = vmatprep.subr.mxu0 0.0
      %291 = vmatpush1.msra.mxu0 0.0
      %292 = vmatprep.subr.mxu0 0.0
      %293 = vmatpush1.msra.mxu0 0.0
      %294 = vmatprep.subr.mxu0 0.0
      %295 = vmatpush1.msra.mxu0 0.0
      %296 = vmatprep.subr.mxu0 0.0
      %297 = vmatpush1.msra.mxu0 0.0
      %298 = vmatprep.subr.mxu0 0.0
      %299 = vmatpush1.msra.mxu0 0.0
      %300 = vmatprep.subr.mxu0 0.0
      %301 = vmatpush1.msra.mxu0 0.0
      %302 = vmatprep.mubr.f32.mxu0 0.0
      %303 = vmatmul.mubr.f32.gmra.mrb[0].mxu0 %v236
      %v304 = vpop.f32.mrb[0].mxu0
      %v305 = vadd.f32 0.0, %v304
      %v306 = vpop.f32.mrb[0].mxu0
      %v307 = vadd.f32 0.0, %v306
      %308 = vdwg.mxu0
      %v311 = vcombine.low %v305, %v307
      %313 = vst [vmem:[%s220] sm:$0xff] %v311
      %vm314 = vcmask 1043456
      %v315 = vsel %vm314, %v305, 0.0
      %v316 = vsel %vm314, %v307, 0.0
      %v317 = vadd.f32 %v315, %v316
      %318 = vadd.xlane.f32.xlu0 %v317
      %v319 = vpop.xlane.xlu0 %318
      %v320 = vmul.f32 %v305, %v305
      %v321 = vmul.f32 %v307, %v307
      %v322 = vsel %vm314, %v320, 0.0
      %v323 = vsel %vm314, %v321, 0.0
      %v324 = vadd.f32 %v322, %v323
      %325 = vadd.xlane.f32.xlu0 %v324
      %v326 = vpop.xlane.xlu0 %325
      %vm327 = vcmask 7168
      %v328 = vsel %vm327, %v319, %v326
      %vm329 = vcmask 11264
      %330 = vst.msk [vmem:[%s228] sm:$0xf] %vm329, %v328
      %s331 = smul.u32 2, %s20
      %p332 = scmp.lt.s32.totalorder %s19, 1
      %s333 = scalar_select %p332, %s19, 1
      %p334 = scmp.lt.s32.totalorder %s331, 1
      %s335 = scalar_select %p334, %s331, 1
      %s336 = smul.addr %s333, 2
      %s337 = sadd.s32 %s335, %s336
      %s338 = smul.addr %s337, 4
      %s339 = scalar_lea.vmem %s2, %s338
      %p340 = scmp.lt.s32.totalorder %s19, 1
      %s341 = scalar_select %p340, %s19, 1
      %p342 = scmp.lt.s32.totalorder %s20, 0
      %s343 = scalar_select %p342, %s20, 0
      %s344 = sadd.s32 %s343, %s341
      %s345 = smul.addr %s344, 4
      %s346 = scalar_lea.vmem %s3, %s345
      // Predicated region
      $region29: #{ghost_bottleneck.5} parent=27 // pred_check
        %p347 = pneg %p96
      $region30: #{ghost_bottleneck.5} parent=27 // pred_check_branch
        %349 = sbr.rel (%p347) target = $region32
      $region31: #{ghost_bottleneck.5} parent=27 // pred_region
        %s350 = smul.u32 2, %s20
      $region32: #{ghost_bottleneck.5} parent=27 // pred_fallthru
        _
      // Predicated region
      $region33: #{ghost_bottleneck.5} parent=27 // pred_check
        %p351 = pneg %p124
      $region34: #{ghost_bottleneck.5} parent=27 // pred_check_branch
        %353 = sbr.rel (%p351) target = $region36
      $region35: #{ghost_bottleneck.5} parent=27 // pred_region
        _
      $region36: #{ghost_bottleneck.5} parent=27 // pred_fallthru
        _
    $region28: #{ghost_bottleneck.5} parent=5 // pred_fallthru
      _
    %p354 = scmp.le.s32.totalorder 2, %s10
    // Predicated region
    $region37: #{ghost_bottleneck.5} parent=5 // pred_check
      %p355 = pneg %p354
    $region38: #{ghost_bottleneck.5} parent=5 // pred_check_branch
      %357 = sbr.rel (%p355) target = $region40
    $region39: #{ghost_bottleneck.5} parent=5 // pred_region
      %s358 = ssub.s32 %s10, 2
      // Predicated region
      $region41: #{ghost_bottleneck.5} parent=39 // pred_check
        %p359 = pneg %p102
      $region42: #{ghost_bottleneck.5} parent=39 // pred_check_branch
        %361 = sbr.rel (%p359) target = $region44
      $region43: #{ghost_bottleneck.5} parent=39 // pred_region
        %s362 = smul.u32 2, %s22
        %p363 = scmp.lt.s32.totalorder %s21, 1
        %s364 = scalar_select %p363, %s21, 1
        %p365 = scmp.lt.s32.totalorder %s362, 1
        %s366 = scalar_select %p365, %s362, 1
        %s367 = smul.addr %s364, 2
        %s368 = sadd.s32 %s366, %s367
        %s369 = smul.addr %s368, 4
        %s370 = scalar_lea.vmem %s2, %s369
      $region44: #{ghost_bottleneck.5} parent=39 // pred_fallthru
        _
      // Predicated region
      $region45: #{ghost_bottleneck.5} parent=39 // pred_check
        %p371 = pneg %p130
      $region46: #{ghost_bottleneck.5} parent=39 // pred_check_branch
        %373 = sbr.rel (%p371) target = $region48
      $region47: #{ghost_bottleneck.5} parent=39 // pred_region
        %p374 = scmp.lt.s32.totalorder %s21, 1
        %s375 = scalar_select %p374, %s21, 1
        %p376 = scmp.lt.s32.totalorder %s22, 0
        %s377 = scalar_select %p376, %s22, 0
        %s378 = sadd.s32 %s377, %s375
        %s379 = smul.addr %s378, 4
        %s380 = scalar_lea.vmem %s3, %s379
      $region48: #{ghost_bottleneck.5} parent=39 // pred_fallthru
        _
    $region40: #{ghost_bottleneck.5} parent=5 // pred_fallthru
      _
  $region6: #{ghost_bottleneck.5} parent=0 // loop_footer
    %s14 = sadd.s32 1, %s10
  $region7: #{ghost_bottleneck.5} parent=0 // loop_footer_branch
    %9 = sbr.rel target = $region3
  $region8: #{ghost_bottleneck.5} parent=0 // loop_exit
    _

// kernel: ghost_bottleneck.7
$region0: #{ghost_bottleneck.7}
  #allocation0 [shape = 'u32[]', space=smem, size = 0x4, offset = 0x4, fixed_abs, tag = 'smem constant byte address 0x4 - core index']
  #allocation1 [shape = 'u32[144,128]{1,0:T(1,128)}', space=vmem, size = 0x12000, scoped, tag = 'internal scratch']
  %s0 = inlined_call_operand.vmem [shape: f32[2,4,256], index: 0, kind: input, shape index: {}]
  %s1 = inlined_call_operand.vmem [shape: f32[2,4,256], index: 1, kind: input, shape index: {}]
  %s2 = inlined_call_operand.vmem [shape: f32[1,256], index: 2, kind: input, shape index: {}]
  %s3 = inlined_call_operand.vmem [shape: f32[4,1], index: 3, kind: input, shape index: {}]
  %s4 = inlined_call_operand.vmem [shape: f32[4,1], index: 4, kind: input, shape index: {}]
  %s5 = inlined_call_operand.vmem [shape: f32[8,4], index: 5, kind: input, shape index: {}]
  %s6 = inlined_call_operand.vmem [shape: f32[8,4], index: 6, kind: input, shape index: {}]
  %s7 = inlined_call_operand.vmem [shape: f32[2,8,256], index: 7, kind: output, shape index: {0}]
  %s8 = inlined_call_operand.vmem [shape: f32[2,1,8,2], index: 8, kind: output, shape index: {1}]
  %9 = xla_tuple %s7, %s8
  %s10 = sld [smem:[#allocation0]]
  $region69: #{ghost_bottleneck.7} parent=0
    _
  %s12 = ssub.s32 1, %s10
  %s13 = scalar_select 0, %s12, %s10
  loop: start=0, step=1, limit=4
  $region2: #{ghost_bottleneck.7} parent=0 // loop_pre_header
    _
  $region3: #{ghost_bottleneck.7} parent=0 // loop_header
    %s15 = sphi 0, %s19
    %p16 = scmp.ge.s32.totalorder %s15, 4
    %s22 = sphi 0, %s34
    %s23 = sphi 0, %s30
    %s24 = sphi 0, %s22
    %s25 = sphi 0, %s23
    %s26 = sphi 0, %s24
    %s27 = sphi 0, %s25
    %s39 = sphi 0, %s41
    %s42 = sphi 0, %s39
    %s43 = sphi 0, %s42
    %s59 = sphi 0, %s43
    %s67 = sphi 0, %s69
    %s70 = sphi 0, %s67
    %s71 = sphi 0, %s70
    %s87 = sphi 0, %s71
    %s93 = sphi 0, %s95
    %s96 = sphi 0, %s93
    %s97 = sphi 0, %s96
    %s113 = sphi 0, %s97
    %s117 = sphi 0, %s117
    %s119 = sphi 0, %s117
    %s120 = sphi 0, %s119
    %s134 = sphi 0, %s120
    %s138 = sphi 0, %s138
    %s140 = sphi 0, %s138
    %s141 = sphi 0, %s140
    %s155 = sphi 0, %s141
    %s159 = sphi 0, %s159
    %s161 = sphi 0, %s159
    %s162 = sphi 0, %s161
    %s176 = sphi 0, %s162
    %s180 = sphi 0, %s180
    %s182 = sphi 0, %s180
    %s183 = sphi 0, %s182
    %s197 = sphi 0, %s183
    %s205 = sphi 0, %s207
    %s208 = sphi 0, %s205
    %s209 = sphi 0, %s208
    %s225 = sphi 0, %s209
    %s233 = sphi 0, %s235
    %s236 = sphi 0, %s233
    %s237 = sphi 0, %s236
    %s253 = sphi 0, %s237
  $region4: #{ghost_bottleneck.7} parent=0 // loop_header_branch
    %18 = sbr.rel (%p16) target = $region8
  $region5: #{ghost_bottleneck.7} parent=0 // loop_body
    %s20 = ssub.s32 %s15, 1
    %s21 = ssub.s32 %s15, 2
    %s28 = sadd.s32 1, %s23
    %p29 = scmp.ge.s32.totalorder %s28, 1
    %s30 = scalar_select %p29, 0, %s28
    %s31 = sadd.s32 1, %s22
    %s32 = scalar_select %p29, %s31, %s22
    %p33 = scmp.ge.s32.totalorder %s32, 2
    %s34 = scalar_select %p33, 0, %s32
    %s35 = ssub.s32 %s22, %s34
    %s36 = ssub.s32 %s23, %s30
    %s37 = sor.u32 %s35, %s36
    %p38 = scmp.eq.s32.totalorder %s37, 0
    %s40 = sadd.s32 %s39, 1
    %s41 = scalar_select %p38, %s39, %s40
    %p44 = pneg %p38
    %p45 = scmp.eq.s32.totalorder %s15, 1
    %p46 = por %p44, %p45
    %p47 = scmp.ne.s32.totalorder %s39, %s42
    %p48 = scmp.eq.s32.totalorder %s15, 0
    %p49 = por %p47, %p48
    %p50 = scmp.ne.s32.totalorder %s39, %s42
    %p51 = scmp.eq.s32.totalorder %s20, 1
    %p52 = por %p50, %p51
    %p53 = scmp.ne.s32.totalorder %s42, %s43
    %p54 = scmp.eq.s32.totalorder %s20, 0
    %p55 = por %p53, %p54
    %p56 = scmp.ne.s32.totalorder %s42, %s43
    %p57 = scmp.eq.s32.totalorder %s21, 1
    %p58 = por %p56, %p57
    %p60 = scmp.ne.s32.totalorder %s43, %s59
    %p61 = scmp.eq.s32.totalorder %s21, 0
    %p62 = por %p60, %p61
    %s63 = ssub.s32 %s22, %s34
    %s64 = ssub.s32 %s23, %s30
    %s65 = sor.u32 %s63, %s64
    %p66 = scmp.eq.s32.totalorder %s65, 0
    %s68 = sadd.s32 %s67, 1
    %s69 = scalar_select %p66, %s67, %s68
    %p72 = pneg %p66
    %p73 = scmp.eq.s32.totalorder %s15, 1
    %p74 = por %p72, %p73
    %p75 = scmp.ne.s32.totalorder %s67, %s70
    %p76 = scmp.eq.s32.totalorder %s15, 0
    %p77 = por %p75, %p76
    %p78 = scmp.ne.s32.totalorder %s67, %s70
    %p79 = scmp.eq.s32.totalorder %s20, 1
    %p80 = por %p78, %p79
    %p81 = scmp.ne.s32.totalorder %s70, %s71
    %p82 = scmp.eq.s32.totalorder %s20, 0
    %p83 = por %p81, %p82
    %p84 = scmp.ne.s32.totalorder %s70, %s71
    %p85 = scmp.eq.s32.totalorder %s21, 1
    %p86 = por %p84, %p85
    %p88 = scmp.ne.s32.totalorder %s71, %s87
    %p89 = scmp.eq.s32.totalorder %s21, 0
    %p90 = por %p88, %p89
    %s91 = ssub.s32 %s23, %s30
    %p92 = scmp.eq.s32.totalorder %s91, 0
    %s94 = sadd.s32 %s93, 1
    %s95 = scalar_select %p92, %s93, %s94
    %p98 = pneg %p92
    %p99 = scmp.eq.s32.totalorder %s15, 1
    %p100 = por %p98, %p99
    %p101 = scmp.ne.s32.totalorder %s93, %s96
    %p102 = scmp.eq.s32.totalorder %s15, 0
    %p103 = por %p101, %p102
    %p104 = scmp.ne.s32.totalorder %s93, %s96
    %p105 = scmp.eq.s32.totalorder %s20, 1
    %p106 = por %p104, %p105
    %p107 = scmp.ne.s32.totalorder %s96, %s97
    %p108 = scmp.eq.s32.totalorder %s20, 0
    %p109 = por %p107, %p108
    %p110 = scmp.ne.s32.totalorder %s96, %s97
    %p111 = scmp.eq.s32.totalorder %s21, 1
    %p112 = por %p110, %p111
    %p114 = scmp.ne.s32.totalorder %s97, %s113
    %p115 = scmp.eq.s32.totalorder %s21, 0
    %p116 = por %p114, %p115
    %s118 = sadd.s32 %s117, 1
    %p121 = scmp.eq.s32.totalorder %s15, 1
    %p122 = scmp.ne.s32.totalorder %s117, %s119
    %p123 = scmp.eq.s32.totalorder %s15, 0
    %p124 = por %p122, %p123
    %p125 = scmp.ne.s32.totalorder %s117, %s119
    %p126 = scmp.eq.s32.totalorder %s20, 1
    %p127 = por %p125, %p126
    %p128 = scmp.ne.s32.totalorder %s119, %s120
    %p129 = scmp.eq.s32.totalorder %s20, 0
    %p130 = por %p128, %p129
    %p131 = scmp.ne.s32.totalorder %s119, %s120
    %p132 = scmp.eq.s32.totalorder %s21, 1
    %p133 = por %p131, %p132
    %p135 = scmp.ne.s32.totalorder %s120, %s134
    %p136 = scmp.eq.s32.totalorder %s21, 0
    %p137 = por %p135, %p136
    %s139 = sadd.s32 %s138, 1
    %p142 = scmp.eq.s32.totalorder %s15, 1
    %p143 = scmp.ne.s32.totalorder %s138, %s140
    %p144 = scmp.eq.s32.totalorder %s15, 0
    %p145 = por %p143, %p144
    %p146 = scmp.ne.s32.totalorder %s138, %s140
    %p147 = scmp.eq.s32.totalorder %s20, 1
    %p148 = por %p146, %p147
    %p149 = scmp.ne.s32.totalorder %s140, %s141
    %p150 = scmp.eq.s32.totalorder %s20, 0
    %p151 = por %p149, %p150
    %p152 = scmp.ne.s32.totalorder %s140, %s141
    %p153 = scmp.eq.s32.totalorder %s21, 1
    %p154 = por %p152, %p153
    %p156 = scmp.ne.s32.totalorder %s141, %s155
    %p157 = scmp.eq.s32.totalorder %s21, 0
    %p158 = por %p156, %p157
    %s160 = sadd.s32 %s159, 1
    %p163 = scmp.eq.s32.totalorder %s15, 1
    %p164 = scmp.ne.s32.totalorder %s159, %s161
    %p165 = scmp.eq.s32.totalorder %s15, 0
    %p166 = por %p164, %p165
    %p167 = scmp.ne.s32.totalorder %s159, %s161
    %p168 = scmp.eq.s32.totalorder %s20, 1
    %p169 = por %p167, %p168
    %p170 = scmp.ne.s32.totalorder %s161, %s162
    %p171 = scmp.eq.s32.totalorder %s20, 0
    %p172 = por %p170, %p171
    %p173 = scmp.ne.s32.totalorder %s161, %s162
    %p174 = scmp.eq.s32.totalorder %s21, 1
    %p175 = por %p173, %p174
    %p177 = scmp.ne.s32.totalorder %s162, %s176
    %p178 = scmp.eq.s32.totalorder %s21, 0
    %p179 = por %p177, %p178
    %s181 = sadd.s32 %s180, 1
    %p184 = scmp.eq.s32.totalorder %s15, 1
    %p185 = scmp.ne.s32.totalorder %s180, %s182
    %p186 = scmp.eq.s32.totalorder %s15, 0
    %p187 = por %p185, %p186
    %p188 = scmp.ne.s32.totalorder %s180, %s182
    %p189 = scmp.eq.s32.totalorder %s20, 1
    %p190 = por %p188, %p189
    %p191 = scmp.ne.s32.totalorder %s182, %s183
    %p192 = scmp.eq.s32.totalorder %s20, 0
    %p193 = por %p191, %p192
    %p194 = scmp.ne.s32.totalorder %s182, %s183
    %p195 = scmp.eq.s32.totalorder %s21, 1
    %p196 = por %p194, %p195
    %p198 = scmp.ne.s32.totalorder %s183, %s197
    %p199 = scmp.eq.s32.totalorder %s21, 0
    %p200 = por %p198, %p199
    %s201 = ssub.s32 %s22, %s34
    %s202 = ssub.s32 %s23, %s30
    %s203 = sor.u32 %s201, %s202
    %p204 = scmp.eq.s32.totalorder %s203, 0
    %s206 = sadd.s32 %s205, 1
    %s207 = scalar_select %p204, %s205, %s206
    %p210 = pneg %p204
    %p211 = scmp.eq.s32.totalorder %s15, 1
    %p212 = por %p210, %p211
    %p213 = scmp.ne.s32.totalorder %s205, %s208
    %p214 = scmp.eq.s32.totalorder %s15, 0
    %p215 = por %p213, %p214
    %p216 = scmp.ne.s32.totalorder %s205, %s208
    %p217 = scmp.eq.s32.totalorder %s20, 1
    %p218 = por %p216, %p217
    %p219 = scmp.ne.s32.totalorder %s208, %s209
    %p220 = scmp.eq.s32.totalorder %s20, 0
    %p221 = por %p219, %p220
    %p222 = scmp.ne.s32.totalorder %s208, %s209
    %p223 = scmp.eq.s32.totalorder %s21, 1
    %p224 = por %p222, %p223
    %p226 = scmp.ne.s32.totalorder %s209, %s225
    %p227 = scmp.eq.s32.totalorder %s21, 0
    %p228 = por %p226, %p227
    %s229 = ssub.s32 %s22, %s34
    %s230 = ssub.s32 %s23, %s30
    %s231 = sor.u32 %s229, %s230
    %p232 = scmp.eq.s32.totalorder %s231, 0
    %s234 = sadd.s32 %s233, 1
    %s235 = scalar_select %p232, %s233, %s234
    %p238 = pneg %p232
    %p239 = scmp.eq.s32.totalorder %s15, 1
    %p240 = por %p238, %p239
    %p241 = scmp.ne.s32.totalorder %s233, %s236
    %p242 = scmp.eq.s32.totalorder %s15, 0
    %p243 = por %p241, %p242
    %p244 = scmp.ne.s32.totalorder %s233, %s236
    %p245 = scmp.eq.s32.totalorder %s20, 1
    %p246 = por %p244, %p245
    %p247 = scmp.ne.s32.totalorder %s236, %s237
    %p248 = scmp.eq.s32.totalorder %s20, 0
    %p249 = por %p247, %p248
    %p250 = scmp.ne.s32.totalorder %s236, %s237
    %p251 = scmp.eq.s32.totalorder %s21, 1
    %p252 = por %p250, %p251
    %p254 = scmp.ne.s32.totalorder %s237, %s253
    %p255 = scmp.eq.s32.totalorder %s21, 0
    %p256 = por %p254, %p255
    %p257 = scmp.le.s32.totalorder 1, %s15
    %p258 = scmp.lt.s32.totalorder %s15, 3
    %p259 = pnand %p257, %p258
    %p260 = pneg %p259
    // Predicated region
    $region9: #{ghost_bottleneck.7} parent=5 // pred_check
      _
    $region10: #{ghost_bottleneck.7} parent=5 // pred_check_branch
      %262 = sbr.rel (%p259) target = $region12
    $region11: #{ghost_bottleneck.7} parent=5 // pred_region
      %s263 = ssub.s32 %s15, 1
      // Predicated region
      $region13: #{ghost_bottleneck.7} parent=11 // pred_check
        %p264 = pneg %p109
      $region14: #{ghost_bottleneck.7} parent=11 // pred_check_branch
        %266 = sbr.rel (%p264) target = $region16
      $region15: #{ghost_bottleneck.7} parent=11 // pred_region
        %s267 = smul.u32 2, %s25
        %p268 = scmp.lt.s32.totalorder %s267, 1
        %s269 = scalar_select %p268, %s267, 1
        %s270 = scalar_lea.vmem %s2, %s269
        %s271 = smul.u32 2, %s25
      $region16: #{ghost_bottleneck.7} parent=11 // pred_fallthru
        _
      // Predicated region
      $region17: #{ghost_bottleneck.7} parent=11 // pred_check
        %p272 = pneg %p130
      $region18: #{ghost_bottleneck.7} parent=11 // pred_check_branch
        %274 = sbr.rel (%p272) target = $region20
      $region19: #{ghost_bottleneck.7} parent=11 // pred_region
        _
      $region20: #{ghost_bottleneck.7} parent=11 // pred_fallthru
        _
      // Predicated region
      $region21: #{ghost_bottleneck.7} parent=11 // pred_check
        %p275 = pneg %p151
      $region22: #{ghost_bottleneck.7} parent=11 // pred_check_branch
        %277 = sbr.rel (%p275) target = $region24
      $region23: #{ghost_bottleneck.7} parent=11 // pred_region
        _
      $region24: #{ghost_bottleneck.7} parent=11 // pred_fallthru
        _
      // Predicated region
      $region25: #{ghost_bottleneck.7} parent=11 // pred_check
        %p278 = pneg %p172
      $region26: #{ghost_bottleneck.7} parent=11 // pred_check_branch
        %280 = sbr.rel (%p278) target = $region28
      $region27: #{ghost_bottleneck.7} parent=11 // pred_region
        _
      $region28: #{ghost_bottleneck.7} parent=11 // pred_fallthru
        _
      // Predicated region
      $region29: #{ghost_bottleneck.7} parent=11 // pred_check
        %p281 = pneg %p193
      $region30: #{ghost_bottleneck.7} parent=11 // pred_check_branch
        %283 = sbr.rel (%p281) target = $region32
      $region31: #{ghost_bottleneck.7} parent=11 // pred_region
        _
      $region32: #{ghost_bottleneck.7} parent=11 // pred_fallthru
        _
    $region12: #{ghost_bottleneck.7} parent=5 // pred_fallthru
      _
    %p284 = scmp.lt.s32.totalorder %s15, 2
    // Predicated region
    $region33: #{ghost_bottleneck.7} parent=5 // pred_check
      %p285 = pneg %p284
    $region34: #{ghost_bottleneck.7} parent=5 // pred_check_branch
      %287 = sbr.rel (%p285) target = $region36
    $region35: #{ghost_bottleneck.7} parent=5 // pred_region
      // Predicated region
      $region37: #{ghost_bottleneck.7} parent=35 // pred_check
        %p288 = pneg %p49
      $region38: #{ghost_bottleneck.7} parent=35 // pred_check_branch
        %290 = sbr.rel (%p288) target = $region40
      $region39: #{ghost_bottleneck.7} parent=35 // pred_region
        %s291 = smul.u32 2, %s23
        %p292 = scmp.lt.s32.totalorder %s22, 1
        %s293 = scalar_select %p292, %s22, 1
        %p294 = scmp.lt.s32.totalorder %s291, 1
        %s295 = scalar_select %p294, %s291, 1
        %s296 = smul.addr %s293, 2
        %s297 = sadd.s32 %s295, %s296
        %s298 = smul.addr %s297, 4
        %s299 = scalar_lea.vmem %s0, %s298
        %s300 = smul.u32 2, %s23
      $region40: #{ghost_bottleneck.7} parent=35 // pred_fallthru
        _
      // Predicated region
      $region41: #{ghost_bottleneck.7} parent=35 // pred_check
        %p301 = pneg %p77
      $region42: #{ghost_bottleneck.7} parent=35 // pred_check_branch
        %303 = sbr.rel (%p301) target = $region44
      $region43: #{ghost_bottleneck.7} parent=35 // pred_region
        %s304 = smul.u32 2, %s23
        %p305 = scmp.lt.s32.totalorder %s22, 1
        %s306 = scalar_select %p305, %s22, 1
        %p307 = scmp.lt.s32.totalorder %s304, 1
        %s308 = scalar_select %p307, %s304, 1
        %s309 = smul.addr %s306, 2
        %s310 = sadd.s32 %s308, %s309
        %s311 = smul.addr %s310, 4
        %s312 = scalar_lea.vmem %s1, %s311
        %s313 = smul.u32 2, %s23
      $region44: #{ghost_bottleneck.7} parent=35 // pred_fallthru
        _
    $region36: #{ghost_bottleneck.7} parent=5 // pred_fallthru
      _
    %p314 = scmp.le.s32.totalorder 1, %s15
    %p315 = scmp.lt.s32.totalorder %s15, 3
    %p316 = pnand %p314, %p315
    %p317 = pneg %p316
    // Predicated region
    $region45: #{ghost_bottleneck.7} parent=5 // pred_check
      _
    $region46: #{ghost_bottleneck.7} parent=5 // pred_check_branch
      %319 = sbr.rel (%p316) target = $region48
    $region47: #{ghost_bottleneck.7} parent=5 // pred_region
      %s320 = ssub.s32 %s15, 1
      %s321 = smul.u32 2, %s25
      %p322 = scmp.lt.s32.totalorder %s24, 1
      %s323 = scalar_select %p322, %s24, 1
      %p324 = scmp.lt.s32.totalorder %s321, 1
      %s325 = scalar_select %p324, %s321, 1
      %s326 = smul.addr %s323, 2
      %s327 = sadd.s32 %s325, %s326
      %s328 = smul.addr %s327, 4
      %s329 = scalar_lea.vmem %s0, %s328
      %p330 = pneg %p55
      %p331 = pneg %p52
      %s332 = smul.u32 2, %s25
      %p333 = scmp.lt.s32.totalorder %s24, 1
      %s334 = scalar_select %p333, %s24, 1
      %p335 = scmp.lt.s32.totalorder %s332, 1
      %s336 = scalar_select %p335, %s332, 1
      %s337 = smul.addr %s334, 2
      %s338 = sadd.s32 %s336, %s337
      %s339 = smul.addr %s338, 4
      %s340 = scalar_lea.vmem %s1, %s339
      %p341 = pneg %p83
      %p342 = pneg %p80
      %s343 = smul.u32 2, %s25
      %p344 = scmp.lt.s32.totalorder %s343, 1
      %s345 = scalar_select %p344, %s343, 1
      %s346 = scalar_lea.vmem %s2, %s345
      %p347 = pneg %p109
      %p348 = pneg %p106
      %p349 = pneg %p130
      %p350 = pneg %p127
      %p351 = pneg %p151
      %p352 = pneg %p148
      %p353 = pneg %p172
      %p354 = pneg %p169
      %p355 = pneg %p193
      %p356 = pneg %p190
      %p357 = pneg %p221
      %p358 = pneg %p218
      %s359 = smul.u32 2, %s25
      %p360 = scmp.lt.s32.totalorder %s24, 1
      %s361 = scalar_select %p360, %s24, 1
      %p362 = scmp.lt.s32.totalorder %s359, 1
      %s363 = scalar_select %p362, %s359, 1
      %s364 = smul.addr %s361, 2
      %s365 = sadd.s32 %s363, %s364
      %s366 = smul.addr %s365, 8
      %s367 = scalar_lea.vmem %s7, %s366
      %p368 = pneg %p249
      %p369 = pneg %p246
      %p370 = scmp.lt.s32.totalorder %s24, 1
      %s371 = scalar_select %p370, %s24, 1
      %p372 = scmp.lt.s32.totalorder %s25, 0
      %s373 = scalar_select %p372, %s25, 0
      %s374 = sadd.s32 %s373, %s371
      %s375 = smul.addr %s374, 8
      %s376 = scalar_lea.vmem %s8, %s375
      %s377 = smul.u32 2, %s25
      %p378 = scmp.lt.s32.totalorder %s24, 1
      %s379 = scalar_select %p378, %s24, 1
      %p380 = scmp.lt.s32.totalorder %s377, 1
      %s381 = scalar_select %p380, %s377, 1
      %s382 = smul.addr %s379, 2
      %s383 = sadd.s32 %s381, %s382
      %s384 = smul.addr %s383, 4
      %s385 = scalar_lea.vmem %s0, %s384
      %s386 = smul.u32 2, %s25
      %s387 = smul.u32 2, %s25
      %p388 = scmp.lt.s32.totalorder %s24, 1
      %s389 = scalar_select %p388, %s24, 1
      %p390 = scmp.lt.s32.totalorder %s387, 1
      %s391 = scalar_select %p390, %s387, 1
      %s392 = smul.addr %s389, 2
      %s393 = sadd.s32 %s391, %s392
      %s394 = smul.addr %s393, 4
      %s395 = scalar_lea.vmem %s1, %s394
      %s396 = smul.u32 2, %s25
      %s397 = smul.u32 2, %s25
      %p398 = scmp.lt.s32.totalorder %s397, 1
      %s399 = scalar_select %p398, %s397, 1
      %s400 = scalar_lea.vmem %s2, %s399
      %s401 = smul.u32 2, %s25
      %s402 = smul.u32 2, %s25
      %p403 = scmp.lt.s32.totalorder %s24, 1
      %s404 = scalar_select %p403, %s24, 1
      %p405 = scmp.lt.s32.totalorder %s402, 1
      %s406 = scalar_select %p405, %s402, 1
      %s407 = smul.addr %s404, 2
      %s408 = sadd.s32 %s406, %s407
      %s409 = smul.addr %s408, 8
      %s410 = scalar_lea.vmem %s7, %s409
      %s411 = smul.u32 2, %s25
      %p412 = scmp.lt.s32.totalorder %s24, 1
      %s413 = scalar_select %p412, %s24, 1
      %p414 = scmp.lt.s32.totalorder %s25, 0
      %s415 = scalar_select %p414, %s25, 0
      %s416 = sadd.s32 %s415, %s413
      %s417 = smul.addr %s416, 8
      %s418 = scalar_lea.vmem %s8, %s417
      %v419 = vld [vmem:[%s385] sm:$0xff]
      %v420 = vld [vmem:[%s395] sm:$0xff]
      %v421 = vld [vmem:[%s3] sm:$0xf]
      %423 = vset.pattern.permute.xlu0 0
      %424 = vperm.xlu0 %423, %v421
      %v425 = vpop.permute.xlu0 %424
      %v427 = vunpack.c.l.s4 839922192
      %v428 = vunpack.c.0.s8 %v427
      %v429 = vlaneseq
      %v430 = vshrl.u32 %v429, 7
      %v431 = vsub.s32 %v428, %v430
      %v432 = vrot.slane %v425, %v431
      %v434 = vmul.f32 %v420, %v432
      %v435 = vld [vmem:[%s4] sm:$0xf]
      %437 = vset.pattern.permute.xlu0 0
      %438 = vperm.xlu0 %437, %v435
      %v439 = vpop.permute.xlu0 %438
      %v441 = vunpack.c.l.s4 839922192
      %v442 = vunpack.c.0.s8 %v441
      %v443 = vlaneseq
      %v444 = vshrl.u32 %v443, 7
      %v445 = vsub.s32 %v442, %v444
      %v446 = vrot.slane %v439, %v445
      %v448 = vadd.f32 %v434, %v446
      %v449 = vxor.u32 %v448, 2147483648
      %v450 = vmul.f32 %v449, 1.442695
      %v451 = vpow.pop %v450
      %v452 = vadd.f32 %v451, 1.0
      %v453 = vrcp.pop %v452
      %v454 = vmul.f32 1.0, %v453
      %v455 = vmul.f32 %v448, %v454
      %v456 = vld [vmem:[%s400] sm:$0x3]
      %v458 = vlaneseq
      %v459 = vshrl.u32 %v458, 7
      %v460 = vsub.s32 0, %v459
      %v461 = vrot.slane %v456, %v460
      %v462 = vlaneseq
      %v463 = vshrl.u32 %v462, 7
      %v464 = vsub.s32 1, %v463
      %v465 = vrot.slane %v456, %v464
      %v466 = vcombine.low %v461, %v465
      %v468 = vmul.f32 %v455, %v466
      %v469 = vld [vmem:[%s5] sm:$0xff]
      %v470 = vld [vmem:[%s6] sm:$0xff]
      %v472 = vcombine.high %v468, %v468
      %vm473 = vcmask 31744
      %v475 = vsel %vm473, %v470, 0
      %vm477 = vcmask 1043456
      %v478 = vsel %vm477, %v468, 0
      %v480 = vsel %vm477, %v472, 0
      %482 = vmatprep.subr.mxu0 %v480
      %483 = vmatpush1.msra.mxu0 %v478
      %484 = vmatprep.subr.mxu0 0.0
      %485 = vmatpush1.msra.mxu0 0.0
      %486 = vmatprep.subr.mxu0 0.0
      %487 = vmatpush1.msra.mxu0 0.0
      %488 = vmatprep.subr.mxu0 0.0
      %489 = vmatpush1.msra.mxu0 0.0
      %490 = vmatprep.subr.mxu0 0.0
      %491 = vmatpush1.msra.mxu0 0.0
      %492 = vmatprep.subr.mxu0 0.0
      %493 = vmatpush1.msra.mxu0 0.0
      %494 = vmatprep.subr.mxu0 0.0
      %495 = vmatpush1.msra.mxu0 0.0
      %496 = vmatprep.subr.mxu0 0.0
      %497 = vmatpush1.msra.mxu0 0.0
      %498 = vmatprep.subr.mxu0 0.0
      %499 = vmatpush1.msra.mxu0 0.0
      %500 = vmatprep.subr.mxu0 0.0
      %501 = vmatpush1.msra.mxu0 0.0
      %502 = vmatprep.subr.mxu0 0.0
      %503 = vmatpush1.msra.mxu0 0.0
      %504 = vmatprep.subr.mxu0 0.0
      %505 = vmatpush1.msra.mxu0 0.0
      %506 = vmatprep.subr.mxu0 0.0
      %507 = vmatpush1.msra.mxu0 0.0
      %508 = vmatprep.subr.mxu0 0.0
      %509 = vmatpush1.msra.mxu0 0.0
      %510 = vmatprep.subr.mxu0 0.0
      %511 = vmatpush1.msra.mxu0 0.0
      %512 = vmatprep.subr.mxu0 0.0
      %513 = vmatpush1.msra.mxu0 0.0
      %514 = vmatprep.subr.mxu0 0.0
      %515 = vmatpush1.msra.mxu0 0.0
      %516 = vmatprep.subr.mxu0 0.0
      %517 = vmatpush1.msra.mxu0 0.0
      %518 = vmatprep.subr.mxu0 0.0
      %519 = vmatpush1.msra.mxu0 0.0
      %520 = vmatprep.subr.mxu0 0.0
      %521 = vmatpush1.msra.mxu0 0.0
      %522 = vmatprep.subr.mxu0 0.0
      %523 = vmatpush1.msra.mxu0 0.0
      %524 = vmatprep.subr.mxu0 0.0
      %525 = vmatpush1.msra.mxu0 0.0
      %526 = vmatprep.subr.mxu0 0.0
      %527 = vmatpush1.msra.mxu0 0.0
      %528 = vmatprep.subr.mxu0 0.0
      %529 = vmatpush1.msra.mxu0 0.0
      %530 = vmatprep.subr.mxu0 0.0
      %531 = vmatpush1.msra.mxu0 0.0
      %532 = vmatprep.subr.mxu0 0.0
      %533 = vmatpush1.msra.mxu0 0.0
      %534 = vmatprep.subr.mxu0 0.0
      %535 = vmatpush1.msra.mxu0 0.0
      %536 = vmatprep.subr.mxu0 0.0
      %537 = vmatpush1.msra.mxu0 0.0
      %538 = vmatprep.subr.mxu0 0.0
      %539 = vmatpush1.msra.mxu0 0.0
      %540 = vmatprep.subr.mxu0 0.0
      %541 = vmatpush1.msra.mxu0 0.0
      %542 = vmatprep.subr.mxu0 0.0
      %543 = vmatpush1.msra.mxu0 0.0
      %544 = vmatprep.subr.mxu0 0.0
      %545 = vmatpush1.msra.mxu0 0.0
      %546 = vmatprep.mubr.f32.mxu0 0.0
      %547 = vmatmul.mubr.f32.gmra.mrb[0].mxu0 %v475
      %v548 = vpop.f32.mrb[0].mxu0
      %v549 = vadd.f32 0.0, %v548
      %v550 = vpop.f32.mrb[0].mxu0
      %v551 = vadd.f32 0.0, %v550
      %552 = vdwg.mxu0
      %v554 = vcombine.high %v419, %v419
      %v556 = vsel %vm473, %v469, 0
      %v558 = vsel %vm477, %v419, 0
      %v560 = vsel %vm477, %v554, 0
      %562 = vmatprep.subr.mxu0 %v560
      %563 = vmatpush1.msra.mxu0 %v558
      %564 = vmatprep.subr.mxu0 0.0
      %565 = vmatpush1.msra.mxu0 0.0
      %566 = vmatprep.subr.mxu0 0.0
      %567 = vmatpush1.msra.mxu0 0.0
      %568 = vmatprep.subr.mxu0 0.0
      %569 = vmatpush1.msra.mxu0 0.0
      %570 = vmatprep.subr.mxu0 0.0
      %571 = vmatpush1.msra.mxu0 0.0
      %572 = vmatprep.subr.mxu0 0.0
      %573 = vmatpush1.msra.mxu0 0.0
      %574 = vmatprep.subr.mxu0 0.0
      %575 = vmatpush1.msra.mxu0 0.0
      %576 = vmatprep.subr.mxu0 0.0
      %577 = vmatpush1.msra.mxu0 0.0
      %578 = vmatprep.subr.mxu0 0.0
      %579 = vmatpush1.msra.mxu0 0.0
      %580 = vmatprep.subr.mxu0 0.0
      %581 = vmatpush1.msra.mxu0 0.0
      %582 = vmatprep.subr.mxu0 0.0
      %583 = vmatpush1.msra.mxu0 0.0
      %584 = vmatprep.subr.mxu0 0.0
      %585 = vmatpush1.msra.mxu0 0.0
      %586 = vmatprep.subr.mxu0 0.0
      %587 = vmatpush1.msra.mxu0 0.0
      %588 = vmatprep.subr.mxu0 0.0
      %589 = vmatpush1.msra.mxu0 0.0
      %590 = vmatprep.subr.mxu0 0.0
      %591 = vmatpush1.msra.mxu0 0.0
      %592 = vmatprep.subr.mxu0 0.0
      %593 = vmatpush1.msra.mxu0 0.0
      %594 = vmatprep.subr.mxu0 0.0
      %595 = vmatpush1.msra.mxu0 0.0
      %596 = vmatprep.subr.mxu0 0.0
      %597 = vmatpush1.msra.mxu0 0.0
      %598 = vmatprep.subr.mxu0 0.0
      %599 = vmatpush1.msra.mxu0 0.0
      %600 = vmatprep.subr.mxu0 0.0
      %601 = vmatpush1.msra.mxu0 0.0
      %602 = vmatprep.subr.mxu0 0.0
      %603 = vmatpush1.msra.mxu0 0.0
      %604 = vmatprep.subr.mxu0 0.0
      %605 = vmatpush1.msra.mxu0 0.0
      %606 = vmatprep.subr.mxu0 0.0
      %607 = vmatpush1.msra.mxu0 0.0
      %608 = vmatprep.subr.mxu0 0.0
      %609 = vmatpush1.msra.mxu0 0.0
      %610 = vmatprep.subr.mxu0 0.0
      %611 = vmatpush1.msra.mxu0 0.0
      %612 = vmatprep.subr.mxu0 0.0
      %613 = vmatpush1.msra.mxu0 0.0
      %614 = vmatprep.subr.mxu0 0.0
      %615 = vmatpush1.msra.mxu0 0.0
      %616 = vmatprep.subr.mxu0 0.0
      %617 = vmatpush1.msra.mxu0 0.0
      %618 = vmatprep.subr.mxu0 0.0
      %619 = vmatpush1.msra.mxu0 0.0
      %620 = vmatprep.subr.mxu0 0.0
      %621 = vmatpush1.msra.mxu0 0.0
      %622 = vmatprep.subr.mxu0 0.0
      %623 = vmatpush1.msra.mxu0 0.0
      %624 = vmatprep.subr.mxu0 0.0
      %625 = vmatpush1.msra.mxu0 0.0
      %626 = vmatprep.mubr.f32.mxu0 0.0
      %627 = vmatmul.mubr.f32.gmra.mrb[0].mxu0 %v556
      %v628 = vpop.f32.mrb[0].mxu0
      %v629 = vadd.f32 %v549, %v628
      %v630 = vpop.f32.mrb[0].mxu0
      %v631 = vadd.f32 %v551, %v630
      %632 = vdwg.mxu0
      %633 = vst [vmem:[%s410] sm:$0xff] %v629
      %634 = vst [vmem:[%s410 + $0x8] sm:$0xff] %v631
      %v635 = vadd.f32 %v629, %v631
      %636 = vadd.xlane.f32.xlu0 %v635
      %v637 = vpop.xlane.xlu0 %636
      %v638 = vmul.f32 %v629, %v629
      %v639 = vmul.f32 %v631, %v631
      %v640 = vadd.f32 %v638, %v639
      %641 = vadd.xlane.f32.xlu0 %v640
      %v642 = vpop.xlane.xlu0 %641
      %vm643 = vcmask 7168
      %v644 = vsel %vm643, %v637, %v642
      %vm645 = vcmask 15360
      %646 = vst.msk [vmem:[%s418] sm:$0xff] %vm645, %v644
      %s647 = smul.u32 2, %s25
      %p648 = scmp.lt.s32.totalorder %s24, 1
      %s649 = scalar_select %p648, %s24, 1
      %p650 = scmp.lt.s32.totalorder %s647, 1
      %s651 = scalar_select %p650, %s647, 1
      %s652 = smul.addr %s649, 2
      %s653 = sadd.s32 %s651, %s652
      %s654 = smul.addr %s653, 8
      %s655 = scalar_lea.vmem %s7, %s654
      %p656 = scmp.lt.s32.totalorder %s24, 1
      %s657 = scalar_select %p656, %s24, 1
      %p658 = scmp.lt.s32.totalorder %s25, 0
      %s659 = scalar_select %p658, %s25, 0
      %s660 = sadd.s32 %s659, %s657
      %s661 = smul.addr %s660, 8
      %s662 = scalar_lea.vmem %s8, %s661
      // Predicated region
      $region49: #{ghost_bottleneck.7} parent=47 // pred_check
        %p663 = pneg %p218
      $region50: #{ghost_bottleneck.7} parent=47 // pred_check_branch
        %665 = sbr.rel (%p663) target = $region52
      $region51: #{ghost_bottleneck.7} parent=47 // pred_region
        %s666 = smul.u32 2, %s25
      $region52: #{ghost_bottleneck.7} parent=47 // pred_fallthru
        _
      // Predicated region
      $region53: #{ghost_bottleneck.7} parent=47 // pred_check
        %p667 = pneg %p246
      $region54: #{ghost_bottleneck.7} parent=47 // pred_check_branch
        %669 = sbr.rel (%p667) target = $region56
      $region55: #{ghost_bottleneck.7} parent=47 // pred_region
        _
      $region56: #{ghost_bottleneck.7} parent=47 // pred_fallthru
        _
    $region48: #{ghost_bottleneck.7} parent=5 // pred_fallthru
      _
    %p670 = scmp.le.s32.totalorder 2, %s15
    // Predicated region
    $region57: #{ghost_bottleneck.7} parent=5 // pred_check
      %p671 = pneg %p670
    $region58: #{ghost_bottleneck.7} parent=5 // pred_check_branch
      %673 = sbr.rel (%p671) target = $region60
    $region59: #{ghost_bottleneck.7} parent=5 // pred_region
      %s674 = ssub.s32 %s15, 2
      // Predicated region
      $region61: #{ghost_bottleneck.7} parent=59 // pred_check
        %p675 = pneg %p224
      $region62: #{ghost_bottleneck.7} parent=59 // pred_check_branch
        %677 = sbr.rel (%p675) target = $region64
      $region63: #{ghost_bottleneck.7} parent=59 // pred_region
        %s678 = smul.u32 2, %s27
        %p679 = scmp.lt.s32.totalorder %s26, 1
        %s680 = scalar_select %p679, %s26, 1
        %p681 = scmp.lt.s32.totalorder %s678, 1
        %s682 = scalar_select %p681, %s678, 1
        %s683 = smul.addr %s680, 2
        %s684 = sadd.s32 %s682, %s683
        %s685 = smul.addr %s684, 8
        %s686 = scalar_lea.vmem %s7, %s685
      $region64: #{ghost_bottleneck.7} parent=59 // pred_fallthru
        _
      // Predicated region
      $region65: #{ghost_bottleneck.7} parent=59 // pred_check
        %p687 = pneg %p252
      $region66: #{ghost_bottleneck.7} parent=59 // pred_check_branch
        %689 = sbr.rel (%p687) target = $region68
      $region67: #{ghost_bottleneck.7} parent=59 // pred_region
        %p690 = scmp.lt.s32.totalorder %s26, 1
        %s691 = scalar_select %p690, %s26, 1
        %p692 = scmp.lt.s32.totalorder %s27, 0
        %s693 = scalar_select %p692, %s27, 0
        %s694 = sadd.s32 %s693, %s691
        %s695 = smul.addr %s694, 8
        %s696 = scalar_lea.vmem %s8, %s695
      $region68: #{ghost_bottleneck.7} parent=59 // pred_fallthru
        _
    $region60: #{ghost_bottleneck.7} parent=5 // pred_fallthru
      _
  $region6: #{ghost_bottleneck.7} parent=0 // loop_footer
    %s19 = sadd.s32 1, %s15
  $region7: #{ghost_bottleneck.7} parent=0 // loop_footer_branch
    %14 = sbr.rel target = $region3
  $region8: #{ghost_bottleneck.7} parent=0 // loop_exit
    _

// kernel: ghost_bottleneck.6
$region0: #{ghost_bottleneck.6}
  #allocation0 [shape = 'u32[]', space=smem, size = 0x4, offset = 0x4, fixed_abs, tag = 'smem constant byte address 0x4 - core index']
  #allocation1 [shape = 'u32[144,128]{1,0:T(1,128)}', space=vmem, size = 0x12000, scoped, tag = 'internal scratch']
  %s0 = inlined_call_operand.vmem [shape: f32[2,4,256], index: 0, kind: input, shape index: {}]
  %s1 = inlined_call_operand.vmem [shape: f32[4,1], index: 1, kind: input, shape index: {}]
  %s2 = inlined_call_operand.vmem [shape: f32[4,1], index: 2, kind: input, shape index: {}]
  %s3 = inlined_call_operand.vmem [shape: f32[4,25], index: 3, kind: input, shape index: {}]
  %s4 = inlined_call_operand.vmem [shape: s32[1,256], index: 4, kind: input, shape index: {}]
  %s5 = inlined_call_operand.vmem [shape: s32[1,256], index: 5, kind: input, shape index: {}]
  %s6 = inlined_call_operand.vmem [shape: f32[2,4,256], index: 6, kind: output, shape index: {0}]
  %s7 = inlined_call_operand.vmem [shape: f32[2,4,256], index: 7, kind: output, shape index: {1}]
  %s8 = inlined_call_operand.vmem [shape: f32[2,1,4,2], index: 8, kind: output, shape index: {2}]
  %9 = xla_tuple %s6, %s7, %s8
  %s10 = sld [smem:[#allocation0]]
  $region73: #{ghost_bottleneck.6} parent=0
    _
  %s12 = ssub.s32 1, %s10
  %s13 = scalar_select 0, %s12, %s10
  loop: start=0, step=1, limit=4
  $region2: #{ghost_bottleneck.6} parent=0 // loop_pre_header
    _
  $region3: #{ghost_bottleneck.6} parent=0 // loop_header
    %s15 = sphi 0, %s19
    %p16 = scmp.ge.s32.totalorder %s15, 4
    %s22 = sphi 0, %s34
    %s23 = sphi 0, %s30
    %s24 = sphi 0, %s22
    %s25 = sphi 0, %s23
    %s26 = sphi 0, %s24
    %s27 = sphi 0, %s25
    %s39 = sphi 0, %s41
    %s42 = sphi 0, %s39
    %s43 = sphi 0, %s42
    %s59 = sphi 0, %s43
    %s65 = sphi 0, %s67
    %s68 = sphi 0, %s65
    %s69 = sphi 0, %s68
    %s85 = sphi 0, %s69
    %s91 = sphi 0, %s93
    %s94 = sphi 0, %s91
    %s95 = sphi 0, %s94
    %s111 = sphi 0, %s95
    %s117 = sphi 0, %s119
    %s120 = sphi 0, %s117
    %s121 = sphi 0, %s120
    %s137 = sphi 0, %s121
    %s141 = sphi 0, %s141
    %s143 = sphi 0, %s141
    %s144 = sphi 0, %s143
    %s158 = sphi 0, %s144
    %s162 = sphi 0, %s162
    %s164 = sphi 0, %s162
    %s165 = sphi 0, %s164
    %s179 = sphi 0, %s165
    %s187 = sphi 0, %s189
    %s190 = sphi 0, %s187
    %s191 = sphi 0, %s190
    %s207 = sphi 0, %s191
    %s215 = sphi 0, %s217
    %s218 = sphi 0, %s215
    %s219 = sphi 0, %s218
    %s235 = sphi 0, %s219
    %s243 = sphi 0, %s245
    %s246 = sphi 0, %s243
    %s247 = sphi 0, %s246
    %s263 = sphi 0, %s247
  $region4: #{ghost_bottleneck.6} parent=0 // loop_header_branch
    %18 = sbr.rel (%p16) target = $region8
  $region5: #{ghost_bottleneck.6} parent=0 // loop_body
    %s20 = ssub.s32 %s15, 1
    %s21 = ssub.s32 %s15, 2
    %s28 = sadd.s32 1, %s23
    %p29 = scmp.ge.s32.totalorder %s28, 1
    %s30 = scalar_select %p29, 0, %s28
    %s31 = sadd.s32 1, %s22
    %s32 = scalar_select %p29, %s31, %s22
    %p33 = scmp.ge.s32.totalorder %s32, 2
    %s34 = scalar_select %p33, 0, %s32
    %s35 = ssub.s32 %s22, %s34
    %s36 = ssub.s32 %s23, %s30
    %s37 = sor.u32 %s35, %s36
    %p38 = scmp.eq.s32.totalorder %s37, 0
    %s40 = sadd.s32 %s39, 1
    %s41 = scalar_select %p38, %s39, %s40
    %p44 = pneg %p38
    %p45 = scmp.eq.s32.totalorder %s15, 1
    %p46 = por %p44, %p45
    %p47 = scmp.ne.s32.totalorder %s39, %s42
    %p48 = scmp.eq.s32.totalorder %s15, 0
    %p49 = por %p47, %p48
    %p50 = scmp.ne.s32.totalorder %s39, %s42
    %p51 = scmp.eq.s32.totalorder %s20, 1
    %p52 = por %p50, %p51
    %p53 = scmp.ne.s32.totalorder %s42, %s43
    %p54 = scmp.eq.s32.totalorder %s20, 0
    %p55 = por %p53, %p54
    %p56 = scmp.ne.s32.totalorder %s42, %s43
    %p57 = scmp.eq.s32.totalorder %s21, 1
    %p58 = por %p56, %p57
    %p60 = scmp.ne.s32.totalorder %s43, %s59
    %p61 = scmp.eq.s32.totalorder %s21, 0
    %p62 = por %p60, %p61
    %s63 = ssub.s32 %s23, %s30
    %p64 = scmp.eq.s32.totalorder %s63, 0
    %s66 = sadd.s32 %s65, 1
    %s67 = scalar_select %p64, %s65, %s66
    %p70 = pneg %p64
    %p71 = scmp.eq.s32.totalorder %s15, 1
    %p72 = por %p70, %p71
    %p73 = scmp.ne.s32.totalorder %s65, %s68
    %p74 = scmp.eq.s32.totalorder %s15, 0
    %p75 = por %p73, %p74
    %p76 = scmp.ne.s32.totalorder %s65, %s68
    %p77 = scmp.eq.s32.totalorder %s20, 1
    %p78 = por %p76, %p77
    %p79 = scmp.ne.s32.totalorder %s68, %s69
    %p80 = scmp.eq.s32.totalorder %s20, 0
    %p81 = por %p79, %p80
    %p82 = scmp.ne.s32.totalorder %s68, %s69
    %p83 = scmp.eq.s32.totalorder %s21, 1
    %p84 = por %p82, %p83
    %p86 = scmp.ne.s32.totalorder %s69, %s85
    %p87 = scmp.eq.s32.totalorder %s21, 0
    %p88 = por %p86, %p87
    %s89 = ssub.s32 %s23, %s30
    %p90 = scmp.eq.s32.totalorder %s89, 0
    %s92 = sadd.s32 %s91, 1
    %s93 = scalar_select %p90, %s91, %s92
    %p96 = pneg %p90
    %p97 = scmp.eq.s32.totalorder %s15, 1
    %p98 = por %p96, %p97
    %p99 = scmp.ne.s32.totalorder %s91, %s94
    %p100 = scmp.eq.s32.totalorder %s15, 0
    %p101 = por %p99, %p100
    %p102 = scmp.ne.s32.totalorder %s91, %s94
    %p103 = scmp.eq.s32.totalorder %s20, 1
    %p104 = por %p102, %p103
    %p105 = scmp.ne.s32.totalorder %s94, %s95
    %p106 = scmp.eq.s32.totalorder %s20, 0
    %p107 = por %p105, %p106
    %p108 = scmp.ne.s32.totalorder %s94, %s95
    %p109 = scmp.eq.s32.totalorder %s21, 1
    %p110 = por %p108, %p109
    %p112 = scmp.ne.s32.totalorder %s95, %s111
    %p113 = scmp.eq.s32.totalorder %s21, 0
    %p114 = por %p112, %p113
    %s115 = ssub.s32 %s23, %s30
    %p116 = scmp.eq.s32.totalorder %s115, 0
    %s118 = sadd.s32 %s117, 1
    %s119 = scalar_select %p116, %s117, %s118
    %p122 = pneg %p116
    %p123 = scmp.eq.s32.totalorder %s15, 1
    %p124 = por %p122, %p123
    %p125 = scmp.ne.s32.totalorder %s117, %s120
    %p126 = scmp.eq.s32.totalorder %s15, 0
    %p127 = por %p125, %p126
    %p128 = scmp.ne.s32.totalorder %s117, %s120
    %p129 = scmp.eq.s32.totalorder %s20, 1
    %p130 = por %p128, %p129
    %p131 = scmp.ne.s32.totalorder %s120, %s121
    %p132 = scmp.eq.s32.totalorder %s20, 0
    %p133 = por %p131, %p132
    %p134 = scmp.ne.s32.totalorder %s120, %s121
    %p135 = scmp.eq.s32.totalorder %s21, 1
    %p136 = por %p134, %p135
    %p138 = scmp.ne.s32.totalorder %s121, %s137
    %p139 = scmp.eq.s32.totalorder %s21, 0
    %p140 = por %p138, %p139
    %s142 = sadd.s32 %s141, 1
    %p145 = scmp.eq.s32.totalorder %s15, 1
    %p146 = scmp.ne.s32.totalorder %s141, %s143
    %p147 = scmp.eq.s32.totalorder %s15, 0
    %p148 = por %p146, %p147
    %p149 = scmp.ne.s32.totalorder %s141, %s143
    %p150 = scmp.eq.s32.totalorder %s20, 1
    %p151 = por %p149, %p150
    %p152 = scmp.ne.s32.totalorder %s143, %s144
    %p153 = scmp.eq.s32.totalorder %s20, 0
    %p154 = por %p152, %p153
    %p155 = scmp.ne.s32.totalorder %s143, %s144
    %p156 = scmp.eq.s32.totalorder %s21, 1
    %p157 = por %p155, %p156
    %p159 = scmp.ne.s32.totalorder %s144, %s158
    %p160 = scmp.eq.s32.totalorder %s21, 0
    %p161 = por %p159, %p160
    %s163 = sadd.s32 %s162, 1
    %p166 = scmp.eq.s32.totalorder %s15, 1
    %p167 = scmp.ne.s32.totalorder %s162, %s164
    %p168 = scmp.eq.s32.totalorder %s15, 0
    %p169 = por %p167, %p168
    %p170 = scmp.ne.s32.totalorder %s162, %s164
    %p171 = scmp.eq.s32.totalorder %s20, 1
    %p172 = por %p170, %p171
    %p173 = scmp.ne.s32.totalorder %s164, %s165
    %p174 = scmp.eq.s32.totalorder %s20, 0
    %p175 = por %p173, %p174
    %p176 = scmp.ne.s32.totalorder %s164, %s165
    %p177 = scmp.eq.s32.totalorder %s21, 1
    %p178 = por %p176, %p177
    %p180 = scmp.ne.s32.totalorder %s165, %s179
    %p181 = scmp.eq.s32.totalorder %s21, 0
    %p182 = por %p180, %p181
    %s183 = ssub.s32 %s22, %s34
    %s184 = ssub.s32 %s23, %s30
    %s185 = sor.u32 %s183, %s184
    %p186 = scmp.eq.s32.totalorder %s185, 0
    %s188 = sadd.s32 %s187, 1
    %s189 = scalar_select %p186, %s187, %s188
    %p192 = pneg %p186
    %p193 = scmp.eq.s32.totalorder %s15, 1
    %p194 = por %p192, %p193
    %p195 = scmp.ne.s32.totalorder %s187, %s190
    %p196 = scmp.eq.s32.totalorder %s15, 0
    %p197 = por %p195, %p196
    %p198 = scmp.ne.s32.totalorder %s187, %s190
    %p199 = scmp.eq.s32.totalorder %s20, 1
    %p200 = por %p198, %p199
    %p201 = scmp.ne.s32.totalorder %s190, %s191
    %p202 = scmp.eq.s32.totalorder %s20, 0
    %p203 = por %p201, %p202
    %p204 = scmp.ne.s32.totalorder %s190, %s191
    %p205 = scmp.eq.s32.totalorder %s21, 1
    %p206 = por %p204, %p205
    %p208 = scmp.ne.s32.totalorder %s191, %s207
    %p209 = scmp.eq.s32.totalorder %s21, 0
    %p210 = por %p208, %p209
    %s211 = ssub.s32 %s22, %s34
    %s212 = ssub.s32 %s23, %s30
    %s213 = sor.u32 %s211, %s212
    %p214 = scmp.eq.s32.totalorder %s213, 0
    %s216 = sadd.s32 %s215, 1
    %s217 = scalar_select %p214, %s215, %s216
    %p220 = pneg %p214
    %p221 = scmp.eq.s32.totalorder %s15, 1
    %p222 = por %p220, %p221
    %p223 = scmp.ne.s32.totalorder %s215, %s218
    %p224 = scmp.eq.s32.totalorder %s15, 0
    %p225 = por %p223, %p224
    %p226 = scmp.ne.s32.totalorder %s215, %s218
    %p227 = scmp.eq.s32.totalorder %s20, 1
    %p228 = por %p226, %p227
    %p229 = scmp.ne.s32.totalorder %s218, %s219
    %p230 = scmp.eq.s32.totalorder %s20, 0
    %p231 = por %p229, %p230
    %p232 = scmp.ne.s32.totalorder %s218, %s219
    %p233 = scmp.eq.s32.totalorder %s21, 1
    %p234 = por %p232, %p233
    %p236 = scmp.ne.s32.totalorder %s219, %s235
    %p237 = scmp.eq.s32.totalorder %s21, 0
    %p238 = por %p236, %p237
    %s239 = ssub.s32 %s22, %s34
    %s240 = ssub.s32 %s23, %s30
    %s241 = sor.u32 %s239, %s240
    %p242 = scmp.eq.s32.totalorder %s241, 0
    %s244 = sadd.s32 %s243, 1
    %s245 = scalar_select %p242, %s243, %s244
    %p248 = pneg %p242
    %p249 = scmp.eq.s32.totalorder %s15, 1
    %p250 = por %p248, %p249
    %p251 = scmp.ne.s32.totalorder %s243, %s246
    %p252 = scmp.eq.s32.totalorder %s15, 0
    %p253 = por %p251, %p252
    %p254 = scmp.ne.s32.totalorder %s243, %s246
    %p255 = scmp.eq.s32.totalorder %s20, 1
    %p256 = por %p254, %p255
    %p257 = scmp.ne.s32.totalorder %s246, %s247
    %p258 = scmp.eq.s32.totalorder %s20, 0
    %p259 = por %p257, %p258
    %p260 = scmp.ne.s32.totalorder %s246, %s247
    %p261 = scmp.eq.s32.totalorder %s21, 1
    %p262 = por %p260, %p261
    %p264 = scmp.ne.s32.totalorder %s247, %s263
    %p265 = scmp.eq.s32.totalorder %s21, 0
    %p266 = por %p264, %p265
    %p267 = scmp.le.s32.totalorder 1, %s15
    %p268 = scmp.lt.s32.totalorder %s15, 3
    %p269 = pnand %p267, %p268
    %p270 = pneg %p269
    // Predicated region
    $region9: #{ghost_bottleneck.6} parent=5 // pred_check
      _
    $region10: #{ghost_bottleneck.6} parent=5 // pred_check_branch
      %272 = sbr.rel (%p269) target = $region12
    $region11: #{ghost_bottleneck.6} parent=5 // pred_region
      %s273 = ssub.s32 %s15, 1
      // Predicated region
      $region13: #{ghost_bottleneck.6} parent=11 // pred_check
        %p274 = pneg %p81
      $region14: #{ghost_bottleneck.6} parent=11 // pred_check_branch
        %276 = sbr.rel (%p274) target = $region16
      $region15: #{ghost_bottleneck.6} parent=11 // pred_region
        %p277 = scmp.lt.s32.totalorder %s25, 0
        %s278 = scalar_select %p277, %s25, 0
        %s279 = smul.addr %s278, 4
        %s280 = scalar_lea.vmem %s1, %s279
      $region16: #{ghost_bottleneck.6} parent=11 // pred_fallthru
        _
      // Predicated region
      $region17: #{ghost_bottleneck.6} parent=11 // pred_check
        %p281 = pneg %p107
      $region18: #{ghost_bottleneck.6} parent=11 // pred_check_branch
        %283 = sbr.rel (%p281) target = $region20
      $region19: #{ghost_bottleneck.6} parent=11 // pred_region
        %p284 = scmp.lt.s32.totalorder %s25, 0
        %s285 = scalar_select %p284, %s25, 0
        %s286 = smul.addr %s285, 4
        %s287 = scalar_lea.vmem %s2, %s286
      $region20: #{ghost_bottleneck.6} parent=11 // pred_fallthru
        _
      // Predicated region
      $region21: #{ghost_bottleneck.6} parent=11 // pred_check
        %p288 = pneg %p133
      $region22: #{ghost_bottleneck.6} parent=11 // pred_check_branch
        %290 = sbr.rel (%p288) target = $region24
      $region23: #{ghost_bottleneck.6} parent=11 // pred_region
        %p291 = scmp.lt.s32.totalorder %s25, 0
        %s292 = scalar_select %p291, %s25, 0
        %s293 = smul.addr %s292, 4
        %s294 = scalar_lea.vmem %s3, %s293
      $region24: #{ghost_bottleneck.6} parent=11 // pred_fallthru
        _
      // Predicated region
      $region25: #{ghost_bottleneck.6} parent=11 // pred_check
        %p295 = pneg %p154
      $region26: #{ghost_bottleneck.6} parent=11 // pred_check_branch
        %297 = sbr.rel (%p295) target = $region28
      $region27: #{ghost_bottleneck.6} parent=11 // pred_region
        _
      $region28: #{ghost_bottleneck.6} parent=11 // pred_fallthru
        _
      // Predicated region
      $region29: #{ghost_bottleneck.6} parent=11 // pred_check
        %p298 = pneg %p175
      $region30: #{ghost_bottleneck.6} parent=11 // pred_check_branch
        %300 = sbr.rel (%p298) target = $region32
      $region31: #{ghost_bottleneck.6} parent=11 // pred_region
        _
      $region32: #{ghost_bottleneck.6} parent=11 // pred_fallthru
        _
    $region12: #{ghost_bottleneck.6} parent=5 // pred_fallthru
      _
    %p301 = scmp.lt.s32.totalorder %s15, 2
    // Predicated region
    $region33: #{ghost_bottleneck.6} parent=5 // pred_check
      %p302 = pneg %p301
    $region34: #{ghost_bottleneck.6} parent=5 // pred_check_branch
      %304 = sbr.rel (%p302) target = $region36
    $region35: #{ghost_bottleneck.6} parent=5 // pred_region
      // Predicated region
      $region37: #{ghost_bottleneck.6} parent=35 // pred_check
        %p305 = pneg %p49
      $region38: #{ghost_bottleneck.6} parent=35 // pred_check_branch
        %307 = sbr.rel (%p305) target = $region40
      $region39: #{ghost_bottleneck.6} parent=35 // pred_region
        %p308 = scmp.lt.s32.totalorder %s22, 1
        %s309 = scalar_select %p308, %s22, 1
        %p310 = scmp.lt.s32.totalorder %s23, 0
        %s311 = scalar_select %p310, %s23, 0
        %s312 = smul.addr %s311, 2
        %s313 = smul.addr %s309, 2
        %s314 = sadd.s32 %s312, %s313
        %s315 = smul.addr %s314, 4
        %s316 = scalar_lea.vmem %s0, %s315
      $region40: #{ghost_bottleneck.6} parent=35 // pred_fallthru
        _
    $region36: #{ghost_bottleneck.6} parent=5 // pred_fallthru
      _
    %p317 = scmp.le.s32.totalorder 1, %s15
    %p318 = scmp.lt.s32.totalorder %s15, 3
    %p319 = pnand %p317, %p318
    %p320 = pneg %p319
    // Predicated region
    $region41: #{ghost_bottleneck.6} parent=5 // pred_check
      _
    $region42: #{ghost_bottleneck.6} parent=5 // pred_check_branch
      %322 = sbr.rel (%p319) target = $region44
    $region43: #{ghost_bottleneck.6} parent=5 // pred_region
      %s323 = ssub.s32 %s15, 1
      %p324 = scmp.lt.s32.totalorder %s24, 1
      %s325 = scalar_select %p324, %s24, 1
      %p326 = scmp.lt.s32.totalorder %s25, 0
      %s327 = scalar_select %p326, %s25, 0
      %s328 = smul.addr %s327, 2
      %s329 = smul.addr %s325, 2
      %s330 = sadd.s32 %s328, %s329
      %s331 = smul.addr %s330, 4
      %s332 = scalar_lea.vmem %s0, %s331
      %p333 = pneg %p55
      %p334 = pneg %p52
      %p335 = scmp.lt.s32.totalorder %s25, 0
      %s336 = scalar_select %p335, %s25, 0
      %s337 = smul.addr %s336, 4
      %s338 = scalar_lea.vmem %s1, %s337
      %p339 = pneg %p81
      %p340 = pneg %p78
      %p341 = scmp.lt.s32.totalorder %s25, 0
      %s342 = scalar_select %p341, %s25, 0
      %s343 = smul.addr %s342, 4
      %s344 = scalar_lea.vmem %s2, %s343
      %p345 = pneg %p107
      %p346 = pneg %p104
      %p347 = scmp.lt.s32.totalorder %s25, 0
      %s348 = scalar_select %p347, %s25, 0
      %s349 = smul.addr %s348, 4
      %s350 = scalar_lea.vmem %s3, %s349
      %p351 = pneg %p133
      %p352 = pneg %p130
      %p353 = pneg %p154
      %p354 = pneg %p151
      %p355 = pneg %p175
      %p356 = pneg %p172
      %p357 = pneg %p203
      %p358 = pneg %p200
      %p359 = scmp.lt.s32.totalorder %s24, 1
      %s360 = scalar_select %p359, %s24, 1
      %p361 = scmp.lt.s32.totalorder %s25, 0
      %s362 = scalar_select %p361, %s25, 0
      %s363 = smul.addr %s362, 2
      %s364 = smul.addr %s360, 2
      %s365 = sadd.s32 %s363, %s364
      %s366 = smul.addr %s365, 4
      %s367 = scalar_lea.vmem %s6, %s366
      %p368 = pneg %p231
      %p369 = pneg %p228
      %p370 = scmp.lt.s32.totalorder %s24, 1
      %s371 = scalar_select %p370, %s24, 1
      %p372 = scmp.lt.s32.totalorder %s25, 0
      %s373 = scalar_select %p372, %s25, 0
      %s374 = smul.addr %s373, 2
      %s375 = smul.addr %s371, 2
      %s376 = sadd.s32 %s374, %s375
      %s377 = smul.addr %s376, 4
      %s378 = scalar_lea.vmem %s7, %s377
      %p379 = pneg %p259
      %p380 = pneg %p256
      %p381 = scmp.lt.s32.totalorder %s24, 1
      %s382 = scalar_select %p381, %s24, 1
      %p383 = scmp.lt.s32.totalorder %s25, 0
      %s384 = scalar_select %p383, %s25, 0
      %s385 = sadd.s32 %s384, %s382
      %s386 = smul.addr %s385, 4
      %s387 = scalar_lea.vmem %s8, %s386
      %p388 = scmp.lt.s32.totalorder %s24, 1
      %s389 = scalar_select %p388, %s24, 1
      %p390 = scmp.lt.s32.totalorder %s25, 0
      %s391 = scalar_select %p390, %s25, 0
      %s392 = smul.addr %s391, 2
      %s393 = smul.addr %s389, 2
      %s394 = sadd.s32 %s392, %s393
      %s395 = smul.addr %s394, 4
      %s396 = scalar_lea.vmem %s0, %s395
      %p397 = scmp.lt.s32.totalorder %s25, 0
      %s398 = scalar_select %p397, %s25, 0
      %s399 = smul.addr %s398, 4
      %s400 = scalar_lea.vmem %s1, %s399
      %p401 = scmp.lt.s32.totalorder %s25, 0
      %s402 = scalar_select %p401, %s25, 0
      %s403 = smul.addr %s402, 4
      %s404 = scalar_lea.vmem %s2, %s403
      %p405 = scmp.lt.s32.totalorder %s25, 0
      %s406 = scalar_select %p405, %s25, 0
      %s407 = smul.addr %s406, 4
      %s408 = scalar_lea.vmem %s3, %s407
      %p409 = scmp.lt.s32.totalorder %s24, 1
      %s410 = scalar_select %p409, %s24, 1
      %p411 = scmp.lt.s32.totalorder %s25, 0
      %s412 = scalar_select %p411, %s25, 0
      %s413 = smul.addr %s412, 2
      %s414 = smul.addr %s410, 2
      %s415 = sadd.s32 %s413, %s414
      %s416 = smul.addr %s415, 4
      %s417 = scalar_lea.vmem %s6, %s416
      %p418 = scmp.lt.s32.totalorder %s24, 1
      %s419 = scalar_select %p418, %s24, 1
      %p420 = scmp.lt.s32.totalorder %s25, 0
      %s421 = scalar_select %p420, %s25, 0
      %s422 = smul.addr %s421, 2
      %s423 = smul.addr %s419, 2
      %s424 = sadd.s32 %s422, %s423
      %s425 = smul.addr %s424, 4
      %s426 = scalar_lea.vmem %s7, %s425
      %p427 = scmp.lt.s32.totalorder %s24, 1
      %s428 = scalar_select %p427, %s24, 1
      %p429 = scmp.lt.s32.totalorder %s25, 0
      %s430 = scalar_select %p429, %s25, 0
      %s431 = sadd.s32 %s430, %s428
      %s432 = smul.addr %s431, 4
      %s433 = scalar_lea.vmem %s8, %s432
      %v434 = vld [vmem:[%s396] sm:$0xff]
      %v435 = vld [vmem:[%s400] sm:$0xf]
      %437 = vset.pattern.permute.xlu0 0
      %438 = vperm.xlu0 %437, %v435
      %v439 = vpop.permute.xlu0 %438
      %v441 = vunpack.c.l.s4 839922192
      %v442 = vunpack.c.0.s8 %v441
      %v443 = vlaneseq
      %v444 = vshrl.u32 %v443, 7
      %v445 = vsub.s32 %v442, %v444
      %v446 = vrot.slane %v439, %v445
      %v448 = vmul.f32 %v434, %v446
      %v449 = vld [vmem:[%s404] sm:$0xf]
      %451 = vset.pattern.permute.xlu0 0
      %452 = vperm.xlu0 %451, %v449
      %v453 = vpop.permute.xlu0 %452
      %v455 = vunpack.c.l.s4 839922192
      %v456 = vunpack.c.0.s8 %v455
      %v457 = vlaneseq
      %v458 = vshrl.u32 %v457, 7
      %v459 = vsub.s32 %v456, %v458
      %v460 = vrot.slane %v453, %v459
      %v462 = vadd.f32 %v448, %v460
      %v463 = vxor.u32 %v462, 2147483648
      %v464 = vmul.f32 %v463, 1.442695
      %v465 = vpow.pop %v464
      %v466 = vadd.f32 %v465, 1.0
      %v467 = vrcp.pop %v466
      %v468 = vmul.f32 1.0, %v467
      %v469 = vmul.f32 %v462, %v468
      %v470 = vld [vmem:[%s4] sm:$0x3]
      %v471 = vld [vmem:[%s5] sm:$0x3]
      %vm472 = vcmp.lt.s32.totalorder %v470, 16
      %v473 = vsel %vm472, 1, 0
      %v474 = vlaneseq
      %v475 = vshrl.u32 %v474, 7
      %v476 = vsub.s32 0, %v475
      %v477 = vrot.slane %v473, %v476
      %v478 = vlaneseq
      %v479 = vshrl.u32 %v478, 7
      %v480 = vsub.s32 1, %v479
      %v481 = vrot.slane %v473, %v480
      %vm482 = vcmp.eq.s32.totalorder %v477, 1
      %vm483 = vcmp.eq.s32.totalorder %v481, 1
      %v485 = vcombine.high %v469, %v469
      %v487 = vsel %vm482, %v469, 0.0
      %v488 = vsel %vm483, %v485, 0.0
      %v491 = vcombine.low %v487, %v488
      %493 = vst [vmem:[%s417] sm:$0xff] %v491
      %vm494 = vcmp.ge.s32.totalorder %v470, 2
      %vm495 = vcmp.lt.s32.totalorder %v470, 18
      %vm496 = vmand %vm494, %vm495
      %vm497 = vcmp.ge.s32.totalorder %v471, 2
      %vm498 = vmand %vm496, %vm497
      %vm499 = vcmp.lt.s32.totalorder %v471, 18
      %vm500 = vmand %vm498, %vm499
      %501 = vrot.lane.b32.xlu0 %v487, 34
      %v502 = vpop.permute.xlu0 %501
      %503 = vrot.lane.b32.xlu0 %v488, 34
      %v504 = vpop.permute.xlu0 %503
      %v505 = vlaneseq
      %v506 = vand.u32 %v505, 127
      %vm507 = vcmp.lt.s32.totalorder %v506, 34
      %v508 = vsel %vm507, %v502, %v504
      %v509 = vsel %vm507, %v504, %v502
      %v510 = vld [vmem:[%s408] sm:$0xf]
      %v511 = vsel %vm500, 1, 0
      %v512 = vlaneseq
      %v513 = vshrl.u32 %v512, 7
      %v514 = vsub.s32 0, %v513
      %v515 = vrot.slane %v511, %v514
      %v516 = vlaneseq
      %v517 = vshrl.u32 %v516, 7
      %v518 = vsub.s32 1, %v517
      %v519 = vrot.slane %v511, %v518
      %vm520 = vcmp.eq.s32.totalorder %v515, 1
      %vm521 = vcmp.eq.s32.totalorder %v519, 1
      %v522 = vsel %vm520, %v509, 0.0
      %v523 = vsel %vm521, %v508, 0.0
      %525 = vset.pattern.permute.xlu0 0
      %526 = vperm.xlu0 %525, %v510
      %v527 = vpop.permute.xlu0 %526
      %v529 = vmul.f32 %v527, %v522
      %v530 = vmul.f32 %v527, %v523
      %v531 = vadd.f32 %v529, 0.0
      %v532 = vadd.f32 %v530, 0.0
      %vm533 = vcmp.ge.s32.totalorder %v471, 1
      %vm534 = vmand %vm496, %vm533
      %vm535 = vcmp.lt.s32.totalorder %v471, 17
      %vm536 = vmand %vm534, %vm535
      %537 = vrot.lane.b32.xlu0 %v487, 33
      %v538 = vpop.permute.xlu0 %537
      %539 = vrot.lane.b32.xlu0 %v488, 33
      %v540 = vpop.permute.xlu0 %539
      %vm541 = vcmp.lt.s32.totalorder %v506, 33
      %v542 = vsel %vm541, %v538, %v540
      %v543 = vsel %vm541, %v540, %v538
      %v544 = vsel %vm536, 1, 0
      %v545 = vlaneseq
      %v546 = vshrl.u32 %v545, 7
      %v547 = vsub.s32 0, %v546
      %v548 = vrot.slane %v544, %v547
      %v549 = vlaneseq
      %v550 = vshrl.u32 %v549, 7
      %v551 = vsub.s32 1, %v550
      %v552 = vrot.slane %v544, %v551
      %vm553 = vcmp.eq.s32.totalorder %v548, 1
      %vm554 = vcmp.eq.s32.totalorder %v552, 1
      %v555 = vsel %vm553, %v543, 0.0
      %v556 = vsel %vm554, %v542, 0.0
      %557 = vset.pattern.permute.xlu0 1
      %558 = vperm.xlu0 %557, %v510
      %v559 = vpop.permute.xlu0 %558
      %v561 = vmul.f32 %v559, %v555
      %v562 = vmul.f32 %v559, %v556
      %v563 = vadd.f32 %v531, %v561
      %v564 = vadd.f32 %v532, %v562
      %vm565 = vcmp.ge.s32.totalorder %v471, 0
      %vm566 = vmand %vm496, %vm565
      %vm567 = vcmp.lt.s32.totalorder %v471, 16
      %vm568 = vmand %vm566, %vm567
      %569 = vrot.lane.b32.xlu0 %v487, 32
      %v570 = vpop.permute.xlu0 %569
      %571 = vrot.lane.b32.xlu0 %v488, 32
      %v572 = vpop.permute.xlu0 %571
      %vm573 = vcmp.lt.s32.totalorder %v506, 32
      %v574 = vsel %vm573, %v570, %v572
      %v575 = vsel %vm573, %v572, %v570
      %v576 = vsel %vm568, 1, 0
      %v577 = vlaneseq
      %v578 = vshrl.u32 %v577, 7
      %v579 = vsub.s32 0, %v578
      %v580 = vrot.slane %v576, %v579
      %v581 = vlaneseq
      %v582 = vshrl.u32 %v581, 7
      %v583 = vsub.s32 1, %v582
      %v584 = vrot.slane %v576, %v583
      %vm585 = vcmp.eq.s32.totalorder %v580, 1
      %vm586 = vcmp.eq.s32.totalorder %v584, 1
      %v587 = vsel %vm585, %v575, 0.0
      %v588 = vsel %vm586, %v574, 0.0
      %589 = vset.pattern.permute.xlu0 2
      %590 = vperm.xlu0 %589, %v510
      %v591 = vpop.permute.xlu0 %590
      %v593 = vmul.f32 %v591, %v587
      %v594 = vmul.f32 %v591, %v588
      %v595 = vadd.f32 %v563, %v593
      %v596 = vadd.f32 %v564, %v594
      %vm597 = vcmp.ge.s32.totalorder %v471, 4294967295
      %vm598 = vmand %vm496, %vm597
      %vm599 = vcmp.lt.s32.totalorder %v471, 15
      %vm600 = vmand %vm598, %vm599
      %601 = vrot.lane.b32.xlu0 %v487, 31
      %v602 = vpop.permute.xlu0 %601
      %603 = vrot.lane.b32.xlu0 %v488, 31
      %v604 = vpop.permute.xlu0 %603
      %vm605 = vcmp.lt.s32.totalorder %v506, 31
      %v606 = vsel %vm605, %v602, %v604
      %v607 = vsel %vm605, %v604, %v602
      %v608 = vsel %vm600, 1, 0
      %v609 = vlaneseq
      %v610 = vshrl.u32 %v609, 7
      %v611 = vsub.s32 0, %v610
      %v612 = vrot.slane %v608, %v611
      %v613 = vlaneseq
      %v614 = vshrl.u32 %v613, 7
      %v615 = vsub.s32 1, %v614
      %v616 = vrot.slane %v608, %v615
      %vm617 = vcmp.eq.s32.totalorder %v612, 1
      %vm618 = vcmp.eq.s32.totalorder %v616, 1
      %v619 = vsel %vm617, %v607, 0.0
      %v620 = vsel %vm618, %v606, 0.0
      %621 = vset.pattern.permute.xlu0 3
      %622 = vperm.xlu0 %621, %v510
      %v623 = vpop.permute.xlu0 %622
      %v625 = vmul.f32 %v623, %v619
      %v626 = vmul.f32 %v623, %v620
      %v627 = vadd.f32 %v595, %v625
      %v628 = vadd.f32 %v596, %v626
      %vm629 = vcmp.ge.s32.totalorder %v471, 4294967294
      %vm630 = vmand %vm496, %vm629
      %vm631 = vcmp.lt.s32.totalorder %v471, 14
      %vm632 = vmand %vm630, %vm631
      %633 = vrot.lane.b32.xlu0 %v487, 30
      %v634 = vpop.permute.xlu0 %633
      %635 = vrot.lane.b32.xlu0 %v488, 30
      %v636 = vpop.permute.xlu0 %635
      %vm637 = vcmp.lt.s32.totalorder %v506, 30
      %v638 = vsel %vm637, %v634, %v636
      %v639 = vsel %vm637, %v636, %v634
      %v640 = vsel %vm632, 1, 0
      %v641 = vlaneseq
      %v642 = vshrl.u32 %v641, 7
      %v643 = vsub.s32 0, %v642
      %v644 = vrot.slane %v640, %v643
      %v645 = vlaneseq
      %v646 = vshrl.u32 %v645, 7
      %v647 = vsub.s32 1, %v646
      %v648 = vrot.slane %v640, %v647
      %vm649 = vcmp.eq.s32.totalorder %v644, 1
      %vm650 = vcmp.eq.s32.totalorder %v648, 1
      %v651 = vsel %vm649, %v639, 0.0
      %v652 = vsel %vm650, %v638, 0.0
      %653 = vset.pattern.permute.xlu0 4
      %654 = vperm.xlu0 %653, %v510
      %v655 = vpop.permute.xlu0 %654
      %v657 = vmul.f32 %v655, %v651
      %v658 = vmul.f32 %v655, %v652
      %v659 = vadd.f32 %v627, %v657
      %v660 = vadd.f32 %v628, %v658
      %vm661 = vcmp.ge.s32.totalorder %v470, 1
      %vm662 = vcmp.lt.s32.totalorder %v470, 17
      %vm663 = vmand %vm661, %vm662
      %vm664 = vmand %vm663, %vm497
      %vm665 = vmand %vm664, %vm499
      %666 = vrot.lane.b32.xlu0 %v487, 18
      %v667 = vpop.permute.xlu0 %666
      %668 = vrot.lane.b32.xlu0 %v488, 18
      %v669 = vpop.permute.xlu0 %668
      %vm670 = vcmp.lt.s32.totalorder %v506, 18
      %v671 = vsel %vm670, %v667, %v669
      %v672 = vsel %vm670, %v669, %v667
      %v673 = vsel %vm665, 1, 0
      %v674 = vlaneseq
      %v675 = vshrl.u32 %v674, 7
      %v676 = vsub.s32 0, %v675
      %v677 = vrot.slane %v673, %v676
      %v678 = vlaneseq
      %v679 = vshrl.u32 %v678, 7
      %v680 = vsub.s32 1, %v679
      %v681 = vrot.slane %v673, %v680
      %vm682 = vcmp.eq.s32.totalorder %v677, 1
      %vm683 = vcmp.eq.s32.totalorder %v681, 1
      %v684 = vsel %vm682, %v672, 0.0
      %v685 = vsel %vm683, %v671, 0.0
      %686 = vset.pattern.permute.xlu0 5
      %687 = vperm.xlu0 %686, %v510
      %v688 = vpop.permute.xlu0 %687
      %v690 = vmul.f32 %v688, %v684
      %v691 = vmul.f32 %v688, %v685
      %v692 = vadd.f32 %v659, %v690
      %v693 = vadd.f32 %v660, %v691
      %vm694 = vmand %vm663, %vm533
      %vm695 = vmand %vm694, %vm535
      %696 = vrot.lane.b32.xlu0 %v487, 17
      %v697 = vpop.permute.xlu0 %696
      %698 = vrot.lane.b32.xlu0 %v488, 17
      %v699 = vpop.permute.xlu0 %698
      %vm700 = vcmp.lt.s32.totalorder %v506, 17
      %v701 = vsel %vm700, %v697, %v699
      %v702 = vsel %vm700, %v699, %v697
      %v703 = vsel %vm695, 1, 0
      %v704 = vlaneseq
      %v705 = vshrl.u32 %v704, 7
      %v706 = vsub.s32 0, %v705
      %v707 = vrot.slane %v703, %v706
      %v708 = vlaneseq
      %v709 = vshrl.u32 %v708, 7
      %v710 = vsub.s32 1, %v709
      %v711 = vrot.slane %v703, %v710
      %vm712 = vcmp.eq.s32.totalorder %v707, 1
      %vm713 = vcmp.eq.s32.totalorder %v711, 1
      %v714 = vsel %vm712, %v702, 0.0
      %v715 = vsel %vm713, %v701, 0.0
      %716 = vset.pattern.permute.xlu0 6
      %717 = vperm.xlu0 %716, %v510
      %v718 = vpop.permute.xlu0 %717
      %v720 = vmul.f32 %v718, %v714
      %v721 = vmul.f32 %v718, %v715
      %v722 = vadd.f32 %v692, %v720
      %v723 = vadd.f32 %v693, %v721
      %vm724 = vmand %vm663, %vm565
      %vm725 = vmand %vm724, %vm567
      %726 = vrot.lane.b32.xlu0 %v487, 16
      %v727 = vpop.permute.xlu0 %726
      %728 = vrot.lane.b32.xlu0 %v488, 16
      %v729 = vpop.permute.xlu0 %728
      %vm730 = vcmp.lt.s32.totalorder %v506, 16
      %v731 = vsel %vm730, %v727, %v729
      %v732 = vsel %vm730, %v729, %v727
      %v733 = vsel %vm725, 1, 0
      %v734 = vlaneseq
      %v735 = vshrl.u32 %v734, 7
      %v736 = vsub.s32 0, %v735
      %v737 = vrot.slane %v733, %v736
      %v738 = vlaneseq
      %v739 = vshrl.u32 %v738, 7
      %v740 = vsub.s32 1, %v739
      %v741 = vrot.slane %v733, %v740
      %vm742 = vcmp.eq.s32.totalorder %v737, 1
      %vm743 = vcmp.eq.s32.totalorder %v741, 1
      %v744 = vsel %vm742, %v732, 0.0
      %v745 = vsel %vm743, %v731, 0.0
      %746 = vset.pattern.permute.xlu0 7
      %747 = vperm.xlu0 %746, %v510
      %v748 = vpop.permute.xlu0 %747
      %v750 = vmul.f32 %v748, %v744
      %v751 = vmul.f32 %v748, %v745
      %v752 = vadd.f32 %v722, %v750
      %v753 = vadd.f32 %v723, %v751
      %vm754 = vmand %vm663, %vm597
      %vm755 = vmand %vm754, %vm599
      %756 = vrot.lane.b32.xlu0 %v487, 15
      %v757 = vpop.permute.xlu0 %756
      %758 = vrot.lane.b32.xlu0 %v488, 15
      %v759 = vpop.permute.xlu0 %758
      %vm760 = vcmp.lt.s32.totalorder %v506, 15
      %v761 = vsel %vm760, %v757, %v759
      %v762 = vsel %vm760, %v759, %v757
      %v763 = vsel %vm755, 1, 0
      %v764 = vlaneseq
      %v765 = vshrl.u32 %v764, 7
      %v766 = vsub.s32 0, %v765
      %v767 = vrot.slane %v763, %v766
      %v768 = vlaneseq
      %v769 = vshrl.u32 %v768, 7
      %v770 = vsub.s32 1, %v769
      %v771 = vrot.slane %v763, %v770
      %vm772 = vcmp.eq.s32.totalorder %v767, 1
      %vm773 = vcmp.eq.s32.totalorder %v771, 1
      %v774 = vsel %vm772, %v762, 0.0
      %v775 = vsel %vm773, %v761, 0.0
      %776 = vset.pattern.permute.xlu0 8
      %777 = vperm.xlu0 %776, %v510
      %v778 = vpop.permute.xlu0 %777
      %v780 = vmul.f32 %v778, %v774
      %v781 = vmul.f32 %v778, %v775
      %v782 = vadd.f32 %v752, %v780
      %v783 = vadd.f32 %v753, %v781
      %vm784 = vmand %vm663, %vm629
      %vm785 = vmand %vm784, %vm631
      %786 = vrot.lane.b32.xlu0 %v487, 14
      %v787 = vpop.permute.xlu0 %786
      %788 = vrot.lane.b32.xlu0 %v488, 14
      %v789 = vpop.permute.xlu0 %788
      %vm790 = vcmp.lt.s32.totalorder %v506, 14
      %v791 = vsel %vm790, %v787, %v789
      %v792 = vsel %vm790, %v789, %v787
      %v793 = vsel %vm785, 1, 0
      %v794 = vlaneseq
      %v795 = vshrl.u32 %v794, 7
      %v796 = vsub.s32 0, %v795
      %v797 = vrot.slane %v793, %v796
      %v798 = vlaneseq
      %v799 = vshrl.u32 %v798, 7
      %v800 = vsub.s32 1, %v799
      %v801 = vrot.slane %v793, %v800
      %vm802 = vcmp.eq.s32.totalorder %v797, 1
      %vm803 = vcmp.eq.s32.totalorder %v801, 1
      %v804 = vsel %vm802, %v792, 0.0
      %v805 = vsel %vm803, %v791, 0.0
      %806 = vset.pattern.permute.xlu0 9
      %807 = vperm.xlu0 %806, %v510
      %v808 = vpop.permute.xlu0 %807
      %v810 = vmul.f32 %v808, %v804
      %v811 = vmul.f32 %v808, %v805
      %v812 = vadd.f32 %v782, %v810
      %v813 = vadd.f32 %v783, %v811
      %vm814 = vcmp.ge.s32.totalorder %v470, 0
      %vm815 = vmand %vm814, %vm472
      %vm816 = vmand %vm815, %vm497
      %vm817 = vmand %vm816, %vm499
      %818 = vrot.lane.b32.xlu0 %v487, 2
      %v819 = vpop.permute.xlu0 %818
      %820 = vrot.lane.b32.xlu0 %v488, 2
      %v821 = vpop.permute.xlu0 %820
      %vm822 = vcmp.lt.s32.totalorder %v506, 2
      %v823 = vsel %vm822, %v819, %v821
      %v824 = vsel %vm822, %v821, %v819
      %v825 = vsel %vm817, 1, 0
      %v826 = vlaneseq
      %v827 = vshrl.u32 %v826, 7
      %v828 = vsub.s32 0, %v827
      %v829 = vrot.slane %v825, %v828
      %v830 = vlaneseq
      %v831 = vshrl.u32 %v830, 7
      %v832 = vsub.s32 1, %v831
      %v833 = vrot.slane %v825, %v832
      %vm834 = vcmp.eq.s32.totalorder %v829, 1
      %vm835 = vcmp.eq.s32.totalorder %v833, 1
      %v836 = vsel %vm834, %v824, 0.0
      %v837 = vsel %vm835, %v823, 0.0
      %838 = vset.pattern.permute.xlu0 10
      %839 = vperm.xlu0 %838, %v510
      %v840 = vpop.permute.xlu0 %839
      %v842 = vmul.f32 %v840, %v836
      %v843 = vmul.f32 %v840, %v837
      %v844 = vadd.f32 %v812, %v842
      %v845 = vadd.f32 %v813, %v843
      %vm846 = vmand %vm815, %vm533
      %vm847 = vmand %vm846, %vm535
      %848 = vrot.lane.b32.xlu0 %v487, 1
      %v849 = vpop.permute.xlu0 %848
      %850 = vrot.lane.b32.xlu0 %v488, 1
      %v851 = vpop.permute.xlu0 %850
      %vm852 = vcmp.lt.s32.totalorder %v506, 1
      %v853 = vsel %vm852, %v849, %v851
      %v854 = vsel %vm852, %v851, %v849
      %v855 = vsel %vm847, 1, 0
      %v856 = vlaneseq
      %v857 = vshrl.u32 %v856, 7
      %v858 = vsub.s32 0, %v857
      %v859 = vrot.slane %v855, %v858
      %v860 = vlaneseq
      %v861 = vshrl.u32 %v860, 7
      %v862 = vsub.s32 1, %v861
      %v863 = vrot.slane %v855, %v862
      %vm864 = vcmp.eq.s32.totalorder %v859, 1
      %vm865 = vcmp.eq.s32.totalorder %v863, 1
      %v866 = vsel %vm864, %v854, 0.0
      %v867 = vsel %vm865, %v853, 0.0
      %868 = vset.pattern.permute.xlu0 11
      %869 = vperm.xlu0 %868, %v510
      %v870 = vpop.permute.xlu0 %869
      %v872 = vmul.f32 %v870, %v866
      %v873 = vmul.f32 %v870, %v867
      %v874 = vadd.f32 %v844, %v872
      %v875 = vadd.f32 %v845, %v873
      %vm876 = vmand %vm815, %vm565
      %vm877 = vmand %vm876, %vm567
      %v878 = vsel %vm877, 1, 0
      %v879 = vlaneseq
      %v880 = vshrl.u32 %v879, 7
      %v881 = vsub.s32 0, %v880
      %v882 = vrot.slane %v878, %v881
      %v883 = vlaneseq
      %v884 = vshrl.u32 %v883, 7
      %v885 = vsub.s32 1, %v884
      %v886 = vrot.slane %v878, %v885
      %vm887 = vcmp.eq.s32.totalorder %v882, 1
      %vm888 = vcmp.eq.s32.totalorder %v886, 1
      %v889 = vsel %vm887, %v487, 0.0
      %v890 = vsel %vm888, %v488, 0.0
      %891 = vset.pattern.permute.xlu0 12
      %892 = vperm.xlu0 %891, %v510
      %v893 = vpop.permute.xlu0 %892
      %v895 = vmul.f32 %v893, %v889
      %v896 = vmul.f32 %v893, %v890
      %v897 = vadd.f32 %v874, %v895
      %v898 = vadd.f32 %v875, %v896
      %vm899 = vmand %vm815, %vm597
      %vm900 = vmand %vm899, %vm599
      %901 = vrot.lane.b32.xlu0 %v487, 127
      %v902 = vpop.permute.xlu0 %901
      %903 = vrot.lane.b32.xlu0 %v488, 127
      %v904 = vpop.permute.xlu0 %903
      %vm905 = vcmp.lt.s32.totalorder %v506, 127
      %v906 = vsel %vm905, %v902, %v904
      %v907 = vsel %vm905, %v904, %v902
      %v908 = vsel %vm900, 1, 0
      %v909 = vlaneseq
      %v910 = vshrl.u32 %v909, 7
      %v911 = vsub.s32 0, %v910
      %v912 = vrot.slane %v908, %v911
      %v913 = vlaneseq
      %v914 = vshrl.u32 %v913, 7
      %v915 = vsub.s32 1, %v914
      %v916 = vrot.slane %v908, %v915
      %vm917 = vcmp.eq.s32.totalorder %v912, 1
      %vm918 = vcmp.eq.s32.totalorder %v916, 1
      %v919 = vsel %vm917, %v906, 0.0
      %v920 = vsel %vm918, %v907, 0.0
      %921 = vset.pattern.permute.xlu0 13
      %922 = vperm.xlu0 %921, %v510
      %v923 = vpop.permute.xlu0 %922
      %v925 = vmul.f32 %v923, %v919
      %v926 = vmul.f32 %v923, %v920
      %v927 = vadd.f32 %v897, %v925
      %v928 = vadd.f32 %v898, %v926
      %vm929 = vmand %vm815, %vm629
      %vm930 = vmand %vm929, %vm631
      %931 = vrot.lane.b32.xlu0 %v487, 126
      %v932 = vpop.permute.xlu0 %931
      %933 = vrot.lane.b32.xlu0 %v488, 126
      %v934 = vpop.permute.xlu0 %933
      %vm935 = vcmp.lt.s32.totalorder %v506, 126
      %v936 = vsel %vm935, %v932, %v934
      %v937 = vsel %vm935, %v934, %v932
      %v938 = vsel %vm930, 1, 0
      %v939 = vlaneseq
      %v940 = vshrl.u32 %v939, 7
      %v941 = vsub.s32 0, %v940
      %v942 = vrot.slane %v938, %v941
      %v943 = vlaneseq
      %v944 = vshrl.u32 %v943, 7
      %v945 = vsub.s32 1, %v944
      %v946 = vrot.slane %v938, %v945
      %vm947 = vcmp.eq.s32.totalorder %v942, 1
      %vm948 = vcmp.eq.s32.totalorder %v946, 1
      %v949 = vsel %vm947, %v936, 0.0
      %v950 = vsel %vm948, %v937, 0.0
      %951 = vset.pattern.permute.xlu0 14
      %952 = vperm.xlu0 %951, %v510
      %v953 = vpop.permute.xlu0 %952
      %v955 = vmul.f32 %v953, %v949
      %v956 = vmul.f32 %v953, %v950
      %v957 = vadd.f32 %v927, %v955
      %v958 = vadd.f32 %v928, %v956
      %vm959 = vcmp.ge.s32.totalorder %v470, 4294967295
      %vm960 = vcmp.lt.s32.totalorder %v470, 15
      %vm961 = vmand %vm959, %vm960
      %vm962 = vmand %vm961, %vm497
      %vm963 = vmand %vm962, %vm499
      %964 = vrot.lane.b32.xlu0 %v487, 114
      %v965 = vpop.permute.xlu0 %964
      %966 = vrot.lane.b32.xlu0 %v488, 114
      %v967 = vpop.permute.xlu0 %966
      %vm968 = vcmp.lt.s32.totalorder %v506, 114
      %v969 = vsel %vm968, %v965, %v967
      %v970 = vsel %vm968, %v967, %v965
      %v971 = vsel %vm963, 1, 0
      %v972 = vlaneseq
      %v973 = vshrl.u32 %v972, 7
      %v974 = vsub.s32 0, %v973
      %v975 = vrot.slane %v971, %v974
      %v976 = vlaneseq
      %v977 = vshrl.u32 %v976, 7
      %v978 = vsub.s32 1, %v977
      %v979 = vrot.slane %v971, %v978
      %vm980 = vcmp.eq.s32.totalorder %v975, 1
      %vm981 = vcmp.eq.s32.totalorder %v979, 1
      %v982 = vsel %vm980, %v969, 0.0
      %v983 = vsel %vm981, %v970, 0.0
      %984 = vset.pattern.permute.xlu0 15
      %985 = vperm.xlu0 %984, %v510
      %v986 = vpop.permute.xlu0 %985
      %v988 = vmul.f32 %v986, %v982
      %v989 = vmul.f32 %v986, %v983
      %v990 = vadd.f32 %v957, %v988
      %v991 = vadd.f32 %v958, %v989
      %vm992 = vmand %vm961, %vm533
      %vm993 = vmand %vm992, %vm535
      %994 = vrot.lane.b32.xlu0 %v487, 113
      %v995 = vpop.permute.xlu0 %994
      %996 = vrot.lane.b32.xlu0 %v488, 113
      %v997 = vpop.permute.xlu0 %996
      %vm998 = vcmp.lt.s32.totalorder %v506, 113
      %v999 = vsel %vm998, %v995, %v997
      %v1000 = vsel %vm998, %v997, %v995
      %v1001 = vsel %vm993, 1, 0
      %v1002 = vlaneseq
      %v1003 = vshrl.u32 %v1002, 7
      %v1004 = vsub.s32 0, %v1003
      %v1005 = vrot.slane %v1001, %v1004
      %v1006 = vlaneseq
      %v1007 = vshrl.u32 %v1006, 7
      %v1008 = vsub.s32 1, %v1007
      %v1009 = vrot.slane %v1001, %v1008
      %vm1010 = vcmp.eq.s32.totalorder %v1005, 1
      %vm1011 = vcmp.eq.s32.totalorder %v1009, 1
      %v1012 = vsel %vm1010, %v999, 0.0
      %v1013 = vsel %vm1011, %v1000, 0.0
      %1014 = vset.pattern.permute.xlu0 16
      %1015 = vperm.xlu0 %1014, %v510
      %v1016 = vpop.permute.xlu0 %1015
      %v1018 = vmul.f32 %v1016, %v1012
      %v1019 = vmul.f32 %v1016, %v1013
      %v1020 = vadd.f32 %v990, %v1018
      %v1021 = vadd.f32 %v991, %v1019
      %vm1022 = vmand %vm961, %vm565
      %vm1023 = vmand %vm1022, %vm567
      %1024 = vrot.lane.b32.xlu0 %v487, 112
      %v1025 = vpop.permute.xlu0 %1024
      %1026 = vrot.lane.b32.xlu0 %v488, 112
      %v1027 = vpop.permute.xlu0 %1026
      %vm1028 = vcmp.lt.s32.totalorder %v506, 112
      %v1029 = vsel %vm1028, %v1025, %v1027
      %v1030 = vsel %vm1028, %v1027, %v1025
      %v1031 = vsel %vm1023, 1, 0
      %v1032 = vlaneseq
      %v1033 = vshrl.u32 %v1032, 7
      %v1034 = vsub.s32 0, %v1033
      %v1035 = vrot.slane %v1031, %v1034
      %v1036 = vlaneseq
      %v1037 = vshrl.u32 %v1036, 7
      %v1038 = vsub.s32 1, %v1037
      %v1039 = vrot.slane %v1031, %v1038
      %vm1040 = vcmp.eq.s32.totalorder %v1035, 1
      %vm1041 = vcmp.eq.s32.totalorder %v1039, 1
      %v1042 = vsel %vm1040, %v1029, 0.0
      %v1043 = vsel %vm1041, %v1030, 0.0
      %1044 = vset.pattern.permute.xlu0 17
      %1045 = vperm.xlu0 %1044, %v510
      %v1046 = vpop.permute.xlu0 %1045
      %v1048 = vmul.f32 %v1046, %v1042
      %v1049 = vmul.f32 %v1046, %v1043
      %v1050 = vadd.f32 %v1020, %v1048
      %v1051 = vadd.f32 %v1021, %v1049
      %vm1052 = vmand %vm961, %vm597
      %vm1053 = vmand %vm1052, %vm599
      %1054 = vrot.lane.b32.xlu0 %v487, 111
      %v1055 = vpop.permute.xlu0 %1054
      %1056 = vrot.lane.b32.xlu0 %v488, 111
      %v1057 = vpop.permute.xlu0 %1056
      %vm1058 = vcmp.lt.s32.totalorder %v506, 111
      %v1059 = vsel %vm1058, %v1055, %v1057
      %v1060 = vsel %vm1058, %v1057, %v1055
      %v1061 = vsel %vm1053, 1, 0
      %v1062 = vlaneseq
      %v1063 = vshrl.u32 %v1062, 7
      %v1064 = vsub.s32 0, %v1063
      %v1065 = vrot.slane %v1061, %v1064
      %v1066 = vlaneseq
      %v1067 = vshrl.u32 %v1066, 7
      %v1068 = vsub.s32 1, %v1067
      %v1069 = vrot.slane %v1061, %v1068
      %vm1070 = vcmp.eq.s32.totalorder %v1065, 1
      %vm1071 = vcmp.eq.s32.totalorder %v1069, 1
      %v1072 = vsel %vm1070, %v1059, 0.0
      %v1073 = vsel %vm1071, %v1060, 0.0
      %1074 = vset.pattern.permute.xlu0 18
      %1075 = vperm.xlu0 %1074, %v510
      %v1076 = vpop.permute.xlu0 %1075
      %v1078 = vmul.f32 %v1076, %v1072
      %v1079 = vmul.f32 %v1076, %v1073
      %v1080 = vadd.f32 %v1050, %v1078
      %v1081 = vadd.f32 %v1051, %v1079
      %vm1082 = vmand %vm961, %vm629
      %vm1083 = vmand %vm1082, %vm631
      %1084 = vrot.lane.b32.xlu0 %v487, 110
      %v1085 = vpop.permute.xlu0 %1084
      %1086 = vrot.lane.b32.xlu0 %v488, 110
      %v1087 = vpop.permute.xlu0 %1086
      %vm1088 = vcmp.lt.s32.totalorder %v506, 110
      %v1089 = vsel %vm1088, %v1085, %v1087
      %v1090 = vsel %vm1088, %v1087, %v1085
      %v1091 = vsel %vm1083, 1, 0
      %v1092 = vlaneseq
      %v1093 = vshrl.u32 %v1092, 7
      %v1094 = vsub.s32 0, %v1093
      %v1095 = vrot.slane %v1091, %v1094
      %v1096 = vlaneseq
      %v1097 = vshrl.u32 %v1096, 7
      %v1098 = vsub.s32 1, %v1097
      %v1099 = vrot.slane %v1091, %v1098
      %vm1100 = vcmp.eq.s32.totalorder %v1095, 1
      %vm1101 = vcmp.eq.s32.totalorder %v1099, 1
      %v1102 = vsel %vm1100, %v1089, 0.0
      %v1103 = vsel %vm1101, %v1090, 0.0
      %1104 = vset.pattern.permute.xlu0 19
      %1105 = vperm.xlu0 %1104, %v510
      %v1106 = vpop.permute.xlu0 %1105
      %v1108 = vmul.f32 %v1106, %v1102
      %v1109 = vmul.f32 %v1106, %v1103
      %v1110 = vadd.f32 %v1080, %v1108
      %v1111 = vadd.f32 %v1081, %v1109
      %vm1112 = vcmp.ge.s32.totalorder %v470, 4294967294
      %vm1113 = vcmp.lt.s32.totalorder %v470, 14
      %vm1114 = vmand %vm1112, %vm1113
      %vm1115 = vmand %vm1114, %vm497
      %vm1116 = vmand %vm1115, %vm499
      %1117 = vrot.lane.b32.xlu0 %v487, 98
      %v1118 = vpop.permute.xlu0 %1117
      %1119 = vrot.lane.b32.xlu0 %v488, 98
      %v1120 = vpop.permute.xlu0 %1119
      %vm1121 = vcmp.lt.s32.totalorder %v506, 98
      %v1122 = vsel %vm1121, %v1118, %v1120
      %v1123 = vsel %vm1121, %v1120, %v1118
      %v1124 = vsel %vm1116, 1, 0
      %v1125 = vlaneseq
      %v1126 = vshrl.u32 %v1125, 7
      %v1127 = vsub.s32 0, %v1126
      %v1128 = vrot.slane %v1124, %v1127
      %v1129 = vlaneseq
      %v1130 = vshrl.u32 %v1129, 7
      %v1131 = vsub.s32 1, %v1130
      %v1132 = vrot.slane %v1124, %v1131
      %vm1133 = vcmp.eq.s32.totalorder %v1128, 1
      %vm1134 = vcmp.eq.s32.totalorder %v1132, 1
      %v1135 = vsel %vm1133, %v1122, 0.0
      %v1136 = vsel %vm1134, %v1123, 0.0
      %1137 = vset.pattern.permute.xlu0 20
      %1138 = vperm.xlu0 %1137, %v510
      %v1139 = vpop.permute.xlu0 %1138
      %v1141 = vmul.f32 %v1139, %v1135
      %v1142 = vmul.f32 %v1139, %v1136
      %v1143 = vadd.f32 %v1110, %v1141
      %v1144 = vadd.f32 %v1111, %v1142
      %vm1145 = vmand %vm1114, %vm533
      %vm1146 = vmand %vm1145, %vm535
      %1147 = vrot.lane.b32.xlu0 %v487, 97
      %v1148 = vpop.permute.xlu0 %1147
      %1149 = vrot.lane.b32.xlu0 %v488, 97
      %v1150 = vpop.permute.xlu0 %1149
      %vm1151 = vcmp.lt.s32.totalorder %v506, 97
      %v1152 = vsel %vm1151, %v1148, %v1150
      %v1153 = vsel %vm1151, %v1150, %v1148
      %v1154 = vsel %vm1146, 1, 0
      %v1155 = vlaneseq
      %v1156 = vshrl.u32 %v1155, 7
      %v1157 = vsub.s32 0, %v1156
      %v1158 = vrot.slane %v1154, %v1157
      %v1159 = vlaneseq
      %v1160 = vshrl.u32 %v1159, 7
      %v1161 = vsub.s32 1, %v1160
      %v1162 = vrot.slane %v1154, %v1161
      %vm1163 = vcmp.eq.s32.totalorder %v1158, 1
      %vm1164 = vcmp.eq.s32.totalorder %v1162, 1
      %v1165 = vsel %vm1163, %v1152, 0.0
      %v1166 = vsel %vm1164, %v1153, 0.0
      %1167 = vset.pattern.permute.xlu0 21
      %1168 = vperm.xlu0 %1167, %v510
      %v1169 = vpop.permute.xlu0 %1168
      %v1171 = vmul.f32 %v1169, %v1165
      %v1172 = vmul.f32 %v1169, %v1166
      %v1173 = vadd.f32 %v1143, %v1171
      %v1174 = vadd.f32 %v1144, %v1172
      %vm1175 = vmand %vm1114, %vm565
      %vm1176 = vmand %vm1175, %vm567
      %1177 = vrot.lane.b32.xlu0 %v487, 96
      %v1178 = vpop.permute.xlu0 %1177
      %1179 = vrot.lane.b32.xlu0 %v488, 96
      %v1180 = vpop.permute.xlu0 %1179
      %vm1181 = vcmp.lt.s32.totalorder %v506, 96
      %v1182 = vsel %vm1181, %v1178, %v1180
      %v1183 = vsel %vm1181, %v1180, %v1178
      %v1184 = vsel %vm1176, 1, 0
      %v1185 = vlaneseq
      %v1186 = vshrl.u32 %v1185, 7
      %v1187 = vsub.s32 0, %v1186
      %v1188 = vrot.slane %v1184, %v1187
      %v1189 = vlaneseq
      %v1190 = vshrl.u32 %v1189, 7
      %v1191 = vsub.s32 1, %v1190
      %v1192 = vrot.slane %v1184, %v1191
      %vm1193 = vcmp.eq.s32.totalorder %v1188, 1
      %vm1194 = vcmp.eq.s32.totalorder %v1192, 1
      %v1195 = vsel %vm1193, %v1182, 0.0
      %v1196 = vsel %vm1194, %v1183, 0.0
      %1197 = vset.pattern.permute.xlu0 22
      %1198 = vperm.xlu0 %1197, %v510
      %v1199 = vpop.permute.xlu0 %1198
      %v1201 = vmul.f32 %v1199, %v1195
      %v1202 = vmul.f32 %v1199, %v1196
      %v1203 = vadd.f32 %v1173, %v1201
      %v1204 = vadd.f32 %v1174, %v1202
      %vm1205 = vmand %vm1114, %vm597
      %vm1206 = vmand %vm1205, %vm599
      %1207 = vrot.lane.b32.xlu0 %v487, 95
      %v1208 = vpop.permute.xlu0 %1207
      %1209 = vrot.lane.b32.xlu0 %v488, 95
      %v1210 = vpop.permute.xlu0 %1209
      %vm1211 = vcmp.lt.s32.totalorder %v506, 95
      %v1212 = vsel %vm1211, %v1208, %v1210
      %v1213 = vsel %vm1211, %v1210, %v1208
      %v1214 = vsel %vm1206, 1, 0
      %v1215 = vlaneseq
      %v1216 = vshrl.u32 %v1215, 7
      %v1217 = vsub.s32 0, %v1216
      %v1218 = vrot.slane %v1214, %v1217
      %v1219 = vlaneseq
      %v1220 = vshrl.u32 %v1219, 7
      %v1221 = vsub.s32 1, %v1220
      %v1222 = vrot.slane %v1214, %v1221
      %vm1223 = vcmp.eq.s32.totalorder %v1218, 1
      %vm1224 = vcmp.eq.s32.totalorder %v1222, 1
      %v1225 = vsel %vm1223, %v1212, 0.0
      %v1226 = vsel %vm1224, %v1213, 0.0
      %1227 = vset.pattern.permute.xlu0 23
      %1228 = vperm.xlu0 %1227, %v510
      %v1229 = vpop.permute.xlu0 %1228
      %v1231 = vmul.f32 %v1229, %v1225
      %v1232 = vmul.f32 %v1229, %v1226
      %v1233 = vadd.f32 %v1203, %v1231
      %v1234 = vadd.f32 %v1204, %v1232
      %vm1235 = vmand %vm1114, %vm629
      %vm1236 = vmand %vm1235, %vm631
      %1237 = vrot.lane.b32.xlu0 %v487, 94
      %v1238 = vpop.permute.xlu0 %1237
      %1239 = vrot.lane.b32.xlu0 %v488, 94
      %v1240 = vpop.permute.xlu0 %1239
      %vm1241 = vcmp.lt.s32.totalorder %v506, 94
      %v1242 = vsel %vm1241, %v1238, %v1240
      %v1243 = vsel %vm1241, %v1240, %v1238
      %v1244 = vsel %vm1236, 1, 0
      %v1245 = vlaneseq
      %v1246 = vshrl.u32 %v1245, 7
      %v1247 = vsub.s32 0, %v1246
      %v1248 = vrot.slane %v1244, %v1247
      %v1249 = vlaneseq
      %v1250 = vshrl.u32 %v1249, 7
      %v1251 = vsub.s32 1, %v1250
      %v1252 = vrot.slane %v1244, %v1251
      %vm1253 = vcmp.eq.s32.totalorder %v1248, 1
      %vm1254 = vcmp.eq.s32.totalorder %v1252, 1
      %v1255 = vsel %vm1253, %v1242, 0.0
      %v1256 = vsel %vm1254, %v1243, 0.0
      %1257 = vset.pattern.permute.xlu0 24
      %1258 = vperm.xlu0 %1257, %v510
      %v1259 = vpop.permute.xlu0 %1258
      %v1261 = vmul.f32 %v1259, %v1255
      %v1262 = vmul.f32 %v1259, %v1256
      %v1263 = vadd.f32 %v1233, %v1261
      %v1264 = vadd.f32 %v1234, %v1262
      %v1265 = vsel %vm482, %v1263, 0.0
      %v1266 = vsel %vm483, %v1264, 0.0
      %v1269 = vcombine.low %v1265, %v1266
      %1271 = vst [vmem:[%s426] sm:$0xff] %v1269
      %vm1272 = vcmask 1043456
      %v1273 = vsel %vm1272, %v1265, 0.0
      %v1274 = vsel %vm1272, %v1266, 0.0
      %v1275 = vadd.f32 %v1273, %v1274
      %1276 = vadd.xlane.f32.xlu0 %v1275
      %v1277 = vpop.xlane.xlu0 %1276
      %v1278 = vmul.f32 %v1265, %v1265
      %v1279 = vmul.f32 %v1266, %v1266
      %v1280 = vsel %vm1272, %v1278, 0.0
      %v1281 = vsel %vm1272, %v1279, 0.0
      %v1282 = vadd.f32 %v1280, %v1281
      %1283 = vadd.xlane.f32.xlu0 %v1282
      %v1284 = vpop.xlane.xlu0 %1283
      %vm1285 = vcmask 7168
      %v1286 = vsel %vm1285, %v1277, %v1284
      %vm1287 = vcmask 11264
      %1288 = vst.msk [vmem:[%s433] sm:$0xf] %vm1287, %v1286
      %p1289 = scmp.lt.s32.totalorder %s24, 1
      %s1290 = scalar_select %p1289, %s24, 1
      %p1291 = scmp.lt.s32.totalorder %s25, 0
      %s1292 = scalar_select %p1291, %s25, 0
      %s1293 = smul.addr %s1292, 2
      %s1294 = smul.addr %s1290, 2
      %s1295 = sadd.s32 %s1293, %s1294
      %s1296 = smul.addr %s1295, 4
      %s1297 = scalar_lea.vmem %s6, %s1296
      %p1298 = scmp.lt.s32.totalorder %s24, 1
      %s1299 = scalar_select %p1298, %s24, 1
      %p1300 = scmp.lt.s32.totalorder %s25, 0
      %s1301 = scalar_select %p1300, %s25, 0
      %s1302 = smul.addr %s1301, 2
      %s1303 = smul.addr %s1299, 2
      %s1304 = sadd.s32 %s1302, %s1303
      %s1305 = smul.addr %s1304, 4
      %s1306 = scalar_lea.vmem %s7, %s1305
      %p1307 = scmp.lt.s32.totalorder %s24, 1
      %s1308 = scalar_select %p1307, %s24, 1
      %p1309 = scmp.lt.s32.totalorder %s25, 0
      %s1310 = scalar_select %p1309, %s25, 0
      %s1311 = sadd.s32 %s1310, %s1308
      %s1312 = smul.addr %s1311, 4
      %s1313 = scalar_lea.vmem %s8, %s1312
      // Predicated region
      $region45: #{ghost_bottleneck.6} parent=43 // pred_check
        %p1314 = pneg %p200
      $region46: #{ghost_bottleneck.6} parent=43 // pred_check_branch
        %1316 = sbr.rel (%p1314) target = $region48
      $region47: #{ghost_bottleneck.6} parent=43 // pred_region
        _
      $region48: #{ghost_bottleneck.6} parent=43 // pred_fallthru
        _
      // Predicated region
      $region49: #{ghost_bottleneck.6} parent=43 // pred_check
        %p1317 = pneg %p228
      $region50: #{ghost_bottleneck.6} parent=43 // pred_check_branch
        %1319 = sbr.rel (%p1317) target = $region52
      $region51: #{ghost_bottleneck.6} parent=43 // pred_region
        _
      $region52: #{ghost_bottleneck.6} parent=43 // pred_fallthru
        _
      // Predicated region
      $region53: #{ghost_bottleneck.6} parent=43 // pred_check
        %p1320 = pneg %p256
      $region54: #{ghost_bottleneck.6} parent=43 // pred_check_branch
        %1322 = sbr.rel (%p1320) target = $region56
      $region55: #{ghost_bottleneck.6} parent=43 // pred_region
        _
      $region56: #{ghost_bottleneck.6} parent=43 // pred_fallthru
        _
    $region44: #{ghost_bottleneck.6} parent=5 // pred_fallthru
      _
    %p1323 = scmp.le.s32.totalorder 2, %s15
    // Predicated region
    $region57: #{ghost_bottleneck.6} parent=5 // pred_check
      %p1324 = pneg %p1323
    $region58: #{ghost_bottleneck.6} parent=5 // pred_check_branch
      %1326 = sbr.rel (%p1324) target = $region60
    $region59: #{ghost_bottleneck.6} parent=5 // pred_region
      %s1327 = ssub.s32 %s15, 2
      // Predicated region
      $region61: #{ghost_bottleneck.6} parent=59 // pred_check
        %p1328 = pneg %p206
      $region62: #{ghost_bottleneck.6} parent=59 // pred_check_branch
        %1330 = sbr.rel (%p1328) target = $region64
      $region63: #{ghost_bottleneck.6} parent=59 // pred_region
        %p1331 = scmp.lt.s32.totalorder %s26, 1
        %s1332 = scalar_select %p1331, %s26, 1
        %p1333 = scmp.lt.s32.totalorder %s27, 0
        %s1334 = scalar_select %p1333, %s27, 0
        %s1335 = smul.addr %s1334, 2
        %s1336 = smul.addr %s1332, 2
        %s1337 = sadd.s32 %s1335, %s1336
        %s1338 = smul.addr %s1337, 4
        %s1339 = scalar_lea.vmem %s6, %s1338
      $region64: #{ghost_bottleneck.6} parent=59 // pred_fallthru
        _
      // Predicated region
      $region65: #{ghost_bottleneck.6} parent=59 // pred_check
        %p1340 = pneg %p234
      $region66: #{ghost_bottleneck.6} parent=59 // pred_check_branch
        %1342 = sbr.rel (%p1340) target = $region68
      $region67: #{ghost_bottleneck.6} parent=59 // pred_region
        %p1343 = scmp.lt.s32.totalorder %s26, 1
        %s1344 = scalar_select %p1343, %s26, 1
        %p1345 = scmp.lt.s32.totalorder %s27, 0
        %s1346 = scalar_select %p1345, %s27, 0
        %s1347 = smul.addr %s1346, 2
        %s1348 = smul.addr %s1344, 2
        %s1349 = sadd.s32 %s1347, %s1348
        %s1350 = smul.addr %s1349, 4
        %s1351 = scalar_lea.vmem %s7, %s1350
      $region68: #{ghost_bottleneck.6} parent=59 // pred_fallthru
        _
      // Predicated region
      $region69: #{ghost_bottleneck.6} parent=59 // pred_check
        %p1352 = pneg %p262
      $region70: #{ghost_bottleneck.6} parent=59 // pred_check_branch
        %1354 = sbr.rel (%p1352) target = $region72
      $region71: #{ghost_bottleneck.6} parent=59 // pred_region
        %p1355 = scmp.lt.s32.totalorder %s26, 1
        %s1356 = scalar_select %p1355, %s26, 1
        %p1357 = scmp.lt.s32.totalorder %s27, 0
        %s1358 = scalar_select %p1357, %s27, 0
        %s1359 = sadd.s32 %s1358, %s1356
        %s1360 = smul.addr %s1359, 4
        %s1361 = scalar_lea.vmem %s8, %s1360
      $region72: #{ghost_bottleneck.6} parent=59 // pred_fallthru
        _
    $region60: #{ghost_bottleneck.6} parent=5 // pred_fallthru
      _
  $region6: #{ghost_bottleneck.6} parent=0 // loop_footer
    %s19 = sadd.s32 1, %s15
  $region7: #{ghost_bottleneck.6} parent=0 // loop_footer_branch
    %14 = sbr.rel target = $region3
  $region8: #{ghost_bottleneck.6} parent=0 // loop_exit
    _

// kernel: ghost_bottleneck.9
$region0: #{ghost_bottleneck.9}
  #allocation0 [shape = 'u32[]', space=smem, size = 0x4, offset = 0x4, fixed_abs, tag = 'smem constant byte address 0x4 - core index']
  #allocation1 [shape = 'u32[144,128]{1,0:T(1,128)}', space=vmem, size = 0x12000, scoped, tag = 'internal scratch']
  %s0 = inlined_call_operand.vmem [shape: f32[2,8,256], index: 0, kind: input, shape index: {}]
  %s1 = inlined_call_operand.vmem [shape: f32[2,8,256], index: 1, kind: input, shape index: {}]
  %s2 = inlined_call_operand.vmem [shape: f32[8,1], index: 2, kind: input, shape index: {}]
  %s3 = inlined_call_operand.vmem [shape: f32[8,1], index: 3, kind: input, shape index: {}]
  %s4 = inlined_call_operand.vmem [shape: f32[2,16,256], index: 4, kind: input, shape index: {}]
  %s5 = inlined_call_operand.vmem [shape: f32[2,16,256], index: 5, kind: output, shape index: {}]
  %s6 = sld [smem:[#allocation0]]
  $region53: #{ghost_bottleneck.9} parent=0
    _
  %s8 = ssub.s32 1, %s6
  %s9 = scalar_select 0, %s8, %s6
  loop: start=0, step=1, limit=4
  $region2: #{ghost_bottleneck.9} parent=0 // loop_pre_header
    _
  $region3: #{ghost_bottleneck.9} parent=0 // loop_header
    %s11 = sphi 0, %s15
    %p12 = scmp.ge.s32.totalorder %s11, 4
    %s18 = sphi 0, %s30
    %s19 = sphi 0, %s26
    %s20 = sphi 0, %s18
    %s21 = sphi 0, %s19
    %s22 = sphi 0, %s20
    %s23 = sphi 0, %s21
    %s35 = sphi 0, %s37
    %s38 = sphi 0, %s35
    %s39 = sphi 0, %s38
    %s55 = sphi 0, %s39
    %s63 = sphi 0, %s65
    %s66 = sphi 0, %s63
    %s67 = sphi 0, %s66
    %s83 = sphi 0, %s67
    %s87 = sphi 0, %s87
    %s89 = sphi 0, %s87
    %s90 = sphi 0, %s89
    %s104 = sphi 0, %s90
    %s108 = sphi 0, %s108
    %s110 = sphi 0, %s108
    %s111 = sphi 0, %s110
    %s125 = sphi 0, %s111
    %s133 = sphi 0, %s135
    %s136 = sphi 0, %s133
    %s137 = sphi 0, %s136
    %s153 = sphi 0, %s137
    %s161 = sphi 0, %s163
    %s164 = sphi 0, %s161
    %s165 = sphi 0, %s164
    %s181 = sphi 0, %s165
  $region4: #{ghost_bottleneck.9} parent=0 // loop_header_branch
    %14 = sbr.rel (%p12) target = $region8
  $region5: #{ghost_bottleneck.9} parent=0 // loop_body
    %s16 = ssub.s32 %s11, 1
    %s17 = ssub.s32 %s11, 2
    %s24 = sadd.s32 1, %s19
    %p25 = scmp.ge.s32.totalorder %s24, 1
    %s26 = scalar_select %p25, 0, %s24
    %s27 = sadd.s32 1, %s18
    %s28 = scalar_select %p25, %s27, %s18
    %p29 = scmp.ge.s32.totalorder %s28, 2
    %s30 = scalar_select %p29, 0, %s28
    %s31 = ssub.s32 %s18, %s30
    %s32 = ssub.s32 %s19, %s26
    %s33 = sor.u32 %s31, %s32
    %p34 = scmp.eq.s32.totalorder %s33, 0
    %s36 = sadd.s32 %s35, 1
    %s37 = scalar_select %p34, %s35, %s36
    %p40 = pneg %p34
    %p41 = scmp.eq.s32.totalorder %s11, 1
    %p42 = por %p40, %p41
    %p43 = scmp.ne.s32.totalorder %s35, %s38
    %p44 = scmp.eq.s32.totalorder %s11, 0
    %p45 = por %p43, %p44
    %p46 = scmp.ne.s32.totalorder %s35, %s38
    %p47 = scmp.eq.s32.totalorder %s16, 1
    %p48 = por %p46, %p47
    %p49 = scmp.ne.s32.totalorder %s38, %s39
    %p50 = scmp.eq.s32.totalorder %s16, 0
    %p51 = por %p49, %p50
    %p52 = scmp.ne.s32.totalorder %s38, %s39
    %p53 = scmp.eq.s32.totalorder %s17, 1
    %p54 = por %p52, %p53
    %p56 = scmp.ne.s32.totalorder %s39, %s55
    %p57 = scmp.eq.s32.totalorder %s17, 0
    %p58 = por %p56, %p57
    %s59 = ssub.s32 %s18, %s30
    %s60 = ssub.s32 %s19, %s26
    %s61 = sor.u32 %s59, %s60
    %p62 = scmp.eq.s32.totalorder %s61, 0
    %s64 = sadd.s32 %s63, 1
    %s65 = scalar_select %p62, %s63, %s64
    %p68 = pneg %p62
    %p69 = scmp.eq.s32.totalorder %s11, 1
    %p70 = por %p68, %p69
    %p71 = scmp.ne.s32.totalorder %s63, %s66
    %p72 = scmp.eq.s32.totalorder %s11, 0
    %p73 = por %p71, %p72
    %p74 = scmp.ne.s32.totalorder %s63, %s66
    %p75 = scmp.eq.s32.totalorder %s16, 1
    %p76 = por %p74, %p75
    %p77 = scmp.ne.s32.totalorder %s66, %s67
    %p78 = scmp.eq.s32.totalorder %s16, 0
    %p79 = por %p77, %p78
    %p80 = scmp.ne.s32.totalorder %s66, %s67
    %p81 = scmp.eq.s32.totalorder %s17, 1
    %p82 = por %p80, %p81
    %p84 = scmp.ne.s32.totalorder %s67, %s83
    %p85 = scmp.eq.s32.totalorder %s17, 0
    %p86 = por %p84, %p85
    %s88 = sadd.s32 %s87, 1
    %p91 = scmp.eq.s32.totalorder %s11, 1
    %p92 = scmp.ne.s32.totalorder %s87, %s89
    %p93 = scmp.eq.s32.totalorder %s11, 0
    %p94 = por %p92, %p93
    %p95 = scmp.ne.s32.totalorder %s87, %s89
    %p96 = scmp.eq.s32.totalorder %s16, 1
    %p97 = por %p95, %p96
    %p98 = scmp.ne.s32.totalorder %s89, %s90
    %p99 = scmp.eq.s32.totalorder %s16, 0
    %p100 = por %p98, %p99
    %p101 = scmp.ne.s32.totalorder %s89, %s90
    %p102 = scmp.eq.s32.totalorder %s17, 1
    %p103 = por %p101, %p102
    %p105 = scmp.ne.s32.totalorder %s90, %s104
    %p106 = scmp.eq.s32.totalorder %s17, 0
    %p107 = por %p105, %p106
    %s109 = sadd.s32 %s108, 1
    %p112 = scmp.eq.s32.totalorder %s11, 1
    %p113 = scmp.ne.s32.totalorder %s108, %s110
    %p114 = scmp.eq.s32.totalorder %s11, 0
    %p115 = por %p113, %p114
    %p116 = scmp.ne.s32.totalorder %s108, %s110
    %p117 = scmp.eq.s32.totalorder %s16, 1
    %p118 = por %p116, %p117
    %p119 = scmp.ne.s32.totalorder %s110, %s111
    %p120 = scmp.eq.s32.totalorder %s16, 0
    %p121 = por %p119, %p120
    %p122 = scmp.ne.s32.totalorder %s110, %s111
    %p123 = scmp.eq.s32.totalorder %s17, 1
    %p124 = por %p122, %p123
    %p126 = scmp.ne.s32.totalorder %s111, %s125
    %p127 = scmp.eq.s32.totalorder %s17, 0
    %p128 = por %p126, %p127
    %s129 = ssub.s32 %s18, %s30
    %s130 = ssub.s32 %s19, %s26
    %s131 = sor.u32 %s129, %s130
    %p132 = scmp.eq.s32.totalorder %s131, 0
    %s134 = sadd.s32 %s133, 1
    %s135 = scalar_select %p132, %s133, %s134
    %p138 = pneg %p132
    %p139 = scmp.eq.s32.totalorder %s11, 1
    %p140 = por %p138, %p139
    %p141 = scmp.ne.s32.totalorder %s133, %s136
    %p142 = scmp.eq.s32.totalorder %s11, 0
    %p143 = por %p141, %p142
    %p144 = scmp.ne.s32.totalorder %s133, %s136
    %p145 = scmp.eq.s32.totalorder %s16, 1
    %p146 = por %p144, %p145
    %p147 = scmp.ne.s32.totalorder %s136, %s137
    %p148 = scmp.eq.s32.totalorder %s16, 0
    %p149 = por %p147, %p148
    %p150 = scmp.ne.s32.totalorder %s136, %s137
    %p151 = scmp.eq.s32.totalorder %s17, 1
    %p152 = por %p150, %p151
    %p154 = scmp.ne.s32.totalorder %s137, %s153
    %p155 = scmp.eq.s32.totalorder %s17, 0
    %p156 = por %p154, %p155
    %s157 = ssub.s32 %s18, %s30
    %s158 = ssub.s32 %s19, %s26
    %s159 = sor.u32 %s157, %s158
    %p160 = scmp.eq.s32.totalorder %s159, 0
    %s162 = sadd.s32 %s161, 1
    %s163 = scalar_select %p160, %s161, %s162
    %p166 = pneg %p160
    %p167 = scmp.eq.s32.totalorder %s11, 1
    %p168 = por %p166, %p167
    %p169 = scmp.ne.s32.totalorder %s161, %s164
    %p170 = scmp.eq.s32.totalorder %s11, 0
    %p171 = por %p169, %p170
    %p172 = scmp.ne.s32.totalorder %s161, %s164
    %p173 = scmp.eq.s32.totalorder %s16, 1
    %p174 = por %p172, %p173
    %p175 = scmp.ne.s32.totalorder %s164, %s165
    %p176 = scmp.eq.s32.totalorder %s16, 0
    %p177 = por %p175, %p176
    %p178 = scmp.ne.s32.totalorder %s164, %s165
    %p179 = scmp.eq.s32.totalorder %s17, 1
    %p180 = por %p178, %p179
    %p182 = scmp.ne.s32.totalorder %s165, %s181
    %p183 = scmp.eq.s32.totalorder %s17, 0
    %p184 = por %p182, %p183
    %p185 = scmp.le.s32.totalorder 1, %s11
    %p186 = scmp.lt.s32.totalorder %s11, 3
    %p187 = pnand %p185, %p186
    %p188 = pneg %p187
    // Predicated region
    $region9: #{ghost_bottleneck.9} parent=5 // pred_check
      _
    $region10: #{ghost_bottleneck.9} parent=5 // pred_check_branch
      %190 = sbr.rel (%p187) target = $region12
    $region11: #{ghost_bottleneck.9} parent=5 // pred_region
      %s191 = ssub.s32 %s11, 1
      // Predicated region
      $region13: #{ghost_bottleneck.9} parent=11 // pred_check
        %p192 = pneg %p100
      $region14: #{ghost_bottleneck.9} parent=11 // pred_check_branch
        %194 = sbr.rel (%p192) target = $region16
      $region15: #{ghost_bottleneck.9} parent=11 // pred_region
        _
      $region16: #{ghost_bottleneck.9} parent=11 // pred_fallthru
        _
      // Predicated region
      $region17: #{ghost_bottleneck.9} parent=11 // pred_check
        %p195 = pneg %p121
      $region18: #{ghost_bottleneck.9} parent=11 // pred_check_branch
        %197 = sbr.rel (%p195) target = $region20
      $region19: #{ghost_bottleneck.9} parent=11 // pred_region
        _
      $region20: #{ghost_bottleneck.9} parent=11 // pred_fallthru
        _
    $region12: #{ghost_bottleneck.9} parent=5 // pred_fallthru
      _
    %p198 = scmp.lt.s32.totalorder %s11, 2
    // Predicated region
    $region21: #{ghost_bottleneck.9} parent=5 // pred_check
      %p199 = pneg %p198
    $region22: #{ghost_bottleneck.9} parent=5 // pred_check_branch
      %201 = sbr.rel (%p199) target = $region24
    $region23: #{ghost_bottleneck.9} parent=5 // pred_region
      // Predicated region
      $region25: #{ghost_bottleneck.9} parent=23 // pred_check
        %p202 = pneg %p45
      $region26: #{ghost_bottleneck.9} parent=23 // pred_check_branch
        %204 = sbr.rel (%p202) target = $region28
      $region27: #{ghost_bottleneck.9} parent=23 // pred_region
        %s205 = smul.u32 2, %s19
        %p206 = scmp.lt.s32.totalorder %s18, 1
        %s207 = scalar_select %p206, %s18, 1
        %p208 = scmp.lt.s32.totalorder %s205, 1
        %s209 = scalar_select %p208, %s205, 1
        %s210 = smul.addr %s207, 2
        %s211 = sadd.s32 %s209, %s210
        %s212 = smul.addr %s211, 8
        %s213 = scalar_lea.vmem %s0, %s212
        %s214 = smul.u32 2, %s19
      $region28: #{ghost_bottleneck.9} parent=23 // pred_fallthru
        _
      // Predicated region
      $region29: #{ghost_bottleneck.9} parent=23 // pred_check
        %p215 = pneg %p73
      $region30: #{ghost_bottleneck.9} parent=23 // pred_check_branch
        %217 = sbr.rel (%p215) target = $region32
      $region31: #{ghost_bottleneck.9} parent=23 // pred_region
        %s218 = smul.u32 2, %s19
        %p219 = scmp.lt.s32.totalorder %s18, 1
        %s220 = scalar_select %p219, %s18, 1
        %p221 = scmp.lt.s32.totalorder %s218, 1
        %s222 = scalar_select %p221, %s218, 1
        %s223 = smul.addr %s220, 2
        %s224 = sadd.s32 %s222, %s223
        %s225 = smul.addr %s224, 8
        %s226 = scalar_lea.vmem %s1, %s225
        %s227 = smul.u32 2, %s19
      $region32: #{ghost_bottleneck.9} parent=23 // pred_fallthru
        _
      // Predicated region
      $region33: #{ghost_bottleneck.9} parent=23 // pred_check
        %p228 = pneg %p143
      $region34: #{ghost_bottleneck.9} parent=23 // pred_check_branch
        %230 = sbr.rel (%p228) target = $region36
      $region35: #{ghost_bottleneck.9} parent=23 // pred_region
        %s231 = smul.u32 2, %s19
        %p232 = scmp.lt.s32.totalorder %s18, 1
        %s233 = scalar_select %p232, %s18, 1
        %p234 = scmp.lt.s32.totalorder %s231, 1
        %s235 = scalar_select %p234, %s231, 1
        %s236 = smul.addr %s233, 4
        %s237 = sadd.s32 %s235, %s236
        %s238 = smul.addr %s237, 8
        %s239 = scalar_lea.vmem %s4, %s238
        %s240 = smul.u32 2, %s19
      $region36: #{ghost_bottleneck.9} parent=23 // pred_fallthru
        _
    $region24: #{ghost_bottleneck.9} parent=5 // pred_fallthru
      _
    %p241 = scmp.le.s32.totalorder 1, %s11
    %p242 = scmp.lt.s32.totalorder %s11, 3
    %p243 = pnand %p241, %p242
    %p244 = pneg %p243
    // Predicated region
    $region37: #{ghost_bottleneck.9} parent=5 // pred_check
      _
    $region38: #{ghost_bottleneck.9} parent=5 // pred_check_branch
      %246 = sbr.rel (%p243) target = $region40
    $region39: #{ghost_bottleneck.9} parent=5 // pred_region
      %s247 = ssub.s32 %s11, 1
      %s248 = smul.u32 2, %s21
      %p249 = scmp.lt.s32.totalorder %s20, 1
      %s250 = scalar_select %p249, %s20, 1
      %p251 = scmp.lt.s32.totalorder %s248, 1
      %s252 = scalar_select %p251, %s248, 1
      %s253 = smul.addr %s250, 2
      %s254 = sadd.s32 %s252, %s253
      %s255 = smul.addr %s254, 8
      %s256 = scalar_lea.vmem %s0, %s255
      %p257 = pneg %p51
      %p258 = pneg %p48
      %s259 = smul.u32 2, %s21
      %p260 = scmp.lt.s32.totalorder %s20, 1
      %s261 = scalar_select %p260, %s20, 1
      %p262 = scmp.lt.s32.totalorder %s259, 1
      %s263 = scalar_select %p262, %s259, 1
      %s264 = smul.addr %s261, 2
      %s265 = sadd.s32 %s263, %s264
      %s266 = smul.addr %s265, 8
      %s267 = scalar_lea.vmem %s1, %s266
      %p268 = pneg %p79
      %p269 = pneg %p76
      %p270 = pneg %p100
      %p271 = pneg %p97
      %p272 = pneg %p121
      %p273 = pneg %p118
      %s274 = smul.u32 2, %s21
      %p275 = scmp.lt.s32.totalorder %s20, 1
      %s276 = scalar_select %p275, %s20, 1
      %p277 = scmp.lt.s32.totalorder %s274, 1
      %s278 = scalar_select %p277, %s274, 1
      %s279 = smul.addr %s276, 4
      %s280 = sadd.s32 %s278, %s279
      %s281 = smul.addr %s280, 8
      %s282 = scalar_lea.vmem %s4, %s281
      %p283 = pneg %p149
      %p284 = pneg %p146
      %p285 = pneg %p177
      %p286 = pneg %p174
      %s287 = smul.u32 2, %s21
      %p288 = scmp.lt.s32.totalorder %s20, 1
      %s289 = scalar_select %p288, %s20, 1
      %p290 = scmp.lt.s32.totalorder %s287, 1
      %s291 = scalar_select %p290, %s287, 1
      %s292 = smul.addr %s289, 4
      %s293 = sadd.s32 %s291, %s292
      %s294 = smul.addr %s293, 8
      %s295 = scalar_lea.vmem %s5, %s294
      %s296 = smul.u32 2, %s21
      %p297 = scmp.lt.s32.totalorder %s20, 1
      %s298 = scalar_select %p297, %s20, 1
      %p299 = scmp.lt.s32.totalorder %s296, 1
      %s300 = scalar_select %p299, %s296, 1
      %s301 = smul.addr %s298, 2
      %s302 = sadd.s32 %s300, %s301
      %s303 = smul.addr %s302, 8
      %s304 = scalar_lea.vmem %s0, %s303
      %s305 = smul.u32 2, %s21
      %s306 = smul.u32 2, %s21
      %p307 = scmp.lt.s32.totalorder %s20, 1
      %s308 = scalar_select %p307, %s20, 1
      %p309 = scmp.lt.s32.totalorder %s306, 1
      %s310 = scalar_select %p309, %s306, 1
      %s311 = smul.addr %s308, 2
      %s312 = sadd.s32 %s310, %s311
      %s313 = smul.addr %s312, 8
      %s314 = scalar_lea.vmem %s1, %s313
      %s315 = smul.u32 2, %s21
      %s316 = smul.u32 2, %s21
      %p317 = scmp.lt.s32.totalorder %s20, 1
      %s318 = scalar_select %p317, %s20, 1
      %p319 = scmp.lt.s32.totalorder %s316, 1
      %s320 = scalar_select %p319, %s316, 1
      %s321 = smul.addr %s318, 4
      %s322 = sadd.s32 %s320, %s321
      %s323 = smul.addr %s322, 8
      %s324 = scalar_lea.vmem %s4, %s323
      %s325 = smul.u32 2, %s21
      %s326 = smul.u32 2, %s21
      %p327 = scmp.lt.s32.totalorder %s20, 1
      %s328 = scalar_select %p327, %s20, 1
      %p329 = scmp.lt.s32.totalorder %s326, 1
      %s330 = scalar_select %p329, %s326, 1
      %s331 = smul.addr %s328, 4
      %s332 = sadd.s32 %s330, %s331
      %s333 = smul.addr %s332, 8
      %s334 = scalar_lea.vmem %s5, %s333
      %s335 = smul.u32 2, %s21
      %v336 = vld [vmem:[%s304] sm:$0xff]
      %v337 = vld [vmem:[%s304 + $0x8] sm:$0xff]
      %v338 = vld [vmem:[%s314] sm:$0xff]
      %v339 = vld [vmem:[%s314 + $0x8] sm:$0xff]
      %v340 = vld [vmem:[%s2] sm:$0xff]
      %342 = vset.pattern.permute.xlu0 0
      %343 = vperm.xlu0 %342, %v340
      %v344 = vpop.permute.xlu0 %343
      %v346 = vmul.f32 %v338, %v344
      %v347 = vmul.f32 %v339, %v344
      %v348 = vld [vmem:[%s3] sm:$0xff]
      %350 = vset.pattern.permute.xlu0 0
      %351 = vperm.xlu0 %350, %v348
      %v352 = vpop.permute.xlu0 %351
      %v354 = vadd.f32 %v346, %v352
      %v355 = vadd.f32 %v347, %v352
      %v356 = vld [vmem:[%s324] sm:$0xff]
      %v357 = vld [vmem:[%s324 + $0x8] sm:$0xff]
      %v358 = vld [vmem:[%s324 + $0x10] sm:$0xff]
      %v359 = vld [vmem:[%s324 + $0x18] sm:$0xff]
      %v360 = vadd.f32 %v336, %v356
      %v361 = vadd.f32 %v337, %v357
      %362 = vst [vmem:[%s334] sm:$0xff] %v360
      %363 = vst [vmem:[%s334 + $0x8] sm:$0xff] %v361
      %v364 = vadd.f32 %v354, %v358
      %v365 = vadd.f32 %v355, %v359
      %366 = vst [vmem:[%s334 + $0x10] sm:$0xff] %v364
      %367 = vst [vmem:[%s334 + $0x18] sm:$0xff] %v365
      %s368 = smul.u32 2, %s21
      %p369 = scmp.lt.s32.totalorder %s20, 1
      %s370 = scalar_select %p369, %s20, 1
      %p371 = scmp.lt.s32.totalorder %s368, 1
      %s372 = scalar_select %p371, %s368, 1
      %s373 = smul.addr %s370, 4
      %s374 = sadd.s32 %s372, %s373
      %s375 = smul.addr %s374, 8
      %s376 = scalar_lea.vmem %s5, %s375
      // Predicated region
      $region41: #{ghost_bottleneck.9} parent=39 // pred_check
        %p377 = pneg %p174
      $region42: #{ghost_bottleneck.9} parent=39 // pred_check_branch
        %379 = sbr.rel (%p377) target = $region44
      $region43: #{ghost_bottleneck.9} parent=39 // pred_region
        %s380 = smul.u32 2, %s21
      $region44: #{ghost_bottleneck.9} parent=39 // pred_fallthru
        _
    $region40: #{ghost_bottleneck.9} parent=5 // pred_fallthru
      _
    %p381 = scmp.le.s32.totalorder 2, %s11
    // Predicated region
    $region45: #{ghost_bottleneck.9} parent=5 // pred_check
      %p382 = pneg %p381
    $region46: #{ghost_bottleneck.9} parent=5 // pred_check_branch
      %384 = sbr.rel (%p382) target = $region48
    $region47: #{ghost_bottleneck.9} parent=5 // pred_region
      %s385 = ssub.s32 %s11, 2
      // Predicated region
      $region49: #{ghost_bottleneck.9} parent=47 // pred_check
        %p386 = pneg %p180
      $region50: #{ghost_bottleneck.9} parent=47 // pred_check_branch
        %388 = sbr.rel (%p386) target = $region52
      $region51: #{ghost_bottleneck.9} parent=47 // pred_region
        %s389 = smul.u32 2, %s23
        %p390 = scmp.lt.s32.totalorder %s22, 1
        %s391 = scalar_select %p390, %s22, 1
        %p392 = scmp.lt.s32.totalorder %s389, 1
        %s393 = scalar_select %p392, %s389, 1
        %s394 = smul.addr %s391, 4
        %s395 = sadd.s32 %s393, %s394
        %s396 = smul.addr %s395, 8
        %s397 = scalar_lea.vmem %s5, %s396
      $region52: #{ghost_bottleneck.9} parent=47 // pred_fallthru
        _
    $region48: #{ghost_bottleneck.9} parent=5 // pred_fallthru
      _
  $region6: #{ghost_bottleneck.9} parent=0 // loop_footer
    %s15 = sadd.s32 1, %s11
  $region7: #{ghost_bottleneck.9} parent=0 // loop_footer_branch
    %10 = sbr.rel target = $region3
  $region8: #{ghost_bottleneck.9} parent=0 // loop_exit
    _

// kernel: ghost_bottleneck.8
$region0: #{ghost_bottleneck.8}
  #allocation0 [shape = 'u32[]', space=smem, size = 0x4, offset = 0x4, fixed_abs, tag = 'smem constant byte address 0x4 - core index']
  #allocation1 [shape = 'u32[144,128]{1,0:T(1,128)}', space=vmem, size = 0x12000, scoped, tag = 'internal scratch']
  %s0 = inlined_call_operand.vmem [shape: f32[2,8,256], index: 0, kind: input, shape index: {}]
  %s1 = inlined_call_operand.vmem [shape: f32[8,1], index: 1, kind: input, shape index: {}]
  %s2 = inlined_call_operand.vmem [shape: f32[8,1], index: 2, kind: input, shape index: {}]
  %s3 = inlined_call_operand.vmem [shape: f32[8,25], index: 3, kind: input, shape index: {}]
  %s4 = inlined_call_operand.vmem [shape: s32[1,256], index: 4, kind: input, shape index: {}]
  %s5 = inlined_call_operand.vmem [shape: s32[1,256], index: 5, kind: input, shape index: {}]
  %s6 = inlined_call_operand.vmem [shape: f32[2,8,256], index: 6, kind: output, shape index: {0}]
  %s7 = inlined_call_operand.vmem [shape: f32[2,8,256], index: 7, kind: output, shape index: {1}]
  %s8 = inlined_call_operand.vmem [shape: f32[2,1,8,2], index: 8, kind: output, shape index: {2}]
  %9 = xla_tuple %s6, %s7, %s8
  %s10 = sld [smem:[#allocation0]]
  $region73: #{ghost_bottleneck.8} parent=0
    _
  %s12 = ssub.s32 1, %s10
  %s13 = scalar_select 0, %s12, %s10
  loop: start=0, step=1, limit=4
  $region2: #{ghost_bottleneck.8} parent=0 // loop_pre_header
    _
  $region3: #{ghost_bottleneck.8} parent=0 // loop_header
    %s15 = sphi 0, %s19
    %p16 = scmp.ge.s32.totalorder %s15, 4
    %s22 = sphi 0, %s34
    %s23 = sphi 0, %s30
    %s24 = sphi 0, %s22
    %s25 = sphi 0, %s23
    %s26 = sphi 0, %s24
    %s27 = sphi 0, %s25
    %s39 = sphi 0, %s41
    %s42 = sphi 0, %s39
    %s43 = sphi 0, %s42
    %s59 = sphi 0, %s43
    %s65 = sphi 0, %s67
    %s68 = sphi 0, %s65
    %s69 = sphi 0, %s68
    %s85 = sphi 0, %s69
    %s91 = sphi 0, %s93
    %s94 = sphi 0, %s91
    %s95 = sphi 0, %s94
    %s111 = sphi 0, %s95
    %s117 = sphi 0, %s119
    %s120 = sphi 0, %s117
    %s121 = sphi 0, %s120
    %s137 = sphi 0, %s121
    %s141 = sphi 0, %s141
    %s143 = sphi 0, %s141
    %s144 = sphi 0, %s143
    %s158 = sphi 0, %s144
    %s162 = sphi 0, %s162
    %s164 = sphi 0, %s162
    %s165 = sphi 0, %s164
    %s179 = sphi 0, %s165
    %s187 = sphi 0, %s189
    %s190 = sphi 0, %s187
    %s191 = sphi 0, %s190
    %s207 = sphi 0, %s191
    %s215 = sphi 0, %s217
    %s218 = sphi 0, %s215
    %s219 = sphi 0, %s218
    %s235 = sphi 0, %s219
    %s243 = sphi 0, %s245
    %s246 = sphi 0, %s243
    %s247 = sphi 0, %s246
    %s263 = sphi 0, %s247
  $region4: #{ghost_bottleneck.8} parent=0 // loop_header_branch
    %18 = sbr.rel (%p16) target = $region8
  $region5: #{ghost_bottleneck.8} parent=0 // loop_body
    %s20 = ssub.s32 %s15, 1
    %s21 = ssub.s32 %s15, 2
    %s28 = sadd.s32 1, %s23
    %p29 = scmp.ge.s32.totalorder %s28, 1
    %s30 = scalar_select %p29, 0, %s28
    %s31 = sadd.s32 1, %s22
    %s32 = scalar_select %p29, %s31, %s22
    %p33 = scmp.ge.s32.totalorder %s32, 2
    %s34 = scalar_select %p33, 0, %s32
    %s35 = ssub.s32 %s22, %s34
    %s36 = ssub.s32 %s23, %s30
    %s37 = sor.u32 %s35, %s36
    %p38 = scmp.eq.s32.totalorder %s37, 0
    %s40 = sadd.s32 %s39, 1
    %s41 = scalar_select %p38, %s39, %s40
    %p44 = pneg %p38
    %p45 = scmp.eq.s32.totalorder %s15, 1
    %p46 = por %p44, %p45
    %p47 = scmp.ne.s32.totalorder %s39, %s42
    %p48 = scmp.eq.s32.totalorder %s15, 0
    %p49 = por %p47, %p48
    %p50 = scmp.ne.s32.totalorder %s39, %s42
    %p51 = scmp.eq.s32.totalorder %s20, 1
    %p52 = por %p50, %p51
    %p53 = scmp.ne.s32.totalorder %s42, %s43
    %p54 = scmp.eq.s32.totalorder %s20, 0
    %p55 = por %p53, %p54
    %p56 = scmp.ne.s32.totalorder %s42, %s43
    %p57 = scmp.eq.s32.totalorder %s21, 1
    %p58 = por %p56, %p57
    %p60 = scmp.ne.s32.totalorder %s43, %s59
    %p61 = scmp.eq.s32.totalorder %s21, 0
    %p62 = por %p60, %p61
    %s63 = ssub.s32 %s23, %s30
    %p64 = scmp.eq.s32.totalorder %s63, 0
    %s66 = sadd.s32 %s65, 1
    %s67 = scalar_select %p64, %s65, %s66
    %p70 = pneg %p64
    %p71 = scmp.eq.s32.totalorder %s15, 1
    %p72 = por %p70, %p71
    %p73 = scmp.ne.s32.totalorder %s65, %s68
    %p74 = scmp.eq.s32.totalorder %s15, 0
    %p75 = por %p73, %p74
    %p76 = scmp.ne.s32.totalorder %s65, %s68
    %p77 = scmp.eq.s32.totalorder %s20, 1
    %p78 = por %p76, %p77
    %p79 = scmp.ne.s32.totalorder %s68, %s69
    %p80 = scmp.eq.s32.totalorder %s20, 0
    %p81 = por %p79, %p80
    %p82 = scmp.ne.s32.totalorder %s68, %s69
    %p83 = scmp.eq.s32.totalorder %s21, 1
    %p84 = por %p82, %p83
    %p86 = scmp.ne.s32.totalorder %s69, %s85
    %p87 = scmp.eq.s32.totalorder %s21, 0
    %p88 = por %p86, %p87
    %s89 = ssub.s32 %s23, %s30
    %p90 = scmp.eq.s32.totalorder %s89, 0
    %s92 = sadd.s32 %s91, 1
    %s93 = scalar_select %p90, %s91, %s92
    %p96 = pneg %p90
    %p97 = scmp.eq.s32.totalorder %s15, 1
    %p98 = por %p96, %p97
    %p99 = scmp.ne.s32.totalorder %s91, %s94
    %p100 = scmp.eq.s32.totalorder %s15, 0
    %p101 = por %p99, %p100
    %p102 = scmp.ne.s32.totalorder %s91, %s94
    %p103 = scmp.eq.s32.totalorder %s20, 1
    %p104 = por %p102, %p103
    %p105 = scmp.ne.s32.totalorder %s94, %s95
    %p106 = scmp.eq.s32.totalorder %s20, 0
    %p107 = por %p105, %p106
    %p108 = scmp.ne.s32.totalorder %s94, %s95
    %p109 = scmp.eq.s32.totalorder %s21, 1
    %p110 = por %p108, %p109
    %p112 = scmp.ne.s32.totalorder %s95, %s111
    %p113 = scmp.eq.s32.totalorder %s21, 0
    %p114 = por %p112, %p113
    %s115 = ssub.s32 %s23, %s30
    %p116 = scmp.eq.s32.totalorder %s115, 0
    %s118 = sadd.s32 %s117, 1
    %s119 = scalar_select %p116, %s117, %s118
    %p122 = pneg %p116
    %p123 = scmp.eq.s32.totalorder %s15, 1
    %p124 = por %p122, %p123
    %p125 = scmp.ne.s32.totalorder %s117, %s120
    %p126 = scmp.eq.s32.totalorder %s15, 0
    %p127 = por %p125, %p126
    %p128 = scmp.ne.s32.totalorder %s117, %s120
    %p129 = scmp.eq.s32.totalorder %s20, 1
    %p130 = por %p128, %p129
    %p131 = scmp.ne.s32.totalorder %s120, %s121
    %p132 = scmp.eq.s32.totalorder %s20, 0
    %p133 = por %p131, %p132
    %p134 = scmp.ne.s32.totalorder %s120, %s121
    %p135 = scmp.eq.s32.totalorder %s21, 1
    %p136 = por %p134, %p135
    %p138 = scmp.ne.s32.totalorder %s121, %s137
    %p139 = scmp.eq.s32.totalorder %s21, 0
    %p140 = por %p138, %p139
    %s142 = sadd.s32 %s141, 1
    %p145 = scmp.eq.s32.totalorder %s15, 1
    %p146 = scmp.ne.s32.totalorder %s141, %s143
    %p147 = scmp.eq.s32.totalorder %s15, 0
    %p148 = por %p146, %p147
    %p149 = scmp.ne.s32.totalorder %s141, %s143
    %p150 = scmp.eq.s32.totalorder %s20, 1
    %p151 = por %p149, %p150
    %p152 = scmp.ne.s32.totalorder %s143, %s144
    %p153 = scmp.eq.s32.totalorder %s20, 0
    %p154 = por %p152, %p153
    %p155 = scmp.ne.s32.totalorder %s143, %s144
    %p156 = scmp.eq.s32.totalorder %s21, 1
    %p157 = por %p155, %p156
    %p159 = scmp.ne.s32.totalorder %s144, %s158
    %p160 = scmp.eq.s32.totalorder %s21, 0
    %p161 = por %p159, %p160
    %s163 = sadd.s32 %s162, 1
    %p166 = scmp.eq.s32.totalorder %s15, 1
    %p167 = scmp.ne.s32.totalorder %s162, %s164
    %p168 = scmp.eq.s32.totalorder %s15, 0
    %p169 = por %p167, %p168
    %p170 = scmp.ne.s32.totalorder %s162, %s164
    %p171 = scmp.eq.s32.totalorder %s20, 1
    %p172 = por %p170, %p171
    %p173 = scmp.ne.s32.totalorder %s164, %s165
    %p174 = scmp.eq.s32.totalorder %s20, 0
    %p175 = por %p173, %p174
    %p176 = scmp.ne.s32.totalorder %s164, %s165
    %p177 = scmp.eq.s32.totalorder %s21, 1
    %p178 = por %p176, %p177
    %p180 = scmp.ne.s32.totalorder %s165, %s179
    %p181 = scmp.eq.s32.totalorder %s21, 0
    %p182 = por %p180, %p181
    %s183 = ssub.s32 %s22, %s34
    %s184 = ssub.s32 %s23, %s30
    %s185 = sor.u32 %s183, %s184
    %p186 = scmp.eq.s32.totalorder %s185, 0
    %s188 = sadd.s32 %s187, 1
    %s189 = scalar_select %p186, %s187, %s188
    %p192 = pneg %p186
    %p193 = scmp.eq.s32.totalorder %s15, 1
    %p194 = por %p192, %p193
    %p195 = scmp.ne.s32.totalorder %s187, %s190
    %p196 = scmp.eq.s32.totalorder %s15, 0
    %p197 = por %p195, %p196
    %p198 = scmp.ne.s32.totalorder %s187, %s190
    %p199 = scmp.eq.s32.totalorder %s20, 1
    %p200 = por %p198, %p199
    %p201 = scmp.ne.s32.totalorder %s190, %s191
    %p202 = scmp.eq.s32.totalorder %s20, 0
    %p203 = por %p201, %p202
    %p204 = scmp.ne.s32.totalorder %s190, %s191
    %p205 = scmp.eq.s32.totalorder %s21, 1
    %p206 = por %p204, %p205
    %p208 = scmp.ne.s32.totalorder %s191, %s207
    %p209 = scmp.eq.s32.totalorder %s21, 0
    %p210 = por %p208, %p209
    %s211 = ssub.s32 %s22, %s34
    %s212 = ssub.s32 %s23, %s30
    %s213 = sor.u32 %s211, %s212
    %p214 = scmp.eq.s32.totalorder %s213, 0
    %s216 = sadd.s32 %s215, 1
    %s217 = scalar_select %p214, %s215, %s216
    %p220 = pneg %p214
    %p221 = scmp.eq.s32.totalorder %s15, 1
    %p222 = por %p220, %p221
    %p223 = scmp.ne.s32.totalorder %s215, %s218
    %p224 = scmp.eq.s32.totalorder %s15, 0
    %p225 = por %p223, %p224
    %p226 = scmp.ne.s32.totalorder %s215, %s218
    %p227 = scmp.eq.s32.totalorder %s20, 1
    %p228 = por %p226, %p227
    %p229 = scmp.ne.s32.totalorder %s218, %s219
    %p230 = scmp.eq.s32.totalorder %s20, 0
    %p231 = por %p229, %p230
    %p232 = scmp.ne.s32.totalorder %s218, %s219
    %p233 = scmp.eq.s32.totalorder %s21, 1
    %p234 = por %p232, %p233
    %p236 = scmp.ne.s32.totalorder %s219, %s235
    %p237 = scmp.eq.s32.totalorder %s21, 0
    %p238 = por %p236, %p237
    %s239 = ssub.s32 %s22, %s34
    %s240 = ssub.s32 %s23, %s30
    %s241 = sor.u32 %s239, %s240
    %p242 = scmp.eq.s32.totalorder %s241, 0
    %s244 = sadd.s32 %s243, 1
    %s245 = scalar_select %p242, %s243, %s244
    %p248 = pneg %p242
    %p249 = scmp.eq.s32.totalorder %s15, 1
    %p250 = por %p248, %p249
    %p251 = scmp.ne.s32.totalorder %s243, %s246
    %p252 = scmp.eq.s32.totalorder %s15, 0
    %p253 = por %p251, %p252
    %p254 = scmp.ne.s32.totalorder %s243, %s246
    %p255 = scmp.eq.s32.totalorder %s20, 1
    %p256 = por %p254, %p255
    %p257 = scmp.ne.s32.totalorder %s246, %s247
    %p258 = scmp.eq.s32.totalorder %s20, 0
    %p259 = por %p257, %p258
    %p260 = scmp.ne.s32.totalorder %s246, %s247
    %p261 = scmp.eq.s32.totalorder %s21, 1
    %p262 = por %p260, %p261
    %p264 = scmp.ne.s32.totalorder %s247, %s263
    %p265 = scmp.eq.s32.totalorder %s21, 0
    %p266 = por %p264, %p265
    %p267 = scmp.le.s32.totalorder 1, %s15
    %p268 = scmp.lt.s32.totalorder %s15, 3
    %p269 = pnand %p267, %p268
    %p270 = pneg %p269
    // Predicated region
    $region9: #{ghost_bottleneck.8} parent=5 // pred_check
      _
    $region10: #{ghost_bottleneck.8} parent=5 // pred_check_branch
      %272 = sbr.rel (%p269) target = $region12
    $region11: #{ghost_bottleneck.8} parent=5 // pred_region
      %s273 = ssub.s32 %s15, 1
      // Predicated region
      $region13: #{ghost_bottleneck.8} parent=11 // pred_check
        %p274 = pneg %p81
      $region14: #{ghost_bottleneck.8} parent=11 // pred_check_branch
        %276 = sbr.rel (%p274) target = $region16
      $region15: #{ghost_bottleneck.8} parent=11 // pred_region
        %p277 = scmp.lt.s32.totalorder %s25, 0
        %s278 = scalar_select %p277, %s25, 0
        %s279 = smul.addr %s278, 8
        %s280 = scalar_lea.vmem %s1, %s279
      $region16: #{ghost_bottleneck.8} parent=11 // pred_fallthru
        _
      // Predicated region
      $region17: #{ghost_bottleneck.8} parent=11 // pred_check
        %p281 = pneg %p107
      $region18: #{ghost_bottleneck.8} parent=11 // pred_check_branch
        %283 = sbr.rel (%p281) target = $region20
      $region19: #{ghost_bottleneck.8} parent=11 // pred_region
        %p284 = scmp.lt.s32.totalorder %s25, 0
        %s285 = scalar_select %p284, %s25, 0
        %s286 = smul.addr %s285, 8
        %s287 = scalar_lea.vmem %s2, %s286
      $region20: #{ghost_bottleneck.8} parent=11 // pred_fallthru
        _
      // Predicated region
      $region21: #{ghost_bottleneck.8} parent=11 // pred_check
        %p288 = pneg %p133
      $region22: #{ghost_bottleneck.8} parent=11 // pred_check_branch
        %290 = sbr.rel (%p288) target = $region24
      $region23: #{ghost_bottleneck.8} parent=11 // pred_region
        %p291 = scmp.lt.s32.totalorder %s25, 0
        %s292 = scalar_select %p291, %s25, 0
        %s293 = smul.addr %s292, 8
        %s294 = scalar_lea.vmem %s3, %s293
      $region24: #{ghost_bottleneck.8} parent=11 // pred_fallthru
        _
      // Predicated region
      $region25: #{ghost_bottleneck.8} parent=11 // pred_check
        %p295 = pneg %p154
      $region26: #{ghost_bottleneck.8} parent=11 // pred_check_branch
        %297 = sbr.rel (%p295) target = $region28
      $region27: #{ghost_bottleneck.8} parent=11 // pred_region
        _
      $region28: #{ghost_bottleneck.8} parent=11 // pred_fallthru
        _
      // Predicated region
      $region29: #{ghost_bottleneck.8} parent=11 // pred_check
        %p298 = pneg %p175
      $region30: #{ghost_bottleneck.8} parent=11 // pred_check_branch
        %300 = sbr.rel (%p298) target = $region32
      $region31: #{ghost_bottleneck.8} parent=11 // pred_region
        _
      $region32: #{ghost_bottleneck.8} parent=11 // pred_fallthru
        _
    $region12: #{ghost_bottleneck.8} parent=5 // pred_fallthru
      _
    %p301 = scmp.lt.s32.totalorder %s15, 2
    // Predicated region
    $region33: #{ghost_bottleneck.8} parent=5 // pred_check
      %p302 = pneg %p301
    $region34: #{ghost_bottleneck.8} parent=5 // pred_check_branch
      %304 = sbr.rel (%p302) target = $region36
    $region35: #{ghost_bottleneck.8} parent=5 // pred_region
      // Predicated region
      $region37: #{ghost_bottleneck.8} parent=35 // pred_check
        %p305 = pneg %p49
      $region38: #{ghost_bottleneck.8} parent=35 // pred_check_branch
        %307 = sbr.rel (%p305) target = $region40
      $region39: #{ghost_bottleneck.8} parent=35 // pred_region
        %p308 = scmp.lt.s32.totalorder %s22, 1
        %s309 = scalar_select %p308, %s22, 1
        %p310 = scmp.lt.s32.totalorder %s23, 0
        %s311 = scalar_select %p310, %s23, 0
        %s312 = smul.addr %s311, 2
        %s313 = smul.addr %s309, 2
        %s314 = sadd.s32 %s312, %s313
        %s315 = smul.addr %s314, 8
        %s316 = scalar_lea.vmem %s0, %s315
      $region40: #{ghost_bottleneck.8} parent=35 // pred_fallthru
        _
    $region36: #{ghost_bottleneck.8} parent=5 // pred_fallthru
      _
    %p317 = scmp.le.s32.totalorder 1, %s15
    %p318 = scmp.lt.s32.totalorder %s15, 3
    %p319 = pnand %p317, %p318
    %p320 = pneg %p319
    // Predicated region
    $region41: #{ghost_bottleneck.8} parent=5 // pred_check
      _
    $region42: #{ghost_bottleneck.8} parent=5 // pred_check_branch
      %322 = sbr.rel (%p319) target = $region44
    $region43: #{ghost_bottleneck.8} parent=5 // pred_region
      %s323 = ssub.s32 %s15, 1
      %p324 = scmp.lt.s32.totalorder %s24, 1
      %s325 = scalar_select %p324, %s24, 1
      %p326 = scmp.lt.s32.totalorder %s25, 0
      %s327 = scalar_select %p326, %s25, 0
      %s328 = smul.addr %s327, 2
      %s329 = smul.addr %s325, 2
      %s330 = sadd.s32 %s328, %s329
      %s331 = smul.addr %s330, 8
      %s332 = scalar_lea.vmem %s0, %s331
      %p333 = pneg %p55
      %p334 = pneg %p52
      %p335 = scmp.lt.s32.totalorder %s25, 0
      %s336 = scalar_select %p335, %s25, 0
      %s337 = smul.addr %s336, 8
      %s338 = scalar_lea.vmem %s1, %s337
      %p339 = pneg %p81
      %p340 = pneg %p78
      %p341 = scmp.lt.s32.totalorder %s25, 0
      %s342 = scalar_select %p341, %s25, 0
      %s343 = smul.addr %s342, 8
      %s344 = scalar_lea.vmem %s2, %s343
      %p345 = pneg %p107
      %p346 = pneg %p104
      %p347 = scmp.lt.s32.totalorder %s25, 0
      %s348 = scalar_select %p347, %s25, 0
      %s349 = smul.addr %s348, 8
      %s350 = scalar_lea.vmem %s3, %s349
      %p351 = pneg %p133
      %p352 = pneg %p130
      %p353 = pneg %p154
      %p354 = pneg %p151
      %p355 = pneg %p175
      %p356 = pneg %p172
      %p357 = pneg %p203
      %p358 = pneg %p200
      %p359 = scmp.lt.s32.totalorder %s24, 1
      %s360 = scalar_select %p359, %s24, 1
      %p361 = scmp.lt.s32.totalorder %s25, 0
      %s362 = scalar_select %p361, %s25, 0
      %s363 = smul.addr %s362, 2
      %s364 = smul.addr %s360, 2
      %s365 = sadd.s32 %s363, %s364
      %s366 = smul.addr %s365, 8
      %s367 = scalar_lea.vmem %s6, %s366
      %p368 = pneg %p231
      %p369 = pneg %p228
      %p370 = scmp.lt.s32.totalorder %s24, 1
      %s371 = scalar_select %p370, %s24, 1
      %p372 = scmp.lt.s32.totalorder %s25, 0
      %s373 = scalar_select %p372, %s25, 0
      %s374 = smul.addr %s373, 2
      %s375 = smul.addr %s371, 2
      %s376 = sadd.s32 %s374, %s375
      %s377 = smul.addr %s376, 8
      %s378 = scalar_lea.vmem %s7, %s377
      %p379 = pneg %p259
      %p380 = pneg %p256
      %p381 = scmp.lt.s32.totalorder %s24, 1
      %s382 = scalar_select %p381, %s24, 1
      %p383 = scmp.lt.s32.totalorder %s25, 0
      %s384 = scalar_select %p383, %s25, 0
      %s385 = sadd.s32 %s384, %s382
      %s386 = smul.addr %s385, 8
      %s387 = scalar_lea.vmem %s8, %s386
      %p388 = scmp.lt.s32.totalorder %s24, 1
      %s389 = scalar_select %p388, %s24, 1
      %p390 = scmp.lt.s32.totalorder %s25, 0
      %s391 = scalar_select %p390, %s25, 0
      %s392 = smul.addr %s391, 2
      %s393 = smul.addr %s389, 2
      %s394 = sadd.s32 %s392, %s393
      %s395 = smul.addr %s394, 8
      %s396 = scalar_lea.vmem %s0, %s395
      %p397 = scmp.lt.s32.totalorder %s25, 0
      %s398 = scalar_select %p397, %s25, 0
      %s399 = smul.addr %s398, 8
      %s400 = scalar_lea.vmem %s1, %s399
      %p401 = scmp.lt.s32.totalorder %s25, 0
      %s402 = scalar_select %p401, %s25, 0
      %s403 = smul.addr %s402, 8
      %s404 = scalar_lea.vmem %s2, %s403
      %p405 = scmp.lt.s32.totalorder %s25, 0
      %s406 = scalar_select %p405, %s25, 0
      %s407 = smul.addr %s406, 8
      %s408 = scalar_lea.vmem %s3, %s407
      %p409 = scmp.lt.s32.totalorder %s24, 1
      %s410 = scalar_select %p409, %s24, 1
      %p411 = scmp.lt.s32.totalorder %s25, 0
      %s412 = scalar_select %p411, %s25, 0
      %s413 = smul.addr %s412, 2
      %s414 = smul.addr %s410, 2
      %s415 = sadd.s32 %s413, %s414
      %s416 = smul.addr %s415, 8
      %s417 = scalar_lea.vmem %s6, %s416
      %p418 = scmp.lt.s32.totalorder %s24, 1
      %s419 = scalar_select %p418, %s24, 1
      %p420 = scmp.lt.s32.totalorder %s25, 0
      %s421 = scalar_select %p420, %s25, 0
      %s422 = smul.addr %s421, 2
      %s423 = smul.addr %s419, 2
      %s424 = sadd.s32 %s422, %s423
      %s425 = smul.addr %s424, 8
      %s426 = scalar_lea.vmem %s7, %s425
      %p427 = scmp.lt.s32.totalorder %s24, 1
      %s428 = scalar_select %p427, %s24, 1
      %p429 = scmp.lt.s32.totalorder %s25, 0
      %s430 = scalar_select %p429, %s25, 0
      %s431 = sadd.s32 %s430, %s428
      %s432 = smul.addr %s431, 8
      %s433 = scalar_lea.vmem %s8, %s432
      %v434 = vld [vmem:[%s396] sm:$0xff]
      %v435 = vld [vmem:[%s396 + $0x8] sm:$0xff]
      %v436 = vld [vmem:[%s400] sm:$0xff]
      %438 = vset.pattern.permute.xlu0 0
      %439 = vperm.xlu0 %438, %v436
      %v440 = vpop.permute.xlu0 %439
      %v442 = vmul.f32 %v434, %v440
      %v443 = vmul.f32 %v435, %v440
      %v444 = vld [vmem:[%s404] sm:$0xff]
      %446 = vset.pattern.permute.xlu0 0
      %447 = vperm.xlu0 %446, %v444
      %v448 = vpop.permute.xlu0 %447
      %v450 = vadd.f32 %v442, %v448
      %v451 = vadd.f32 %v443, %v448
      %v452 = vld [vmem:[%s4] sm:$0x3]
      %v453 = vld [vmem:[%s5] sm:$0x3]
      %vm454 = vcmp.lt.s32.totalorder %v452, 16
      %v455 = vsel %vm454, 1, 0
      %v456 = vlaneseq
      %v457 = vshrl.u32 %v456, 7
      %v458 = vsub.s32 0, %v457
      %v459 = vrot.slane %v455, %v458
      %v460 = vlaneseq
      %v461 = vshrl.u32 %v460, 7
      %v462 = vsub.s32 1, %v461
      %v463 = vrot.slane %v455, %v462
      %vm464 = vcmp.eq.s32.totalorder %v459, 1
      %vm465 = vcmp.eq.s32.totalorder %v463, 1
      %v466 = vsel %vm464, %v450, 0.0
      %v467 = vsel %vm465, %v451, 0.0
      %468 = vst [vmem:[%s417] sm:$0xff] %v466
      %469 = vst [vmem:[%s417 + $0x8] sm:$0xff] %v467
      %vm470 = vcmp.ge.s32.totalorder %v452, 2
      %vm471 = vcmp.lt.s32.totalorder %v452, 18
      %vm472 = vmand %vm470, %vm471
      %vm473 = vcmp.ge.s32.totalorder %v453, 2
      %vm474 = vmand %vm472, %vm473
      %vm475 = vcmp.lt.s32.totalorder %v453, 18
      %vm476 = vmand %vm474, %vm475
      %477 = vrot.lane.b32.xlu0 %v466, 34
      %v478 = vpop.permute.xlu0 %477
      %479 = vrot.lane.b32.xlu0 %v467, 34
      %v480 = vpop.permute.xlu0 %479
      %v481 = vlaneseq
      %v482 = vand.u32 %v481, 127
      %vm483 = vcmp.lt.s32.totalorder %v482, 34
      %v484 = vsel %vm483, %v478, %v480
      %v485 = vsel %vm483, %v480, %v478
      %v486 = vld [vmem:[%s408] sm:$0xff]
      %v487 = vsel %vm476, 1, 0
      %v488 = vlaneseq
      %v489 = vshrl.u32 %v488, 7
      %v490 = vsub.s32 0, %v489
      %v491 = vrot.slane %v487, %v490
      %v492 = vlaneseq
      %v493 = vshrl.u32 %v492, 7
      %v494 = vsub.s32 1, %v493
      %v495 = vrot.slane %v487, %v494
      %vm496 = vcmp.eq.s32.totalorder %v491, 1
      %vm497 = vcmp.eq.s32.totalorder %v495, 1
      %v498 = vsel %vm496, %v485, 0.0
      %v499 = vsel %vm497, %v484, 0.0
      %501 = vset.pattern.permute.xlu0 0
      %502 = vperm.xlu0 %501, %v486
      %v503 = vpop.permute.xlu0 %502
      %v505 = vmul.f32 %v503, %v498
      %v506 = vmul.f32 %v503, %v499
      %v507 = vadd.f32 %v505, 0.0
      %v508 = vadd.f32 %v506, 0.0
      %vm509 = vcmp.ge.s32.totalorder %v453, 1
      %vm510 = vmand %vm472, %vm509
      %vm511 = vcmp.lt.s32.totalorder %v453, 17
      %vm512 = vmand %vm510, %vm511
      %513 = vrot.lane.b32.xlu0 %v466, 33
      %v514 = vpop.permute.xlu0 %513
      %515 = vrot.lane.b32.xlu0 %v467, 33
      %v516 = vpop.permute.xlu0 %515
      %vm517 = vcmp.lt.s32.totalorder %v482, 33
      %v518 = vsel %vm517, %v514, %v516
      %v519 = vsel %vm517, %v516, %v514
      %v520 = vsel %vm512, 1, 0
      %v521 = vlaneseq
      %v522 = vshrl.u32 %v521, 7
      %v523 = vsub.s32 0, %v522
      %v524 = vrot.slane %v520, %v523
      %v525 = vlaneseq
      %v526 = vshrl.u32 %v525, 7
      %v527 = vsub.s32 1, %v526
      %v528 = vrot.slane %v520, %v527
      %vm529 = vcmp.eq.s32.totalorder %v524, 1
      %vm530 = vcmp.eq.s32.totalorder %v528, 1
      %v531 = vsel %vm529, %v519, 0.0
      %v532 = vsel %vm530, %v518, 0.0
      %533 = vset.pattern.permute.xlu0 1
      %534 = vperm.xlu0 %533, %v486
      %v535 = vpop.permute.xlu0 %534
      %v537 = vmul.f32 %v535, %v531
      %v538 = vmul.f32 %v535, %v532
      %v539 = vadd.f32 %v507, %v537
      %v540 = vadd.f32 %v508, %v538
      %vm541 = vcmp.ge.s32.totalorder %v453, 0
      %vm542 = vmand %vm472, %vm541
      %vm543 = vcmp.lt.s32.totalorder %v453, 16
      %vm544 = vmand %vm542, %vm543
      %545 = vrot.lane.b32.xlu0 %v466, 32
      %v546 = vpop.permute.xlu0 %545
      %547 = vrot.lane.b32.xlu0 %v467, 32
      %v548 = vpop.permute.xlu0 %547
      %vm549 = vcmp.lt.s32.totalorder %v482, 32
      %v550 = vsel %vm549, %v546, %v548
      %v551 = vsel %vm549, %v548, %v546
      %v552 = vsel %vm544, 1, 0
      %v553 = vlaneseq
      %v554 = vshrl.u32 %v553, 7
      %v555 = vsub.s32 0, %v554
      %v556 = vrot.slane %v552, %v555
      %v557 = vlaneseq
      %v558 = vshrl.u32 %v557, 7
      %v559 = vsub.s32 1, %v558
      %v560 = vrot.slane %v552, %v559
      %vm561 = vcmp.eq.s32.totalorder %v556, 1
      %vm562 = vcmp.eq.s32.totalorder %v560, 1
      %v563 = vsel %vm561, %v551, 0.0
      %v564 = vsel %vm562, %v550, 0.0
      %565 = vset.pattern.permute.xlu0 2
      %566 = vperm.xlu0 %565, %v486
      %v567 = vpop.permute.xlu0 %566
      %v569 = vmul.f32 %v567, %v563
      %v570 = vmul.f32 %v567, %v564
      %v571 = vadd.f32 %v539, %v569
      %v572 = vadd.f32 %v540, %v570
      %vm573 = vcmp.ge.s32.totalorder %v453, 4294967295
      %vm574 = vmand %vm472, %vm573
      %vm575 = vcmp.lt.s32.totalorder %v453, 15
      %vm576 = vmand %vm574, %vm575
      %577 = vrot.lane.b32.xlu0 %v466, 31
      %v578 = vpop.permute.xlu0 %577
      %579 = vrot.lane.b32.xlu0 %v467, 31
      %v580 = vpop.permute.xlu0 %579
      %vm581 = vcmp.lt.s32.totalorder %v482, 31
      %v582 = vsel %vm581, %v578, %v580
      %v583 = vsel %vm581, %v580, %v578
      %v584 = vsel %vm576, 1, 0
      %v585 = vlaneseq
      %v586 = vshrl.u32 %v585, 7
      %v587 = vsub.s32 0, %v586
      %v588 = vrot.slane %v584, %v587
      %v589 = vlaneseq
      %v590 = vshrl.u32 %v589, 7
      %v591 = vsub.s32 1, %v590
      %v592 = vrot.slane %v584, %v591
      %vm593 = vcmp.eq.s32.totalorder %v588, 1
      %vm594 = vcmp.eq.s32.totalorder %v592, 1
      %v595 = vsel %vm593, %v583, 0.0
      %v596 = vsel %vm594, %v582, 0.0
      %597 = vset.pattern.permute.xlu0 3
      %598 = vperm.xlu0 %597, %v486
      %v599 = vpop.permute.xlu0 %598
      %v601 = vmul.f32 %v599, %v595
      %v602 = vmul.f32 %v599, %v596
      %v603 = vadd.f32 %v571, %v601
      %v604 = vadd.f32 %v572, %v602
      %vm605 = vcmp.ge.s32.totalorder %v453, 4294967294
      %vm606 = vmand %vm472, %vm605
      %vm607 = vcmp.lt.s32.totalorder %v453, 14
      %vm608 = vmand %vm606, %vm607
      %609 = vrot.lane.b32.xlu0 %v466, 30
      %v610 = vpop.permute.xlu0 %609
      %611 = vrot.lane.b32.xlu0 %v467, 30
      %v612 = vpop.permute.xlu0 %611
      %vm613 = vcmp.lt.s32.totalorder %v482, 30
      %v614 = vsel %vm613, %v610, %v612
      %v615 = vsel %vm613, %v612, %v610
      %v616 = vsel %vm608, 1, 0
      %v617 = vlaneseq
      %v618 = vshrl.u32 %v617, 7
      %v619 = vsub.s32 0, %v618
      %v620 = vrot.slane %v616, %v619
      %v621 = vlaneseq
      %v622 = vshrl.u32 %v621, 7
      %v623 = vsub.s32 1, %v622
      %v624 = vrot.slane %v616, %v623
      %vm625 = vcmp.eq.s32.totalorder %v620, 1
      %vm626 = vcmp.eq.s32.totalorder %v624, 1
      %v627 = vsel %vm625, %v615, 0.0
      %v628 = vsel %vm626, %v614, 0.0
      %629 = vset.pattern.permute.xlu0 4
      %630 = vperm.xlu0 %629, %v486
      %v631 = vpop.permute.xlu0 %630
      %v633 = vmul.f32 %v631, %v627
      %v634 = vmul.f32 %v631, %v628
      %v635 = vadd.f32 %v603, %v633
      %v636 = vadd.f32 %v604, %v634
      %vm637 = vcmp.ge.s32.totalorder %v452, 1
      %vm638 = vcmp.lt.s32.totalorder %v452, 17
      %vm639 = vmand %vm637, %vm638
      %vm640 = vmand %vm639, %vm473
      %vm641 = vmand %vm640, %vm475
      %642 = vrot.lane.b32.xlu0 %v466, 18
      %v643 = vpop.permute.xlu0 %642
      %644 = vrot.lane.b32.xlu0 %v467, 18
      %v645 = vpop.permute.xlu0 %644
      %vm646 = vcmp.lt.s32.totalorder %v482, 18
      %v647 = vsel %vm646, %v643, %v645
      %v648 = vsel %vm646, %v645, %v643
      %v649 = vsel %vm641, 1, 0
      %v650 = vlaneseq
      %v651 = vshrl.u32 %v650, 7
      %v652 = vsub.s32 0, %v651
      %v653 = vrot.slane %v649, %v652
      %v654 = vlaneseq
      %v655 = vshrl.u32 %v654, 7
      %v656 = vsub.s32 1, %v655
      %v657 = vrot.slane %v649, %v656
      %vm658 = vcmp.eq.s32.totalorder %v653, 1
      %vm659 = vcmp.eq.s32.totalorder %v657, 1
      %v660 = vsel %vm658, %v648, 0.0
      %v661 = vsel %vm659, %v647, 0.0
      %662 = vset.pattern.permute.xlu0 5
      %663 = vperm.xlu0 %662, %v486
      %v664 = vpop.permute.xlu0 %663
      %v666 = vmul.f32 %v664, %v660
      %v667 = vmul.f32 %v664, %v661
      %v668 = vadd.f32 %v635, %v666
      %v669 = vadd.f32 %v636, %v667
      %vm670 = vmand %vm639, %vm509
      %vm671 = vmand %vm670, %vm511
      %672 = vrot.lane.b32.xlu0 %v466, 17
      %v673 = vpop.permute.xlu0 %672
      %674 = vrot.lane.b32.xlu0 %v467, 17
      %v675 = vpop.permute.xlu0 %674
      %vm676 = vcmp.lt.s32.totalorder %v482, 17
      %v677 = vsel %vm676, %v673, %v675
      %v678 = vsel %vm676, %v675, %v673
      %v679 = vsel %vm671, 1, 0
      %v680 = vlaneseq
      %v681 = vshrl.u32 %v680, 7
      %v682 = vsub.s32 0, %v681
      %v683 = vrot.slane %v679, %v682
      %v684 = vlaneseq
      %v685 = vshrl.u32 %v684, 7
      %v686 = vsub.s32 1, %v685
      %v687 = vrot.slane %v679, %v686
      %vm688 = vcmp.eq.s32.totalorder %v683, 1
      %vm689 = vcmp.eq.s32.totalorder %v687, 1
      %v690 = vsel %vm688, %v678, 0.0
      %v691 = vsel %vm689, %v677, 0.0
      %692 = vset.pattern.permute.xlu0 6
      %693 = vperm.xlu0 %692, %v486
      %v694 = vpop.permute.xlu0 %693
      %v696 = vmul.f32 %v694, %v690
      %v697 = vmul.f32 %v694, %v691
      %v698 = vadd.f32 %v668, %v696
      %v699 = vadd.f32 %v669, %v697
      %vm700 = vmand %vm639, %vm541
      %vm701 = vmand %vm700, %vm543
      %702 = vrot.lane.b32.xlu0 %v466, 16
      %v703 = vpop.permute.xlu0 %702
      %704 = vrot.lane.b32.xlu0 %v467, 16
      %v705 = vpop.permute.xlu0 %704
      %vm706 = vcmp.lt.s32.totalorder %v482, 16
      %v707 = vsel %vm706, %v703, %v705
      %v708 = vsel %vm706, %v705, %v703
      %v709 = vsel %vm701, 1, 0
      %v710 = vlaneseq
      %v711 = vshrl.u32 %v710, 7
      %v712 = vsub.s32 0, %v711
      %v713 = vrot.slane %v709, %v712
      %v714 = vlaneseq
      %v715 = vshrl.u32 %v714, 7
      %v716 = vsub.s32 1, %v715
      %v717 = vrot.slane %v709, %v716
      %vm718 = vcmp.eq.s32.totalorder %v713, 1
      %vm719 = vcmp.eq.s32.totalorder %v717, 1
      %v720 = vsel %vm718, %v708, 0.0
      %v721 = vsel %vm719, %v707, 0.0
      %722 = vset.pattern.permute.xlu0 7
      %723 = vperm.xlu0 %722, %v486
      %v724 = vpop.permute.xlu0 %723
      %v726 = vmul.f32 %v724, %v720
      %v727 = vmul.f32 %v724, %v721
      %v728 = vadd.f32 %v698, %v726
      %v729 = vadd.f32 %v699, %v727
      %vm730 = vmand %vm639, %vm573
      %vm731 = vmand %vm730, %vm575
      %732 = vrot.lane.b32.xlu0 %v466, 15
      %v733 = vpop.permute.xlu0 %732
      %734 = vrot.lane.b32.xlu0 %v467, 15
      %v735 = vpop.permute.xlu0 %734
      %vm736 = vcmp.lt.s32.totalorder %v482, 15
      %v737 = vsel %vm736, %v733, %v735
      %v738 = vsel %vm736, %v735, %v733
      %v739 = vsel %vm731, 1, 0
      %v740 = vlaneseq
      %v741 = vshrl.u32 %v740, 7
      %v742 = vsub.s32 0, %v741
      %v743 = vrot.slane %v739, %v742
      %v744 = vlaneseq
      %v745 = vshrl.u32 %v744, 7
      %v746 = vsub.s32 1, %v745
      %v747 = vrot.slane %v739, %v746
      %vm748 = vcmp.eq.s32.totalorder %v743, 1
      %vm749 = vcmp.eq.s32.totalorder %v747, 1
      %v750 = vsel %vm748, %v738, 0.0
      %v751 = vsel %vm749, %v737, 0.0
      %752 = vset.pattern.permute.xlu0 8
      %753 = vperm.xlu0 %752, %v486
      %v754 = vpop.permute.xlu0 %753
      %v756 = vmul.f32 %v754, %v750
      %v757 = vmul.f32 %v754, %v751
      %v758 = vadd.f32 %v728, %v756
      %v759 = vadd.f32 %v729, %v757
      %vm760 = vmand %vm639, %vm605
      %vm761 = vmand %vm760, %vm607
      %762 = vrot.lane.b32.xlu0 %v466, 14
      %v763 = vpop.permute.xlu0 %762
      %764 = vrot.lane.b32.xlu0 %v467, 14
      %v765 = vpop.permute.xlu0 %764
      %vm766 = vcmp.lt.s32.totalorder %v482, 14
      %v767 = vsel %vm766, %v763, %v765
      %v768 = vsel %vm766, %v765, %v763
      %v769 = vsel %vm761, 1, 0
      %v770 = vlaneseq
      %v771 = vshrl.u32 %v770, 7
      %v772 = vsub.s32 0, %v771
      %v773 = vrot.slane %v769, %v772
      %v774 = vlaneseq
      %v775 = vshrl.u32 %v774, 7
      %v776 = vsub.s32 1, %v775
      %v777 = vrot.slane %v769, %v776
      %vm778 = vcmp.eq.s32.totalorder %v773, 1
      %vm779 = vcmp.eq.s32.totalorder %v777, 1
      %v780 = vsel %vm778, %v768, 0.0
      %v781 = vsel %vm779, %v767, 0.0
      %782 = vset.pattern.permute.xlu0 9
      %783 = vperm.xlu0 %782, %v486
      %v784 = vpop.permute.xlu0 %783
      %v786 = vmul.f32 %v784, %v780
      %v787 = vmul.f32 %v784, %v781
      %v788 = vadd.f32 %v758, %v786
      %v789 = vadd.f32 %v759, %v787
      %vm790 = vcmp.ge.s32.totalorder %v452, 0
      %vm791 = vmand %vm790, %vm454
      %vm792 = vmand %vm791, %vm473
      %vm793 = vmand %vm792, %vm475
      %794 = vrot.lane.b32.xlu0 %v466, 2
      %v795 = vpop.permute.xlu0 %794
      %796 = vrot.lane.b32.xlu0 %v467, 2
      %v797 = vpop.permute.xlu0 %796
      %vm798 = vcmp.lt.s32.totalorder %v482, 2
      %v799 = vsel %vm798, %v795, %v797
      %v800 = vsel %vm798, %v797, %v795
      %v801 = vsel %vm793, 1, 0
      %v802 = vlaneseq
      %v803 = vshrl.u32 %v802, 7
      %v804 = vsub.s32 0, %v803
      %v805 = vrot.slane %v801, %v804
      %v806 = vlaneseq
      %v807 = vshrl.u32 %v806, 7
      %v808 = vsub.s32 1, %v807
      %v809 = vrot.slane %v801, %v808
      %vm810 = vcmp.eq.s32.totalorder %v805, 1
      %vm811 = vcmp.eq.s32.totalorder %v809, 1
      %v812 = vsel %vm810, %v800, 0.0
      %v813 = vsel %vm811, %v799, 0.0
      %814 = vset.pattern.permute.xlu0 10
      %815 = vperm.xlu0 %814, %v486
      %v816 = vpop.permute.xlu0 %815
      %v818 = vmul.f32 %v816, %v812
      %v819 = vmul.f32 %v816, %v813
      %v820 = vadd.f32 %v788, %v818
      %v821 = vadd.f32 %v789, %v819
      %vm822 = vmand %vm791, %vm509
      %vm823 = vmand %vm822, %vm511
      %824 = vrot.lane.b32.xlu0 %v466, 1
      %v825 = vpop.permute.xlu0 %824
      %826 = vrot.lane.b32.xlu0 %v467, 1
      %v827 = vpop.permute.xlu0 %826
      %vm828 = vcmp.lt.s32.totalorder %v482, 1
      %v829 = vsel %vm828, %v825, %v827
      %v830 = vsel %vm828, %v827, %v825
      %v831 = vsel %vm823, 1, 0
      %v832 = vlaneseq
      %v833 = vshrl.u32 %v832, 7
      %v834 = vsub.s32 0, %v833
      %v835 = vrot.slane %v831, %v834
      %v836 = vlaneseq
      %v837 = vshrl.u32 %v836, 7
      %v838 = vsub.s32 1, %v837
      %v839 = vrot.slane %v831, %v838
      %vm840 = vcmp.eq.s32.totalorder %v835, 1
      %vm841 = vcmp.eq.s32.totalorder %v839, 1
      %v842 = vsel %vm840, %v830, 0.0
      %v843 = vsel %vm841, %v829, 0.0
      %844 = vset.pattern.permute.xlu0 11
      %845 = vperm.xlu0 %844, %v486
      %v846 = vpop.permute.xlu0 %845
      %v848 = vmul.f32 %v846, %v842
      %v849 = vmul.f32 %v846, %v843
      %v850 = vadd.f32 %v820, %v848
      %v851 = vadd.f32 %v821, %v849
      %vm852 = vmand %vm791, %vm541
      %vm853 = vmand %vm852, %vm543
      %v854 = vsel %vm853, 1, 0
      %v855 = vlaneseq
      %v856 = vshrl.u32 %v855, 7
      %v857 = vsub.s32 0, %v856
      %v858 = vrot.slane %v854, %v857
      %v859 = vlaneseq
      %v860 = vshrl.u32 %v859, 7
      %v861 = vsub.s32 1, %v860
      %v862 = vrot.slane %v854, %v861
      %vm863 = vcmp.eq.s32.totalorder %v858, 1
      %vm864 = vcmp.eq.s32.totalorder %v862, 1
      %v865 = vsel %vm863, %v466, 0.0
      %v866 = vsel %vm864, %v467, 0.0
      %867 = vset.pattern.permute.xlu0 12
      %868 = vperm.xlu0 %867, %v486
      %v869 = vpop.permute.xlu0 %868
      %v871 = vmul.f32 %v869, %v865
      %v872 = vmul.f32 %v869, %v866
      %v873 = vadd.f32 %v850, %v871
      %v874 = vadd.f32 %v851, %v872
      %vm875 = vmand %vm791, %vm573
      %vm876 = vmand %vm875, %vm575
      %877 = vrot.lane.b32.xlu0 %v466, 127
      %v878 = vpop.permute.xlu0 %877
      %879 = vrot.lane.b32.xlu0 %v467, 127
      %v880 = vpop.permute.xlu0 %879
      %vm881 = vcmp.lt.s32.totalorder %v482, 127
      %v882 = vsel %vm881, %v878, %v880
      %v883 = vsel %vm881, %v880, %v878
      %v884 = vsel %vm876, 1, 0
      %v885 = vlaneseq
      %v886 = vshrl.u32 %v885, 7
      %v887 = vsub.s32 0, %v886
      %v888 = vrot.slane %v884, %v887
      %v889 = vlaneseq
      %v890 = vshrl.u32 %v889, 7
      %v891 = vsub.s32 1, %v890
      %v892 = vrot.slane %v884, %v891
      %vm893 = vcmp.eq.s32.totalorder %v888, 1
      %vm894 = vcmp.eq.s32.totalorder %v892, 1
      %v895 = vsel %vm893, %v882, 0.0
      %v896 = vsel %vm894, %v883, 0.0
      %897 = vset.pattern.permute.xlu0 13
      %898 = vperm.xlu0 %897, %v486
      %v899 = vpop.permute.xlu0 %898
      %v901 = vmul.f32 %v899, %v895
      %v902 = vmul.f32 %v899, %v896
      %v903 = vadd.f32 %v873, %v901
      %v904 = vadd.f32 %v874, %v902
      %vm905 = vmand %vm791, %vm605
      %vm906 = vmand %vm905, %vm607
      %907 = vrot.lane.b32.xlu0 %v466, 126
      %v908 = vpop.permute.xlu0 %907
      %909 = vrot.lane.b32.xlu0 %v467, 126
      %v910 = vpop.permute.xlu0 %909
      %vm911 = vcmp.lt.s32.totalorder %v482, 126
      %v912 = vsel %vm911, %v908, %v910
      %v913 = vsel %vm911, %v910, %v908
      %v914 = vsel %vm906, 1, 0
      %v915 = vlaneseq
      %v916 = vshrl.u32 %v915, 7
      %v917 = vsub.s32 0, %v916
      %v918 = vrot.slane %v914, %v917
      %v919 = vlaneseq
      %v920 = vshrl.u32 %v919, 7
      %v921 = vsub.s32 1, %v920
      %v922 = vrot.slane %v914, %v921
      %vm923 = vcmp.eq.s32.totalorder %v918, 1
      %vm924 = vcmp.eq.s32.totalorder %v922, 1
      %v925 = vsel %vm923, %v912, 0.0
      %v926 = vsel %vm924, %v913, 0.0
      %927 = vset.pattern.permute.xlu0 14
      %928 = vperm.xlu0 %927, %v486
      %v929 = vpop.permute.xlu0 %928
      %v931 = vmul.f32 %v929, %v925
      %v932 = vmul.f32 %v929, %v926
      %v933 = vadd.f32 %v903, %v931
      %v934 = vadd.f32 %v904, %v932
      %vm935 = vcmp.ge.s32.totalorder %v452, 4294967295
      %vm936 = vcmp.lt.s32.totalorder %v452, 15
      %vm937 = vmand %vm935, %vm936
      %vm938 = vmand %vm937, %vm473
      %vm939 = vmand %vm938, %vm475
      %940 = vrot.lane.b32.xlu0 %v466, 114
      %v941 = vpop.permute.xlu0 %940
      %942 = vrot.lane.b32.xlu0 %v467, 114
      %v943 = vpop.permute.xlu0 %942
      %vm944 = vcmp.lt.s32.totalorder %v482, 114
      %v945 = vsel %vm944, %v941, %v943
      %v946 = vsel %vm944, %v943, %v941
      %v947 = vsel %vm939, 1, 0
      %v948 = vlaneseq
      %v949 = vshrl.u32 %v948, 7
      %v950 = vsub.s32 0, %v949
      %v951 = vrot.slane %v947, %v950
      %v952 = vlaneseq
      %v953 = vshrl.u32 %v952, 7
      %v954 = vsub.s32 1, %v953
      %v955 = vrot.slane %v947, %v954
      %vm956 = vcmp.eq.s32.totalorder %v951, 1
      %vm957 = vcmp.eq.s32.totalorder %v955, 1
      %v958 = vsel %vm956, %v945, 0.0
      %v959 = vsel %vm957, %v946, 0.0
      %960 = vset.pattern.permute.xlu0 15
      %961 = vperm.xlu0 %960, %v486
      %v962 = vpop.permute.xlu0 %961
      %v964 = vmul.f32 %v962, %v958
      %v965 = vmul.f32 %v962, %v959
      %v966 = vadd.f32 %v933, %v964
      %v967 = vadd.f32 %v934, %v965
      %vm968 = vmand %vm937, %vm509
      %vm969 = vmand %vm968, %vm511
      %970 = vrot.lane.b32.xlu0 %v466, 113
      %v971 = vpop.permute.xlu0 %970
      %972 = vrot.lane.b32.xlu0 %v467, 113
      %v973 = vpop.permute.xlu0 %972
      %vm974 = vcmp.lt.s32.totalorder %v482, 113
      %v975 = vsel %vm974, %v971, %v973
      %v976 = vsel %vm974, %v973, %v971
      %v977 = vsel %vm969, 1, 0
      %v978 = vlaneseq
      %v979 = vshrl.u32 %v978, 7
      %v980 = vsub.s32 0, %v979
      %v981 = vrot.slane %v977, %v980
      %v982 = vlaneseq
      %v983 = vshrl.u32 %v982, 7
      %v984 = vsub.s32 1, %v983
      %v985 = vrot.slane %v977, %v984
      %vm986 = vcmp.eq.s32.totalorder %v981, 1
      %vm987 = vcmp.eq.s32.totalorder %v985, 1
      %v988 = vsel %vm986, %v975, 0.0
      %v989 = vsel %vm987, %v976, 0.0
      %990 = vset.pattern.permute.xlu0 16
      %991 = vperm.xlu0 %990, %v486
      %v992 = vpop.permute.xlu0 %991
      %v994 = vmul.f32 %v992, %v988
      %v995 = vmul.f32 %v992, %v989
      %v996 = vadd.f32 %v966, %v994
      %v997 = vadd.f32 %v967, %v995
      %vm998 = vmand %vm937, %vm541
      %vm999 = vmand %vm998, %vm543
      %1000 = vrot.lane.b32.xlu0 %v466, 112
      %v1001 = vpop.permute.xlu0 %1000
      %1002 = vrot.lane.b32.xlu0 %v467, 112
      %v1003 = vpop.permute.xlu0 %1002
      %vm1004 = vcmp.lt.s32.totalorder %v482, 112
      %v1005 = vsel %vm1004, %v1001, %v1003
      %v1006 = vsel %vm1004, %v1003, %v1001
      %v1007 = vsel %vm999, 1, 0
      %v1008 = vlaneseq
      %v1009 = vshrl.u32 %v1008, 7
      %v1010 = vsub.s32 0, %v1009
      %v1011 = vrot.slane %v1007, %v1010
      %v1012 = vlaneseq
      %v1013 = vshrl.u32 %v1012, 7
      %v1014 = vsub.s32 1, %v1013
      %v1015 = vrot.slane %v1007, %v1014
      %vm1016 = vcmp.eq.s32.totalorder %v1011, 1
      %vm1017 = vcmp.eq.s32.totalorder %v1015, 1
      %v1018 = vsel %vm1016, %v1005, 0.0
      %v1019 = vsel %vm1017, %v1006, 0.0
      %1020 = vset.pattern.permute.xlu0 17
      %1021 = vperm.xlu0 %1020, %v486
      %v1022 = vpop.permute.xlu0 %1021
      %v1024 = vmul.f32 %v1022, %v1018
      %v1025 = vmul.f32 %v1022, %v1019
      %v1026 = vadd.f32 %v996, %v1024
      %v1027 = vadd.f32 %v997, %v1025
      %vm1028 = vmand %vm937, %vm573
      %vm1029 = vmand %vm1028, %vm575
      %1030 = vrot.lane.b32.xlu0 %v466, 111
      %v1031 = vpop.permute.xlu0 %1030
      %1032 = vrot.lane.b32.xlu0 %v467, 111
      %v1033 = vpop.permute.xlu0 %1032
      %vm1034 = vcmp.lt.s32.totalorder %v482, 111
      %v1035 = vsel %vm1034, %v1031, %v1033
      %v1036 = vsel %vm1034, %v1033, %v1031
      %v1037 = vsel %vm1029, 1, 0
      %v1038 = vlaneseq
      %v1039 = vshrl.u32 %v1038, 7
      %v1040 = vsub.s32 0, %v1039
      %v1041 = vrot.slane %v1037, %v1040
      %v1042 = vlaneseq
      %v1043 = vshrl.u32 %v1042, 7
      %v1044 = vsub.s32 1, %v1043
      %v1045 = vrot.slane %v1037, %v1044
      %vm1046 = vcmp.eq.s32.totalorder %v1041, 1
      %vm1047 = vcmp.eq.s32.totalorder %v1045, 1
      %v1048 = vsel %vm1046, %v1035, 0.0
      %v1049 = vsel %vm1047, %v1036, 0.0
      %1050 = vset.pattern.permute.xlu0 18
      %1051 = vperm.xlu0 %1050, %v486
      %v1052 = vpop.permute.xlu0 %1051
      %v1054 = vmul.f32 %v1052, %v1048
      %v1055 = vmul.f32 %v1052, %v1049
      %v1056 = vadd.f32 %v1026, %v1054
      %v1057 = vadd.f32 %v1027, %v1055
      %vm1058 = vmand %vm937, %vm605
      %vm1059 = vmand %vm1058, %vm607
      %1060 = vrot.lane.b32.xlu0 %v466, 110
      %v1061 = vpop.permute.xlu0 %1060
      %1062 = vrot.lane.b32.xlu0 %v467, 110
      %v1063 = vpop.permute.xlu0 %1062
      %vm1064 = vcmp.lt.s32.totalorder %v482, 110
      %v1065 = vsel %vm1064, %v1061, %v1063
      %v1066 = vsel %vm1064, %v1063, %v1061
      %v1067 = vsel %vm1059, 1, 0
      %v1068 = vlaneseq
      %v1069 = vshrl.u32 %v1068, 7
      %v1070 = vsub.s32 0, %v1069
      %v1071 = vrot.slane %v1067, %v1070
      %v1072 = vlaneseq
      %v1073 = vshrl.u32 %v1072, 7
      %v1074 = vsub.s32 1, %v1073
      %v1075 = vrot.slane %v1067, %v1074
      %vm1076 = vcmp.eq.s32.totalorder %v1071, 1
      %vm1077 = vcmp.eq.s32.totalorder %v1075, 1
      %v1078 = vsel %vm1076, %v1065, 0.0
      %v1079 = vsel %vm1077, %v1066, 0.0
      %1080 = vset.pattern.permute.xlu0 19
      %1081 = vperm.xlu0 %1080, %v486
      %v1082 = vpop.permute.xlu0 %1081
      %v1084 = vmul.f32 %v1082, %v1078
      %v1085 = vmul.f32 %v1082, %v1079
      %v1086 = vadd.f32 %v1056, %v1084
      %v1087 = vadd.f32 %v1057, %v1085
      %vm1088 = vcmp.ge.s32.totalorder %v452, 4294967294
      %vm1089 = vcmp.lt.s32.totalorder %v452, 14
      %vm1090 = vmand %vm1088, %vm1089
      %vm1091 = vmand %vm1090, %vm473
      %vm1092 = vmand %vm1091, %vm475
      %1093 = vrot.lane.b32.xlu0 %v466, 98
      %v1094 = vpop.permute.xlu0 %1093
      %1095 = vrot.lane.b32.xlu0 %v467, 98
      %v1096 = vpop.permute.xlu0 %1095
      %vm1097 = vcmp.lt.s32.totalorder %v482, 98
      %v1098 = vsel %vm1097, %v1094, %v1096
      %v1099 = vsel %vm1097, %v1096, %v1094
      %v1100 = vsel %vm1092, 1, 0
      %v1101 = vlaneseq
      %v1102 = vshrl.u32 %v1101, 7
      %v1103 = vsub.s32 0, %v1102
      %v1104 = vrot.slane %v1100, %v1103
      %v1105 = vlaneseq
      %v1106 = vshrl.u32 %v1105, 7
      %v1107 = vsub.s32 1, %v1106
      %v1108 = vrot.slane %v1100, %v1107
      %vm1109 = vcmp.eq.s32.totalorder %v1104, 1
      %vm1110 = vcmp.eq.s32.totalorder %v1108, 1
      %v1111 = vsel %vm1109, %v1098, 0.0
      %v1112 = vsel %vm1110, %v1099, 0.0
      %1113 = vset.pattern.permute.xlu0 20
      %1114 = vperm.xlu0 %1113, %v486
      %v1115 = vpop.permute.xlu0 %1114
      %v1117 = vmul.f32 %v1115, %v1111
      %v1118 = vmul.f32 %v1115, %v1112
      %v1119 = vadd.f32 %v1086, %v1117
      %v1120 = vadd.f32 %v1087, %v1118
      %vm1121 = vmand %vm1090, %vm509
      %vm1122 = vmand %vm1121, %vm511
      %1123 = vrot.lane.b32.xlu0 %v466, 97
      %v1124 = vpop.permute.xlu0 %1123
      %1125 = vrot.lane.b32.xlu0 %v467, 97
      %v1126 = vpop.permute.xlu0 %1125
      %vm1127 = vcmp.lt.s32.totalorder %v482, 97
      %v1128 = vsel %vm1127, %v1124, %v1126
      %v1129 = vsel %vm1127, %v1126, %v1124
      %v1130 = vsel %vm1122, 1, 0
      %v1131 = vlaneseq
      %v1132 = vshrl.u32 %v1131, 7
      %v1133 = vsub.s32 0, %v1132
      %v1134 = vrot.slane %v1130, %v1133
      %v1135 = vlaneseq
      %v1136 = vshrl.u32 %v1135, 7
      %v1137 = vsub.s32 1, %v1136
      %v1138 = vrot.slane %v1130, %v1137
      %vm1139 = vcmp.eq.s32.totalorder %v1134, 1
      %vm1140 = vcmp.eq.s32.totalorder %v1138, 1
      %v1141 = vsel %vm1139, %v1128, 0.0
      %v1142 = vsel %vm1140, %v1129, 0.0
      %1143 = vset.pattern.permute.xlu0 21
      %1144 = vperm.xlu0 %1143, %v486
      %v1145 = vpop.permute.xlu0 %1144
      %v1147 = vmul.f32 %v1145, %v1141
      %v1148 = vmul.f32 %v1145, %v1142
      %v1149 = vadd.f32 %v1119, %v1147
      %v1150 = vadd.f32 %v1120, %v1148
      %vm1151 = vmand %vm1090, %vm541
      %vm1152 = vmand %vm1151, %vm543
      %1153 = vrot.lane.b32.xlu0 %v466, 96
      %v1154 = vpop.permute.xlu0 %1153
      %1155 = vrot.lane.b32.xlu0 %v467, 96
      %v1156 = vpop.permute.xlu0 %1155
      %vm1157 = vcmp.lt.s32.totalorder %v482, 96
      %v1158 = vsel %vm1157, %v1154, %v1156
      %v1159 = vsel %vm1157, %v1156, %v1154
      %v1160 = vsel %vm1152, 1, 0
      %v1161 = vlaneseq
      %v1162 = vshrl.u32 %v1161, 7
      %v1163 = vsub.s32 0, %v1162
      %v1164 = vrot.slane %v1160, %v1163
      %v1165 = vlaneseq
      %v1166 = vshrl.u32 %v1165, 7
      %v1167 = vsub.s32 1, %v1166
      %v1168 = vrot.slane %v1160, %v1167
      %vm1169 = vcmp.eq.s32.totalorder %v1164, 1
      %vm1170 = vcmp.eq.s32.totalorder %v1168, 1
      %v1171 = vsel %vm1169, %v1158, 0.0
      %v1172 = vsel %vm1170, %v1159, 0.0
      %1173 = vset.pattern.permute.xlu0 22
      %1174 = vperm.xlu0 %1173, %v486
      %v1175 = vpop.permute.xlu0 %1174
      %v1177 = vmul.f32 %v1175, %v1171
      %v1178 = vmul.f32 %v1175, %v1172
      %v1179 = vadd.f32 %v1149, %v1177
      %v1180 = vadd.f32 %v1150, %v1178
      %vm1181 = vmand %vm1090, %vm573
      %vm1182 = vmand %vm1181, %vm575
      %1183 = vrot.lane.b32.xlu0 %v466, 95
      %v1184 = vpop.permute.xlu0 %1183
      %1185 = vrot.lane.b32.xlu0 %v467, 95
      %v1186 = vpop.permute.xlu0 %1185
      %vm1187 = vcmp.lt.s32.totalorder %v482, 95
      %v1188 = vsel %vm1187, %v1184, %v1186
      %v1189 = vsel %vm1187, %v1186, %v1184
      %v1190 = vsel %vm1182, 1, 0
      %v1191 = vlaneseq
      %v1192 = vshrl.u32 %v1191, 7
      %v1193 = vsub.s32 0, %v1192
      %v1194 = vrot.slane %v1190, %v1193
      %v1195 = vlaneseq
      %v1196 = vshrl.u32 %v1195, 7
      %v1197 = vsub.s32 1, %v1196
      %v1198 = vrot.slane %v1190, %v1197
      %vm1199 = vcmp.eq.s32.totalorder %v1194, 1
      %vm1200 = vcmp.eq.s32.totalorder %v1198, 1
      %v1201 = vsel %vm1199, %v1188, 0.0
      %v1202 = vsel %vm1200, %v1189, 0.0
      %1203 = vset.pattern.permute.xlu0 23
      %1204 = vperm.xlu0 %1203, %v486
      %v1205 = vpop.permute.xlu0 %1204
      %v1207 = vmul.f32 %v1205, %v1201
      %v1208 = vmul.f32 %v1205, %v1202
      %v1209 = vadd.f32 %v1179, %v1207
      %v1210 = vadd.f32 %v1180, %v1208
      %vm1211 = vmand %vm1090, %vm605
      %vm1212 = vmand %vm1211, %vm607
      %1213 = vrot.lane.b32.xlu0 %v466, 94
      %v1214 = vpop.permute.xlu0 %1213
      %1215 = vrot.lane.b32.xlu0 %v467, 94
      %v1216 = vpop.permute.xlu0 %1215
      %vm1217 = vcmp.lt.s32.totalorder %v482, 94
      %v1218 = vsel %vm1217, %v1214, %v1216
      %v1219 = vsel %vm1217, %v1216, %v1214
      %v1220 = vsel %vm1212, 1, 0
      %v1221 = vlaneseq
      %v1222 = vshrl.u32 %v1221, 7
      %v1223 = vsub.s32 0, %v1222
      %v1224 = vrot.slane %v1220, %v1223
      %v1225 = vlaneseq
      %v1226 = vshrl.u32 %v1225, 7
      %v1227 = vsub.s32 1, %v1226
      %v1228 = vrot.slane %v1220, %v1227
      %vm1229 = vcmp.eq.s32.totalorder %v1224, 1
      %vm1230 = vcmp.eq.s32.totalorder %v1228, 1
      %v1231 = vsel %vm1229, %v1218, 0.0
      %v1232 = vsel %vm1230, %v1219, 0.0
      %1233 = vset.pattern.permute.xlu0 24
      %1234 = vperm.xlu0 %1233, %v486
      %v1235 = vpop.permute.xlu0 %1234
      %v1237 = vmul.f32 %v1235, %v1231
      %v1238 = vmul.f32 %v1235, %v1232
      %v1239 = vadd.f32 %v1209, %v1237
      %v1240 = vadd.f32 %v1210, %v1238
      %v1241 = vsel %vm464, %v1239, 0.0
      %v1242 = vsel %vm465, %v1240, 0.0
      %1243 = vst [vmem:[%s426] sm:$0xff] %v1241
      %1244 = vst [vmem:[%s426 + $0x8] sm:$0xff] %v1242
      %v1245 = vadd.f32 %v1241, %v1242
      %1246 = vadd.xlane.f32.xlu0 %v1245
      %v1247 = vpop.xlane.xlu0 %1246
      %v1248 = vmul.f32 %v1241, %v1241
      %v1249 = vmul.f32 %v1242, %v1242
      %v1250 = vadd.f32 %v1248, %v1249
      %1251 = vadd.xlane.f32.xlu0 %v1250
      %v1252 = vpop.xlane.xlu0 %1251
      %vm1253 = vcmask 7168
      %v1254 = vsel %vm1253, %v1247, %v1252
      %vm1255 = vcmask 15360
      %1256 = vst.msk [vmem:[%s433] sm:$0xff] %vm1255, %v1254
      %p1257 = scmp.lt.s32.totalorder %s24, 1
      %s1258 = scalar_select %p1257, %s24, 1
      %p1259 = scmp.lt.s32.totalorder %s25, 0
      %s1260 = scalar_select %p1259, %s25, 0
      %s1261 = smul.addr %s1260, 2
      %s1262 = smul.addr %s1258, 2
      %s1263 = sadd.s32 %s1261, %s1262
      %s1264 = smul.addr %s1263, 8
      %s1265 = scalar_lea.vmem %s6, %s1264
      %p1266 = scmp.lt.s32.totalorder %s24, 1
      %s1267 = scalar_select %p1266, %s24, 1
      %p1268 = scmp.lt.s32.totalorder %s25, 0
      %s1269 = scalar_select %p1268, %s25, 0
      %s1270 = smul.addr %s1269, 2
      %s1271 = smul.addr %s1267, 2
      %s1272 = sadd.s32 %s1270, %s1271
      %s1273 = smul.addr %s1272, 8
      %s1274 = scalar_lea.vmem %s7, %s1273
      %p1275 = scmp.lt.s32.totalorder %s24, 1
      %s1276 = scalar_select %p1275, %s24, 1
      %p1277 = scmp.lt.s32.totalorder %s25, 0
      %s1278 = scalar_select %p1277, %s25, 0
      %s1279 = sadd.s32 %s1278, %s1276
      %s1280 = smul.addr %s1279, 8
      %s1281 = scalar_lea.vmem %s8, %s1280
      // Predicated region
      $region45: #{ghost_bottleneck.8} parent=43 // pred_check
        %p1282 = pneg %p200
      $region46: #{ghost_bottleneck.8} parent=43 // pred_check_branch
        %1284 = sbr.rel (%p1282) target = $region48
      $region47: #{ghost_bottleneck.8} parent=43 // pred_region
        _
      $region48: #{ghost_bottleneck.8} parent=43 // pred_fallthru
        _
      // Predicated region
      $region49: #{ghost_bottleneck.8} parent=43 // pred_check
        %p1285 = pneg %p228
      $region50: #{ghost_bottleneck.8} parent=43 // pred_check_branch
        %1287 = sbr.rel (%p1285) target = $region52
      $region51: #{ghost_bottleneck.8} parent=43 // pred_region
        _
      $region52: #{ghost_bottleneck.8} parent=43 // pred_fallthru
        _
      // Predicated region
      $region53: #{ghost_bottleneck.8} parent=43 // pred_check
        %p1288 = pneg %p256
      $region54: #{ghost_bottleneck.8} parent=43 // pred_check_branch
        %1290 = sbr.rel (%p1288) target = $region56
      $region55: #{ghost_bottleneck.8} parent=43 // pred_region
        _
      $region56: #{ghost_bottleneck.8} parent=43 // pred_fallthru
        _
    $region44: #{ghost_bottleneck.8} parent=5 // pred_fallthru
      _
    %p1291 = scmp.le.s32.totalorder 2, %s15
    // Predicated region
    $region57: #{ghost_bottleneck.8} parent=5 // pred_check
      %p1292 = pneg %p1291
    $region58: #{ghost_bottleneck.8} parent=5 // pred_check_branch
      %1294 = sbr.rel (%p1292) target = $region60
    $region59: #{ghost_bottleneck.8} parent=5 // pred_region
      %s1295 = ssub.s32 %s15, 2
      // Predicated region
      $region61: #{ghost_bottleneck.8} parent=59 // pred_check
        %p1296 = pneg %p206
      $region62: #{ghost_bottleneck.8} parent=59 // pred_check_branch
        %1298 = sbr.rel (%p1296) target = $region64
      $region63: #{ghost_bottleneck.8} parent=59 // pred_region
        %p1299 = scmp.lt.s32.totalorder %s26, 1
        %s1300 = scalar_select %p1299, %s26, 1
        %p1301 = scmp.lt.s32.totalorder %s27, 0
        %s1302 = scalar_select %p1301, %s27, 0
        %s1303 = smul.addr %s1302, 2
        %s1304 = smul.addr %s1300, 2
        %s1305 = sadd.s32 %s1303, %s1304
        %s1306 = smul.addr %s1305, 8
        %s1307 = scalar_lea.vmem %s6, %s1306
      $region64: #{ghost_bottleneck.8} parent=59 // pred_fallthru
        _
      // Predicated region
      $region65: #{ghost_bottleneck.8} parent=59 // pred_check
        %p1308 = pneg %p234
      $region66: #{ghost_bottleneck.8} parent=59 // pred_check_branch
        %1310 = sbr.rel (%p1308) target = $region68
      $region67: #{ghost_bottleneck.8} parent=59 // pred_region
        %p1311 = scmp.lt.s32.totalorder %s26, 1
        %s1312 = scalar_select %p1311, %s26, 1
        %p1313 = scmp.lt.s32.totalorder %s27, 0
        %s1314 = scalar_select %p1313, %s27, 0
        %s1315 = smul.addr %s1314, 2
        %s1316 = smul.addr %s1312, 2
        %s1317 = sadd.s32 %s1315, %s1316
        %s1318 = smul.addr %s1317, 8
        %s1319 = scalar_lea.vmem %s7, %s1318
      $region68: #{ghost_bottleneck.8} parent=59 // pred_fallthru
        _
      // Predicated region
      $region69: #{ghost_bottleneck.8} parent=59 // pred_check
        %p1320 = pneg %p262
      $region70: #{ghost_bottleneck.8} parent=59 // pred_check_branch
        %1322 = sbr.rel (%p1320) target = $region72
      $region71: #{ghost_bottleneck.8} parent=59 // pred_region
        %p1323 = scmp.lt.s32.totalorder %s26, 1
        %s1324 = scalar_select %p1323, %s26, 1
        %p1325 = scmp.lt.s32.totalorder %s27, 0
        %s1326 = scalar_select %p1325, %s27, 0
        %s1327 = sadd.s32 %s1326, %s1324
        %s1328 = smul.addr %s1327, 8
        %s1329 = scalar_lea.vmem %s8, %s1328
      $region72: #{ghost_bottleneck.8} parent=59 // pred_fallthru
        _
    $region60: #{ghost_bottleneck.8} parent=5 // pred_fallthru
      _
  $region6: #{ghost_bottleneck.8} parent=0 // loop_footer
    %s19 = sadd.s32 1, %s15
  $region7: #{ghost_bottleneck.8} parent=0 // loop_footer_branch
    %14 = sbr.rel target = $region3
  $region8: #{ghost_bottleneck.8} parent=0 // loop_exit
    _

</llo_original>
